<compile_context>
chip_gen: v7x
topology: tpu7x:2x2x1
jax: 0.10.0
libtpu: 0.0.40
codegen_flags: <defaults>
</compile_context>

<pallas_src>
import math

import jax
import jax.numpy as jnp
from jax.experimental import pallas as pl
from jax.experimental.pallas import tpu as pltpu

# ----------------------------- model config --------------------------------
VOCAB = 128
HIDDEN = 32
HEADS = 4
HEAD_DIM = HIDDEN // HEADS
INTER = 64
LAYERS = 2
MAX_POS = 16
LN_EPS = 1e-12

BATCH = 2
SEQ = 8
BS = BATCH * SEQ  # batch folded into rows

# dot_general dimension numbers for A @ B^T (no explicit transpose op).
_TRANS_B = (((1,), (1,)), ((), ()))

# --------- packed-slab row offsets (shared by kernel and packer) ------------
# w_layers: (LAYERS, WL_ROWS, 128) bf16 — per-layer matmul weights, row-packed
WL_QKV = 0                       # (HIDDEN, 3*HIDDEN)
WL_O = HIDDEN                    # (HIDDEN, HIDDEN)
WL_FI = 2 * HIDDEN               # (HIDDEN, INTER)
WL_FO = 3 * HIDDEN               # (INTER, HIDDEN)
WL_ROWS = 3 * HIDDEN + INTER     # 160

# v_layers: (LAYERS, 8, 128) f32 — per-layer bias / LayerNorm vectors (one row each)
VL_QKV_B, VL_O_B, VL_ALN_G, VL_ALN_B, VL_FI_B, VL_FO_B, VL_FLN_G, VL_FLN_B = range(8)

# w_misc: (WM_ROWS, 128) bf16 — embedding + MLM-head matmul weights, row-packed
WM_WEMB = 0                      # (VOCAB, HIDDEN)
WM_MLM = VOCAB                   # (HIDDEN, HIDDEN)
WM_DEC = VOCAB + HIDDEN          # (HIDDEN, VOCAB)
WM_ROWS = VOCAB + 2 * HIDDEN     # 192

# v_misc: (VM_ROWS, 128) f32 — embedding table add + head vectors
VM_POSTYPE = 0                   # rows 0:BS  (pos_emb + type_emb[0], batch-tiled)
VM_EMB_G = BS
VM_EMB_B = BS + 1
VM_MLM_B = BS + 2
VM_MLN_G = BS + 3
VM_MLN_B = BS + 4
VM_DEC_B = BS + 5                # lanes 0:VOCAB
VM_ROWS = 24


# ----------------------------- fused Pallas kernel --------------------------
def fused_masked_lm_kernel(ids_ref, bias_ref, wl_ref, vl_ref, wm_ref, vm_ref,
                           out_ref):
    """Whole forward (all batch rows) in one grid step; VMEM/register resident."""

    def layernorm(x, g, b):
        mu = jnp.mean(x, axis=-1, keepdims=True)
        var = jnp.mean((x - mu) * (x - mu), axis=-1, keepdims=True)
        return (x - mu) * jax.lax.rsqrt(var + LN_EPS) * g + b

    def matmul(x, w_bf16):
        # bf16 MXU operands, f32 accumulation.
        return jnp.dot(x.astype(jnp.bfloat16), w_bf16,
                       preferred_element_type=jnp.float32)

    # --- embeddings: one-hot(ids) @ word_emb on the MXU (no gather) ---
    ids = ids_ref[...]                                         # (BS, 1) int32
    vocab_iota = jax.lax.broadcasted_iota(jnp.int32, (BS, VOCAB), 1)
    onehot = (ids == vocab_iota).astype(jnp.bfloat16)          # (BS, VOCAB)
    h = jnp.dot(onehot, wm_ref[WM_WEMB:WM_WEMB + VOCAB, 0:HIDDEN],
                preferred_element_type=jnp.float32)            # (BS, H)
    h = h + vm_ref[VM_POSTYPE:VM_POSTYPE + BS, 0:HIDDEN]       # pos + type(0)
    h = layernorm(h,
                  vm_ref[VM_EMB_G:VM_EMB_G + 1, 0:HIDDEN],
                  vm_ref[VM_EMB_B:VM_EMB_B + 1, 0:HIDDEN])

    # Additive attention bias (batch block-diagonal + padding), reused per layer.
    bias = bias_ref[...]                                       # (BS, BS) f32
    scale = 1.0 / math.sqrt(HEAD_DIM)

    for l in range(LAYERS):                                    # unrolled
        qkv_w = wl_ref[l, WL_QKV:WL_QKV + HIDDEN, 0:3 * HIDDEN]
        o_w = wl_ref[l, WL_O:WL_O + HIDDEN, 0:HIDDEN]
        fi_w = wl_ref[l, WL_FI:WL_FI + HIDDEN, 0:INTER]
        fo_w = wl_ref[l, WL_FO:WL_FO + INTER, 0:HIDDEN]

        # Fused QKV projection: (BS,H) @ (H,3H) -> (BS,3H), register value.
        qkv = matmul(h, qkv_w) + vl_ref[l, VL_QKV_B:VL_QKV_B + 1, 0:3 * HIDDEN]

        # Per-head attention on register values; no VMEM scratch stores.
        ctx_heads = []
        for hd in range(HEADS):                                # unrolled
            lo = hd * HEAD_DIM
            q_h = qkv[:, lo:lo + HEAD_DIM]                             # (BS, D)
            k_h = qkv[:, HIDDEN + lo:HIDDEN + lo + HEAD_DIM]           # (BS, D)
            v_h = qkv[:, 2 * HIDDEN + lo:2 * HIDDEN + lo + HEAD_DIM]   # (BS, D)

            s = jax.lax.dot_general(q_h, k_h, _TRANS_B,
                                    preferred_element_type=jnp.float32)
            s = s * scale + bias                                       # (BS, BS)
            s = s - jnp.max(s, axis=-1, keepdims=True)
            p = jnp.exp(s)
            p = p * pl.reciprocal(jnp.sum(p, axis=-1, keepdims=True),
                                  approx=True)
            ctx_heads.append(jnp.dot(p, v_h,
                                     preferred_element_type=jnp.float32))
        ctx = jnp.concatenate(ctx_heads, axis=-1)                      # (BS, H)

        attn_out = matmul(ctx, o_w) + vl_ref[l, VL_O_B:VL_O_B + 1, 0:HIDDEN]
        h = layernorm(h + attn_out,
                      vl_ref[l, VL_ALN_G:VL_ALN_G + 1, 0:HIDDEN],
                      vl_ref[l, VL_ALN_B:VL_ALN_B + 1, 0:HIDDEN])

        ffn = matmul(h, fi_w) + vl_ref[l, VL_FI_B:VL_FI_B + 1, 0:INTER]
        ffn = jax.nn.gelu(ffn, approximate=True)                       # f32 EUP
        ffn = matmul(ffn, fo_w) + vl_ref[l, VL_FO_B:VL_FO_B + 1, 0:HIDDEN]
        h = layernorm(h + ffn,
                      vl_ref[l, VL_FLN_G:VL_FLN_G + 1, 0:HIDDEN],
                      vl_ref[l, VL_FLN_B:VL_FLN_B + 1, 0:HIDDEN])

    # --- MLM head: dense + gelu + layernorm + decoder-to-vocab ---
    t = matmul(h, wm_ref[WM_MLM:WM_MLM + HIDDEN, 0:HIDDEN]) \
        + vm_ref[VM_MLM_B:VM_MLM_B + 1, 0:HIDDEN]
    t = jax.nn.gelu(t, approximate=True)
    t = layernorm(t,
                  vm_ref[VM_MLN_G:VM_MLN_G + 1, 0:HIDDEN],
                  vm_ref[VM_MLN_B:VM_MLN_B + 1, 0:HIDDEN])
    logits = matmul(t, wm_ref[WM_DEC:WM_DEC + HIDDEN, 0:VOCAB]) \
        + vm_ref[VM_DEC_B:VM_DEC_B + 1, 0:VOCAB]
    out_ref[...] = logits                      # (BS, 128): one unmasked store


# --------------------------- parameter init ---------------------------------
def init_params(key):
    keys = iter(jax.random.split(key, 9))

    def w(k, shape):
        return 0.02 * jax.random.normal(k, shape, jnp.float32)

    return {
        "word_emb": w(next(keys), (VOCAB, HIDDEN)),
        "pos_emb": w(next(keys), (MAX_POS, HIDDEN)),
        "type_emb": w(next(keys), (2, HIDDEN)),
        "emb_ln_g": jnp.ones((HIDDEN,), jnp.float32),
        "emb_ln_b": jnp.zeros((HIDDEN,), jnp.float32),
        "qkv_w": w(next(keys), (LAYERS, HIDDEN, 3 * HIDDEN)),   # [Q|K|V] packing
        "qkv_b": jnp.zeros((LAYERS, 3 * HIDDEN), jnp.float32),
        "o_w": w(next(keys), (LAYERS, HIDDEN, HIDDEN)),
        "o_b": jnp.zeros((LAYERS, HIDDEN), jnp.float32),
        "attn_ln_g": jnp.ones((LAYERS, HIDDEN), jnp.float32),
        "attn_ln_b": jnp.zeros((LAYERS, HIDDEN), jnp.float32),
        "ffn_in_w": w(next(keys), (LAYERS, HIDDEN, INTER)),
        "ffn_in_b": jnp.zeros((LAYERS, INTER), jnp.float32),
        "ffn_out_w": w(next(keys), (LAYERS, INTER, HIDDEN)),
        "ffn_out_b": jnp.zeros((LAYERS, HIDDEN), jnp.float32),
        "ffn_ln_g": jnp.ones((LAYERS, HIDDEN), jnp.float32),
        "ffn_ln_b": jnp.zeros((LAYERS, HIDDEN), jnp.float32),
        "mlm_w": w(next(keys), (HIDDEN, HIDDEN)),
        "mlm_b": jnp.zeros((HIDDEN,), jnp.float32),
        "mlm_ln_g": jnp.ones((HIDDEN,), jnp.float32),
        "mlm_ln_b": jnp.zeros((HIDDEN,), jnp.float32),
        "dec_w": w(next(keys), (HIDDEN, VOCAB)),
        "dec_b": jnp.zeros((VOCAB,), jnp.float32),
    }


def pack_params(p):
    """Pack the natural parameter dict into 4 DMA-friendly slabs (done once)."""
    def pad2(x, rows, cols):
        return jnp.pad(x, ((0, rows - x.shape[0]), (0, cols - x.shape[1])))

    def row(v):
        return pad2(v.reshape(1, -1).astype(jnp.float32), 1, 128)

    # Per-layer matmul weights, row-packed: (LAYERS, WL_ROWS, 128) bf16.
    wl = []
    for l in range(LAYERS):
        wl.append(jnp.concatenate([
            pad2(p["qkv_w"][l], HIDDEN, 128),
            pad2(p["o_w"][l], HIDDEN, 128),
            pad2(p["ffn_in_w"][l], HIDDEN, 128),
            pad2(p["ffn_out_w"][l], INTER, 128),
        ], axis=0))
    w_layers = jnp.stack(wl).astype(jnp.bfloat16)

    # Per-layer bias / LN vectors, one row each: (LAYERS, 8, 128) f32.
    vl = []
    for l in range(LAYERS):
        vl.append(jnp.concatenate([
            row(p["qkv_b"][l]), row(p["o_b"][l]),
            row(p["attn_ln_g"][l]), row(p["attn_ln_b"][l]),
            row(p["ffn_in_b"][l]), row(p["ffn_out_b"][l]),
            row(p["ffn_ln_g"][l]), row(p["ffn_ln_b"][l]),
        ], axis=0))
    v_layers = jnp.stack(vl)

    # Misc matmul weights: (WM_ROWS, 128) bf16.
    w_misc = jnp.concatenate([
        pad2(p["word_emb"], VOCAB, 128),
        pad2(p["mlm_w"], HIDDEN, 128),
        pad2(p["dec_w"], HIDDEN, 128),
    ], axis=0).astype(jnp.bfloat16)

    # Misc vectors: pos+type table (token_type_id = 0) tiled over batch + head vectors.
    pos_type = p["pos_emb"][:SEQ] + p["type_emb"][0]           # (S, H)
    pos_type = jnp.tile(pos_type, (BATCH, 1))                  # (BS, H)
    v_misc = jnp.concatenate([
        pad2(pos_type.astype(jnp.float32), BS, 128),
        row(p["emb_ln_g"]), row(p["emb_ln_b"]),
        row(p["mlm_b"]), row(p["mlm_ln_g"]), row(p["mlm_ln_b"]),
        row(p["dec_b"]),
    ], axis=0)
    v_misc = jnp.pad(v_misc, ((0, VM_ROWS - v_misc.shape[0]), (0, 0)))

    return {"w_layers": w_layers, "v_layers": v_layers,
            "w_misc": w_misc, "v_misc": v_misc}


# ------------------------------ forward -------------------------------------
def _build_attn_bias(attention_mask):
    """(BS, BS) additive bias: 0 within-batch & valid key, -1e9 otherwise."""
    B, S = attention_mask.shape
    batch_ids = jnp.repeat(jnp.arange(B, dtype=jnp.int32), S)           # (BS,)
    same_batch = batch_ids[:, None] == batch_ids[None, :]
    key_ok = attention_mask.reshape(B * S).astype(jnp.int32) > 0
    allowed = jnp.logical_and(same_batch, key_ok[None, :])
    return jnp.where(allowed, 0.0, -1e9).astype(jnp.float32)


def masked_lm_forward(packed, input_ids, attention_mask):
    B, S = input_ids.shape
    assert B == BATCH and S == SEQ and S <= MAX_POS

    ids_col = input_ids.astype(jnp.int32).reshape(BS, 1)
    attn_bias = _build_attn_bias(attention_mask)

    in_specs = [
        pl.BlockSpec((BS, 1), lambda i: (0, 0)),                    # ids
        pl.BlockSpec((BS, BS), lambda i: (0, 0)),                   # attn bias
        pl.BlockSpec((LAYERS, WL_ROWS, 128), lambda i: (0, 0, 0)),  # w_layers
        pl.BlockSpec((LAYERS, 8, 128), lambda i: (0, 0, 0)),        # v_layers
        pl.BlockSpec((WM_ROWS, 128), lambda i: (0, 0)),             # w_misc
        pl.BlockSpec((VM_ROWS, 128), lambda i: (0, 0)),             # v_misc
    ]

    logits = pl.pallas_call(
        fused_masked_lm_kernel,
        out_shape=jax.ShapeDtypeStruct((BS, VOCAB), jnp.float32),
        grid=(1,),                                  # single step: batch folded into rows
        in_specs=in_specs,
        out_specs=pl.BlockSpec((BS, VOCAB), lambda i: (0, 0)),
        compiler_params=pltpu.CompilerParams(
            dimension_semantics=("arbitrary",)),
    )(ids_col, attn_bias,
      packed["w_layers"], packed["v_layers"], packed["w_misc"], packed["v_misc"])

    return logits.reshape(B, S, VOCAB)


# ------------------------------- main ----------------------------------------
if __name__ == "__main__":
    key = jax.random.PRNGKey(0)
    k_params, k_ids = jax.random.split(key)
    params = init_params(k_params)
    packed = pack_params(params)   # one-time slab packing outside the jitted forward

    input_ids = jax.random.randint(k_ids, (BATCH, SEQ), 0, VOCAB, dtype=jnp.int32)
    attention_mask = jnp.ones((BATCH, SEQ), dtype=jnp.int32)

    logits = jax.jit(masked_lm_forward)(packed, input_ids, attention_mask)
    jax.block_until_ready(logits)
    assert logits.shape == (BATCH, SEQ, VOCAB)
    assert bool(jnp.all(jnp.isfinite(logits)))
    print("KERNEL_OK")
</pallas_src>

<mosaic_0001>
module attributes {stable_mosaic.version = 11 : i64} {
  func.func @fused_masked_lm_kernel(%arg0: i32, %arg1: memref<16x1xi32, #tpu.memory_space<vmem>>, %arg2: memref<16x16xf32, #tpu.memory_space<vmem>>, %arg3: memref<2x160x128xbf16, #tpu.memory_space<vmem>>, %arg4: memref<2x8x128xf32, #tpu.memory_space<vmem>>, %arg5: memref<192x128xbf16, #tpu.memory_space<vmem>>, %arg6: memref<24x128xf32, #tpu.memory_space<vmem>>, %arg7: memref<16x128xf32, #tpu.memory_space<vmem>>) attributes {dimension_semantics = [#tpu.dimension_semantics<arbitrary>], iteration_bounds = array<i64: 1>, scalar_prefetch = 0 : i64, scratch_operands = 0 : i64, tpu.core_type = #tpu.core_type<tc>, window_params = [{pipeline_mode = #tpu.pipeline_mode<synchronous>, transform_indices = @transform_0, window_bounds = array<i64: 16, 1>}, {pipeline_mode = #tpu.pipeline_mode<synchronous>, transform_indices = @transform_1, window_bounds = array<i64: 16, 16>}, {pipeline_mode = #tpu.pipeline_mode<synchronous>, transform_indices = @transform_2, window_bounds = array<i64: 2, 160, 128>}, {pipeline_mode = #tpu.pipeline_mode<synchronous>, transform_indices = @transform_3, window_bounds = array<i64: 2, 8, 128>}, {pipeline_mode = #tpu.pipeline_mode<synchronous>, transform_indices = @transform_4, window_bounds = array<i64: 192, 128>}, {pipeline_mode = #tpu.pipeline_mode<synchronous>, transform_indices = @transform_5, window_bounds = array<i64: 24, 128>}, {pipeline_mode = #tpu.pipeline_mode<synchronous>, transform_indices = @transform_6, window_bounds = array<i64: 16, 128>}]} {
    %c0 = arith.constant 0 : index
    %c0_0 = arith.constant 0 : index
    %0 = vector.load %arg1[%c0, %c0_0] : memref<16x1xi32, #tpu.memory_space<vmem>>, vector<16x1xi32>
    %1 = tpu.iota {dimensions = array<i32: 1>} : vector<16x128xi32>
    %2 = vector.broadcast %0 : vector<16x1xi32> to vector<16x128xi32>
    %3 = arith.cmpi eq, %2, %1 : vector<16x128xi32>
    %4 = arith.extui %3 : vector<16x128xi1> to vector<16x128xi32>
    %5 = arith.sitofp %4 : vector<16x128xi32> to vector<16x128xf32>
    %6 = arith.truncf %5 : vector<16x128xf32> to vector<16x128xbf16>
    %c0_1 = arith.constant 0 : index
    %c0_2 = arith.constant 0 : index
    %7 = vector.load %arg5[%c0_1, %c0_2] : memref<192x128xbf16, #tpu.memory_space<vmem>>, vector<128x32xbf16>
    %cst = arith.constant dense<0.000000e+00> : vector<16x32xf32>
    %8 = tpu.matmul %6, %7, %cst {dimension_numbers = #tpu.dot_dimension_numbers<[1], [0], [0], [1], [0, 0, 1, 1], [], []>} : vector<16x128xbf16>, vector<128x32xbf16>, vector<16x32xf32> -> vector<16x32xf32>
    %c0_3 = arith.constant 0 : index
    %c0_4 = arith.constant 0 : index
    %9 = vector.load %arg6[%c0_3, %c0_4] : memref<24x128xf32, #tpu.memory_space<vmem>>, vector<16x32xf32>
    %10 = arith.addf %8, %9 : vector<16x32xf32>
    %c16 = arith.constant 16 : index
    %c0_5 = arith.constant 0 : index
    %11 = vector.load %arg6[%c16, %c0_5] : memref<24x128xf32, #tpu.memory_space<vmem>>, vector<1x32xf32>
    %c17 = arith.constant 17 : index
    %c0_6 = arith.constant 0 : index
    %12 = vector.load %arg6[%c17, %c0_6] : memref<24x128xf32, #tpu.memory_space<vmem>>, vector<1x32xf32>
    %cst_7 = arith.constant dense<0.000000e+00> : vector<16xf32>
    %13 = vector.multi_reduction <add>, %10, %cst_7 [1] : vector<16x32xf32> to vector<16xf32>
    %14 = vector.shape_cast %13 : vector<16xf32> to vector<16x1xf32>
    %cst_8 = arith.constant 3.200000e+01 : f32
    %15 = vector.broadcast %cst_8 : f32 to vector<16x1xf32>
    %16 = arith.divf %14, %15 : vector<16x1xf32>
    %17 = vector.broadcast %16 : vector<16x1xf32> to vector<16x32xf32>
    %18 = arith.subf %10, %17 : vector<16x32xf32>
    %19 = vector.broadcast %16 : vector<16x1xf32> to vector<16x32xf32>
    %20 = arith.subf %10, %19 : vector<16x32xf32>
    %21 = arith.mulf %18, %20 : vector<16x32xf32>
    %cst_9 = arith.constant dense<0.000000e+00> : vector<16xf32>
    %22 = vector.multi_reduction <add>, %21, %cst_9 [1] : vector<16x32xf32> to vector<16xf32>
    %23 = vector.shape_cast %22 : vector<16xf32> to vector<16x1xf32>
    %cst_10 = arith.constant 3.200000e+01 : f32
    %24 = vector.broadcast %cst_10 : f32 to vector<16x1xf32>
    %25 = arith.divf %23, %24 : vector<16x1xf32>
    %26 = vector.broadcast %16 : vector<16x1xf32> to vector<16x32xf32>
    %27 = arith.subf %10, %26 : vector<16x32xf32>
    %cst_11 = arith.constant 9.99999996E-13 : f32
    %28 = vector.broadcast %cst_11 : f32 to vector<16x1xf32>
    %29 = arith.addf %25, %28 : vector<16x1xf32>
    %30 = math.rsqrt %29 : vector<16x1xf32>
    %31 = vector.broadcast %30 : vector<16x1xf32> to vector<16x32xf32>
    %32 = arith.mulf %27, %31 : vector<16x32xf32>
    %33 = vector.broadcast %11 : vector<1x32xf32> to vector<16x32xf32>
    %34 = arith.mulf %32, %33 : vector<16x32xf32>
    %35 = vector.broadcast %12 : vector<1x32xf32> to vector<16x32xf32>
    %36 = arith.addf %34, %35 : vector<16x32xf32>
    %c0_12 = arith.constant 0 : index
    %c0_13 = arith.constant 0 : index
    %37 = vector.load %arg2[%c0_12, %c0_13] : memref<16x16xf32, #tpu.memory_space<vmem>>, vector<16x16xf32>
    %c0_14 = arith.constant 0 : index
    %c0_15 = arith.constant 0 : index
    %c0_16 = arith.constant 0 : index
    %38 = vector.load %arg3[%c0_14, %c0_15, %c0_16] : memref<2x160x128xbf16, #tpu.memory_space<vmem>>, vector<1x32x96xbf16>
    %39 = vector.shape_cast %38 : vector<1x32x96xbf16> to vector<32x96xbf16>
    %c0_17 = arith.constant 0 : index
    %c32 = arith.constant 32 : index
    %c0_18 = arith.constant 0 : index
    %40 = vector.load %arg3[%c0_17, %c32, %c0_18] : memref<2x160x128xbf16, #tpu.memory_space<vmem>>, vector<1x32x32xbf16>
    %41 = vector.shape_cast %40 : vector<1x32x32xbf16> to vector<32x32xbf16>
    %c0_19 = arith.constant 0 : index
    %c64 = arith.constant 64 : index
    %c0_20 = arith.constant 0 : index
    %42 = vector.load %arg3[%c0_19, %c64, %c0_20] : memref<2x160x128xbf16, #tpu.memory_space<vmem>>, vector<1x32x64xbf16>
    %43 = vector.shape_cast %42 : vector<1x32x64xbf16> to vector<32x64xbf16>
    %c0_21 = arith.constant 0 : index
    %c96 = arith.constant 96 : index
    %c0_22 = arith.constant 0 : index
    %44 = vector.load %arg3[%c0_21, %c96, %c0_22] : memref<2x160x128xbf16, #tpu.memory_space<vmem>>, vector<1x64x32xbf16>
    %45 = vector.shape_cast %44 : vector<1x64x32xbf16> to vector<64x32xbf16>
    %46 = arith.truncf %36 : vector<16x32xf32> to vector<16x32xbf16>
    %cst_23 = arith.constant dense<0.000000e+00> : vector<16x96xf32>
    %47 = tpu.matmul %46, %39, %cst_23 {dimension_numbers = #tpu.dot_dimension_numbers<[1], [0], [0], [1], [0, 0, 1, 1], [], []>} : vector<16x32xbf16>, vector<32x96xbf16>, vector<16x96xf32> -> vector<16x96xf32>
    %c0_24 = arith.constant 0 : index
    %c0_25 = arith.constant 0 : index
    %c0_26 = arith.constant 0 : index
    %48 = vector.load %arg4[%c0_24, %c0_25, %c0_26] : memref<2x8x128xf32, #tpu.memory_space<vmem>>, vector<1x1x96xf32>
    %49 = vector.shape_cast %48 : vector<1x1x96xf32> to vector<1x96xf32>
    %50 = vector.broadcast %49 : vector<1x96xf32> to vector<16x96xf32>
    %51 = arith.addf %47, %50 : vector<16x96xf32>
    %52 = vector.extract_strided_slice %51 {offsets = [0, 0], sizes = [16, 8], strides = [1, 1]} : vector<16x96xf32> to vector<16x8xf32>
    %53 = vector.extract_strided_slice %51 {offsets = [0, 32], sizes = [16, 8], strides = [1, 1]} : vector<16x96xf32> to vector<16x8xf32>
    %54 = vector.extract_strided_slice %51 {offsets = [0, 64], sizes = [16, 8], strides = [1, 1]} : vector<16x96xf32> to vector<16x8xf32>
    %cst_27 = arith.constant dense<0.000000e+00> : vector<16x16xf32>
    %55 = tpu.matmul %52, %53, %cst_27 {dimension_numbers = #tpu.dot_dimension_numbers<[1], [1], [0], [0], [0, 0, 1, 0], [], []>} : vector<16x8xf32>, vector<16x8xf32>, vector<16x16xf32> -> vector<16x16xf32>
    %cst_28 = arith.constant 0.353553385 : f32
    %56 = vector.broadcast %cst_28 : f32 to vector<16x16xf32>
    %57 = arith.mulf %55, %56 : vector<16x16xf32>
    %58 = arith.addf %57, %37 : vector<16x16xf32>
    %cst_29 = arith.constant dense<0xFF800000> : vector<16xf32>
    %59 = vector.multi_reduction <maximumf>, %58, %cst_29 [1] : vector<16x16xf32> to vector<16xf32>
    %60 = vector.shape_cast %59 : vector<16xf32> to vector<16x1xf32>
    %61 = vector.broadcast %60 : vector<16x1xf32> to vector<16x16xf32>
    %62 = arith.subf %58, %61 : vector<16x16xf32>
    %63 = math.exp %62 : vector<16x16xf32>
    %cst_30 = arith.constant dense<0.000000e+00> : vector<16xf32>
    %64 = vector.multi_reduction <add>, %63, %cst_30 [1] : vector<16x16xf32> to vector<16xf32>
    %65 = vector.shape_cast %64 : vector<16xf32> to vector<16x1xf32>
    %66 = tpu.reciprocal %65 {approx = true} : vector<16x1xf32> -> vector<16x1xf32>
    %67 = vector.broadcast %66 : vector<16x1xf32> to vector<16x16xf32>
    %68 = arith.mulf %63, %67 : vector<16x16xf32>
    %cst_31 = arith.constant dense<0.000000e+00> : vector<16x8xf32>
    %69 = tpu.matmul %68, %54, %cst_31 {dimension_numbers = #tpu.dot_dimension_numbers<[1], [0], [0], [1], [0, 0, 1, 1], [], []>} : vector<16x16xf32>, vector<16x8xf32>, vector<16x8xf32> -> vector<16x8xf32>
    %70 = vector.extract_strided_slice %51 {offsets = [0, 8], sizes = [16, 8], strides = [1, 1]} : vector<16x96xf32> to vector<16x8xf32>
    %71 = vector.extract_strided_slice %51 {offsets = [0, 40], sizes = [16, 8], strides = [1, 1]} : vector<16x96xf32> to vector<16x8xf32>
    %72 = vector.extract_strided_slice %51 {offsets = [0, 72], sizes = [16, 8], strides = [1, 1]} : vector<16x96xf32> to vector<16x8xf32>
    %cst_32 = arith.constant dense<0.000000e+00> : vector<16x16xf32>
    %73 = tpu.matmul %70, %71, %cst_32 {dimension_numbers = #tpu.dot_dimension_numbers<[1], [1], [0], [0], [0, 0, 1, 0], [], []>} : vector<16x8xf32>, vector<16x8xf32>, vector<16x16xf32> -> vector<16x16xf32>
    %cst_33 = arith.constant 0.353553385 : f32
    %74 = vector.broadcast %cst_33 : f32 to vector<16x16xf32>
    %75 = arith.mulf %73, %74 : vector<16x16xf32>
    %76 = arith.addf %75, %37 : vector<16x16xf32>
    %cst_34 = arith.constant dense<0xFF800000> : vector<16xf32>
    %77 = vector.multi_reduction <maximumf>, %76, %cst_34 [1] : vector<16x16xf32> to vector<16xf32>
    %78 = vector.shape_cast %77 : vector<16xf32> to vector<16x1xf32>
    %79 = vector.broadcast %78 : vector<16x1xf32> to vector<16x16xf32>
    %80 = arith.subf %76, %79 : vector<16x16xf32>
    %81 = math.exp %80 : vector<16x16xf32>
    %cst_35 = arith.constant dense<0.000000e+00> : vector<16xf32>
    %82 = vector.multi_reduction <add>, %81, %cst_35 [1] : vector<16x16xf32> to vector<16xf32>
    %83 = vector.shape_cast %82 : vector<16xf32> to vector<16x1xf32>
    %84 = tpu.reciprocal %83 {approx = true} : vector<16x1xf32> -> vector<16x1xf32>
    %85 = vector.broadcast %84 : vector<16x1xf32> to vector<16x16xf32>
    %86 = arith.mulf %81, %85 : vector<16x16xf32>
    %cst_36 = arith.constant dense<0.000000e+00> : vector<16x8xf32>
    %87 = tpu.matmul %86, %72, %cst_36 {dimension_numbers = #tpu.dot_dimension_numbers<[1], [0], [0], [1], [0, 0, 1, 1], [], []>} : vector<16x16xf32>, vector<16x8xf32>, vector<16x8xf32> -> vector<16x8xf32>
    %88 = vector.extract_strided_slice %51 {offsets = [0, 16], sizes = [16, 8], strides = [1, 1]} : vector<16x96xf32> to vector<16x8xf32>
    %89 = vector.extract_strided_slice %51 {offsets = [0, 48], sizes = [16, 8], strides = [1, 1]} : vector<16x96xf32> to vector<16x8xf32>
    %90 = vector.extract_strided_slice %51 {offsets = [0, 80], sizes = [16, 8], strides = [1, 1]} : vector<16x96xf32> to vector<16x8xf32>
    %cst_37 = arith.constant dense<0.000000e+00> : vector<16x16xf32>
    %91 = tpu.matmul %88, %89, %cst_37 {dimension_numbers = #tpu.dot_dimension_numbers<[1], [1], [0], [0], [0, 0, 1, 0], [], []>} : vector<16x8xf32>, vector<16x8xf32>, vector<16x16xf32> -> vector<16x16xf32>
    %cst_38 = arith.constant 0.353553385 : f32
    %92 = vector.broadcast %cst_38 : f32 to vector<16x16xf32>
    %93 = arith.mulf %91, %92 : vector<16x16xf32>
    %94 = arith.addf %93, %37 : vector<16x16xf32>
    %cst_39 = arith.constant dense<0xFF800000> : vector<16xf32>
    %95 = vector.multi_reduction <maximumf>, %94, %cst_39 [1] : vector<16x16xf32> to vector<16xf32>
    %96 = vector.shape_cast %95 : vector<16xf32> to vector<16x1xf32>
    %97 = vector.broadcast %96 : vector<16x1xf32> to vector<16x16xf32>
    %98 = arith.subf %94, %97 : vector<16x16xf32>
    %99 = math.exp %98 : vector<16x16xf32>
    %cst_40 = arith.constant dense<0.000000e+00> : vector<16xf32>
    %100 = vector.multi_reduction <add>, %99, %cst_40 [1] : vector<16x16xf32> to vector<16xf32>
    %101 = vector.shape_cast %100 : vector<16xf32> to vector<16x1xf32>
    %102 = tpu.reciprocal %101 {approx = true} : vector<16x1xf32> -> vector<16x1xf32>
    %103 = vector.broadcast %102 : vector<16x1xf32> to vector<16x16xf32>
    %104 = arith.mulf %99, %103 : vector<16x16xf32>
    %cst_41 = arith.constant dense<0.000000e+00> : vector<16x8xf32>
    %105 = tpu.matmul %104, %90, %cst_41 {dimension_numbers = #tpu.dot_dimension_numbers<[1], [0], [0], [1], [0, 0, 1, 1], [], []>} : vector<16x16xf32>, vector<16x8xf32>, vector<16x8xf32> -> vector<16x8xf32>
    %106 = vector.extract_strided_slice %51 {offsets = [0, 24], sizes = [16, 8], strides = [1, 1]} : vector<16x96xf32> to vector<16x8xf32>
    %107 = vector.extract_strided_slice %51 {offsets = [0, 56], sizes = [16, 8], strides = [1, 1]} : vector<16x96xf32> to vector<16x8xf32>
    %108 = vector.extract_strided_slice %51 {offsets = [0, 88], sizes = [16, 8], strides = [1, 1]} : vector<16x96xf32> to vector<16x8xf32>
    %cst_42 = arith.constant dense<0.000000e+00> : vector<16x16xf32>
    %109 = tpu.matmul %106, %107, %cst_42 {dimension_numbers = #tpu.dot_dimension_numbers<[1], [1], [0], [0], [0, 0, 1, 0], [], []>} : vector<16x8xf32>, vector<16x8xf32>, vector<16x16xf32> -> vector<16x16xf32>
    %cst_43 = arith.constant 0.353553385 : f32
    %110 = vector.broadcast %cst_43 : f32 to vector<16x16xf32>
    %111 = arith.mulf %109, %110 : vector<16x16xf32>
    %112 = arith.addf %111, %37 : vector<16x16xf32>
    %cst_44 = arith.constant dense<0xFF800000> : vector<16xf32>
    %113 = vector.multi_reduction <maximumf>, %112, %cst_44 [1] : vector<16x16xf32> to vector<16xf32>
    %114 = vector.shape_cast %113 : vector<16xf32> to vector<16x1xf32>
    %115 = vector.broadcast %114 : vector<16x1xf32> to vector<16x16xf32>
    %116 = arith.subf %112, %115 : vector<16x16xf32>
    %117 = math.exp %116 : vector<16x16xf32>
    %cst_45 = arith.constant dense<0.000000e+00> : vector<16xf32>
    %118 = vector.multi_reduction <add>, %117, %cst_45 [1] : vector<16x16xf32> to vector<16xf32>
    %119 = vector.shape_cast %118 : vector<16xf32> to vector<16x1xf32>
    %120 = tpu.reciprocal %119 {approx = true} : vector<16x1xf32> -> vector<16x1xf32>
    %121 = vector.broadcast %120 : vector<16x1xf32> to vector<16x16xf32>
    %122 = arith.mulf %117, %121 : vector<16x16xf32>
    %cst_46 = arith.constant dense<0.000000e+00> : vector<16x8xf32>
    %123 = tpu.matmul %122, %108, %cst_46 {dimension_numbers = #tpu.dot_dimension_numbers<[1], [0], [0], [1], [0, 0, 1, 1], [], []>} : vector<16x16xf32>, vector<16x8xf32>, vector<16x8xf32> -> vector<16x8xf32>
    %124 = tpu.concatenate %69, %87, %105, %123 in 1 : vector<16x8xf32>, vector<16x8xf32>, vector<16x8xf32>, vector<16x8xf32> -> vector<16x32xf32>
    %125 = arith.truncf %124 : vector<16x32xf32> to vector<16x32xbf16>
    %cst_47 = arith.constant dense<0.000000e+00> : vector<16x32xf32>
    %126 = tpu.matmul %125, %41, %cst_47 {dimension_numbers = #tpu.dot_dimension_numbers<[1], [0], [0], [1], [0, 0, 1, 1], [], []>} : vector<16x32xbf16>, vector<32x32xbf16>, vector<16x32xf32> -> vector<16x32xf32>
    %c0_48 = arith.constant 0 : index
    %c1 = arith.constant 1 : index
    %c0_49 = arith.constant 0 : index
    %127 = vector.load %arg4[%c0_48, %c1, %c0_49] : memref<2x8x128xf32, #tpu.memory_space<vmem>>, vector<1x1x32xf32>
    %128 = vector.shape_cast %127 : vector<1x1x32xf32> to vector<1x32xf32>
    %129 = vector.broadcast %128 : vector<1x32xf32> to vector<16x32xf32>
    %130 = arith.addf %126, %129 : vector<16x32xf32>
    %131 = arith.addf %36, %130 : vector<16x32xf32>
    %c0_50 = arith.constant 0 : index
    %c2 = arith.constant 2 : index
    %c0_51 = arith.constant 0 : index
    %132 = vector.load %arg4[%c0_50, %c2, %c0_51] : memref<2x8x128xf32, #tpu.memory_space<vmem>>, vector<1x1x32xf32>
    %133 = vector.shape_cast %132 : vector<1x1x32xf32> to vector<1x32xf32>
    %c0_52 = arith.constant 0 : index
    %c3 = arith.constant 3 : index
    %c0_53 = arith.constant 0 : index
    %134 = vector.load %arg4[%c0_52, %c3, %c0_53] : memref<2x8x128xf32, #tpu.memory_space<vmem>>, vector<1x1x32xf32>
    %135 = vector.shape_cast %134 : vector<1x1x32xf32> to vector<1x32xf32>
    %cst_54 = arith.constant dense<0.000000e+00> : vector<16xf32>
    %136 = vector.multi_reduction <add>, %131, %cst_54 [1] : vector<16x32xf32> to vector<16xf32>
    %137 = vector.shape_cast %136 : vector<16xf32> to vector<16x1xf32>
    %cst_55 = arith.constant 3.200000e+01 : f32
    %138 = vector.broadcast %cst_55 : f32 to vector<16x1xf32>
    %139 = arith.divf %137, %138 : vector<16x1xf32>
    %140 = vector.broadcast %139 : vector<16x1xf32> to vector<16x32xf32>
    %141 = arith.subf %131, %140 : vector<16x32xf32>
    %142 = vector.broadcast %139 : vector<16x1xf32> to vector<16x32xf32>
    %143 = arith.subf %131, %142 : vector<16x32xf32>
    %144 = arith.mulf %141, %143 : vector<16x32xf32>
    %cst_56 = arith.constant dense<0.000000e+00> : vector<16xf32>
    %145 = vector.multi_reduction <add>, %144, %cst_56 [1] : vector<16x32xf32> to vector<16xf32>
    %146 = vector.shape_cast %145 : vector<16xf32> to vector<16x1xf32>
    %cst_57 = arith.constant 3.200000e+01 : f32
    %147 = vector.broadcast %cst_57 : f32 to vector<16x1xf32>
    %148 = arith.divf %146, %147 : vector<16x1xf32>
    %149 = vector.broadcast %139 : vector<16x1xf32> to vector<16x32xf32>
    %150 = arith.subf %131, %149 : vector<16x32xf32>
    %cst_58 = arith.constant 9.99999996E-13 : f32
    %151 = vector.broadcast %cst_58 : f32 to vector<16x1xf32>
    %152 = arith.addf %148, %151 : vector<16x1xf32>
    %153 = math.rsqrt %152 : vector<16x1xf32>
    %154 = vector.broadcast %153 : vector<16x1xf32> to vector<16x32xf32>
    %155 = arith.mulf %150, %154 : vector<16x32xf32>
    %156 = vector.broadcast %133 : vector<1x32xf32> to vector<16x32xf32>
    %157 = arith.mulf %155, %156 : vector<16x32xf32>
    %158 = vector.broadcast %135 : vector<1x32xf32> to vector<16x32xf32>
    %159 = arith.addf %157, %158 : vector<16x32xf32>
    %160 = arith.truncf %159 : vector<16x32xf32> to vector<16x32xbf16>
    %cst_59 = arith.constant dense<0.000000e+00> : vector<16x64xf32>
    %161 = tpu.matmul %160, %43, %cst_59 {dimension_numbers = #tpu.dot_dimension_numbers<[1], [0], [0], [1], [0, 0, 1, 1], [], []>} : vector<16x32xbf16>, vector<32x64xbf16>, vector<16x64xf32> -> vector<16x64xf32>
    %c0_60 = arith.constant 0 : index
    %c4 = arith.constant 4 : index
    %c0_61 = arith.constant 0 : index
    %162 = vector.load %arg4[%c0_60, %c4, %c0_61] : memref<2x8x128xf32, #tpu.memory_space<vmem>>, vector<1x1x64xf32>
    %163 = vector.shape_cast %162 : vector<1x1x64xf32> to vector<1x64xf32>
    %164 = vector.broadcast %163 : vector<1x64xf32> to vector<16x64xf32>
    %165 = arith.addf %161, %164 : vector<16x64xf32>
    %166 = arith.mulf %165, %165 : vector<16x64xf32>
    %167 = arith.mulf %165, %166 : vector<16x64xf32>
    %cst_62 = arith.constant 4.471500e-02 : f32
    %168 = vector.broadcast %cst_62 : f32 to vector<16x64xf32>
    %169 = arith.mulf %168, %167 : vector<16x64xf32>
    %170 = arith.addf %165, %169 : vector<16x64xf32>
    %cst_63 = arith.constant 0.797884583 : f32
    %171 = vector.broadcast %cst_63 : f32 to vector<16x64xf32>
    %172 = arith.mulf %171, %170 : vector<16x64xf32>
    %173 = math.tanh %172 : vector<16x64xf32>
    %cst_64 = arith.constant 1.000000e+00 : f32
    %174 = vector.broadcast %cst_64 : f32 to vector<16x64xf32>
    %175 = arith.addf %174, %173 : vector<16x64xf32>
    %cst_65 = arith.constant 5.000000e-01 : f32
    %176 = vector.broadcast %cst_65 : f32 to vector<16x64xf32>
    %177 = arith.mulf %176, %175 : vector<16x64xf32>
    %178 = arith.mulf %165, %177 : vector<16x64xf32>
    %179 = arith.truncf %178 : vector<16x64xf32> to vector<16x64xbf16>
    %cst_66 = arith.constant dense<0.000000e+00> : vector<16x32xf32>
    %180 = tpu.matmul %179, %45, %cst_66 {dimension_numbers = #tpu.dot_dimension_numbers<[1], [0], [0], [1], [0, 0, 1, 1], [], []>} : vector<16x64xbf16>, vector<64x32xbf16>, vector<16x32xf32> -> vector<16x32xf32>
    %c0_67 = arith.constant 0 : index
    %c5 = arith.constant 5 : index
    %c0_68 = arith.constant 0 : index
    %181 = vector.load %arg4[%c0_67, %c5, %c0_68] : memref<2x8x128xf32, #tpu.memory_space<vmem>>, vector<1x1x32xf32>
    %182 = vector.shape_cast %181 : vector<1x1x32xf32> to vector<1x32xf32>
    %183 = vector.broadcast %182 : vector<1x32xf32> to vector<16x32xf32>
    %184 = arith.addf %180, %183 : vector<16x32xf32>
    %185 = arith.addf %159, %184 : vector<16x32xf32>
    %c0_69 = arith.constant 0 : index
    %c6 = arith.constant 6 : index
    %c0_70 = arith.constant 0 : index
    %186 = vector.load %arg4[%c0_69, %c6, %c0_70] : memref<2x8x128xf32, #tpu.memory_space<vmem>>, vector<1x1x32xf32>
    %187 = vector.shape_cast %186 : vector<1x1x32xf32> to vector<1x32xf32>
    %c0_71 = arith.constant 0 : index
    %c7 = arith.constant 7 : index
    %c0_72 = arith.constant 0 : index
    %188 = vector.load %arg4[%c0_71, %c7, %c0_72] : memref<2x8x128xf32, #tpu.memory_space<vmem>>, vector<1x1x32xf32>
    %189 = vector.shape_cast %188 : vector<1x1x32xf32> to vector<1x32xf32>
    %cst_73 = arith.constant dense<0.000000e+00> : vector<16xf32>
    %190 = vector.multi_reduction <add>, %185, %cst_73 [1] : vector<16x32xf32> to vector<16xf32>
    %191 = vector.shape_cast %190 : vector<16xf32> to vector<16x1xf32>
    %cst_74 = arith.constant 3.200000e+01 : f32
    %192 = vector.broadcast %cst_74 : f32 to vector<16x1xf32>
    %193 = arith.divf %191, %192 : vector<16x1xf32>
    %194 = vector.broadcast %193 : vector<16x1xf32> to vector<16x32xf32>
    %195 = arith.subf %185, %194 : vector<16x32xf32>
    %196 = vector.broadcast %193 : vector<16x1xf32> to vector<16x32xf32>
    %197 = arith.subf %185, %196 : vector<16x32xf32>
    %198 = arith.mulf %195, %197 : vector<16x32xf32>
    %cst_75 = arith.constant dense<0.000000e+00> : vector<16xf32>
    %199 = vector.multi_reduction <add>, %198, %cst_75 [1] : vector<16x32xf32> to vector<16xf32>
    %200 = vector.shape_cast %199 : vector<16xf32> to vector<16x1xf32>
    %cst_76 = arith.constant 3.200000e+01 : f32
    %201 = vector.broadcast %cst_76 : f32 to vector<16x1xf32>
    %202 = arith.divf %200, %201 : vector<16x1xf32>
    %203 = vector.broadcast %193 : vector<16x1xf32> to vector<16x32xf32>
    %204 = arith.subf %185, %203 : vector<16x32xf32>
    %cst_77 = arith.constant 9.99999996E-13 : f32
    %205 = vector.broadcast %cst_77 : f32 to vector<16x1xf32>
    %206 = arith.addf %202, %205 : vector<16x1xf32>
    %207 = math.rsqrt %206 : vector<16x1xf32>
    %208 = vector.broadcast %207 : vector<16x1xf32> to vector<16x32xf32>
    %209 = arith.mulf %204, %208 : vector<16x32xf32>
    %210 = vector.broadcast %187 : vector<1x32xf32> to vector<16x32xf32>
    %211 = arith.mulf %209, %210 : vector<16x32xf32>
    %212 = vector.broadcast %189 : vector<1x32xf32> to vector<16x32xf32>
    %213 = arith.addf %211, %212 : vector<16x32xf32>
    %c1_78 = arith.constant 1 : index
    %c0_79 = arith.constant 0 : index
    %c0_80 = arith.constant 0 : index
    %214 = vector.load %arg3[%c1_78, %c0_79, %c0_80] : memref<2x160x128xbf16, #tpu.memory_space<vmem>>, vector<1x32x96xbf16>
    %215 = vector.shape_cast %214 : vector<1x32x96xbf16> to vector<32x96xbf16>
    %c1_81 = arith.constant 1 : index
    %c32_82 = arith.constant 32 : index
    %c0_83 = arith.constant 0 : index
    %216 = vector.load %arg3[%c1_81, %c32_82, %c0_83] : memref<2x160x128xbf16, #tpu.memory_space<vmem>>, vector<1x32x32xbf16>
    %217 = vector.shape_cast %216 : vector<1x32x32xbf16> to vector<32x32xbf16>
    %c1_84 = arith.constant 1 : index
    %c64_85 = arith.constant 64 : index
    %c0_86 = arith.constant 0 : index
    %218 = vector.load %arg3[%c1_84, %c64_85, %c0_86] : memref<2x160x128xbf16, #tpu.memory_space<vmem>>, vector<1x32x64xbf16>
    %219 = vector.shape_cast %218 : vector<1x32x64xbf16> to vector<32x64xbf16>
    %c1_87 = arith.constant 1 : index
    %c96_88 = arith.constant 96 : index
    %c0_89 = arith.constant 0 : index
    %220 = vector.load %arg3[%c1_87, %c96_88, %c0_89] : memref<2x160x128xbf16, #tpu.memory_space<vmem>>, vector<1x64x32xbf16>
    %221 = vector.shape_cast %220 : vector<1x64x32xbf16> to vector<64x32xbf16>
    %222 = arith.truncf %213 : vector<16x32xf32> to vector<16x32xbf16>
    %cst_90 = arith.constant dense<0.000000e+00> : vector<16x96xf32>
    %223 = tpu.matmul %222, %215, %cst_90 {dimension_numbers = #tpu.dot_dimension_numbers<[1], [0], [0], [1], [0, 0, 1, 1], [], []>} : vector<16x32xbf16>, vector<32x96xbf16>, vector<16x96xf32> -> vector<16x96xf32>
    %c1_91 = arith.constant 1 : index
    %c0_92 = arith.constant 0 : index
    %c0_93 = arith.constant 0 : index
    %224 = vector.load %arg4[%c1_91, %c0_92, %c0_93] : memref<2x8x128xf32, #tpu.memory_space<vmem>>, vector<1x1x96xf32>
    %225 = vector.shape_cast %224 : vector<1x1x96xf32> to vector<1x96xf32>
    %226 = vector.broadcast %225 : vector<1x96xf32> to vector<16x96xf32>
    %227 = arith.addf %223, %226 : vector<16x96xf32>
    %228 = vector.extract_strided_slice %227 {offsets = [0, 0], sizes = [16, 8], strides = [1, 1]} : vector<16x96xf32> to vector<16x8xf32>
    %229 = vector.extract_strided_slice %227 {offsets = [0, 32], sizes = [16, 8], strides = [1, 1]} : vector<16x96xf32> to vector<16x8xf32>
    %230 = vector.extract_strided_slice %227 {offsets = [0, 64], sizes = [16, 8], strides = [1, 1]} : vector<16x96xf32> to vector<16x8xf32>
    %cst_94 = arith.constant dense<0.000000e+00> : vector<16x16xf32>
    %231 = tpu.matmul %228, %229, %cst_94 {dimension_numbers = #tpu.dot_dimension_numbers<[1], [1], [0], [0], [0, 0, 1, 0], [], []>} : vector<16x8xf32>, vector<16x8xf32>, vector<16x16xf32> -> vector<16x16xf32>
    %cst_95 = arith.constant 0.353553385 : f32
    %232 = vector.broadcast %cst_95 : f32 to vector<16x16xf32>
    %233 = arith.mulf %231, %232 : vector<16x16xf32>
    %234 = arith.addf %233, %37 : vector<16x16xf32>
    %cst_96 = arith.constant dense<0xFF800000> : vector<16xf32>
    %235 = vector.multi_reduction <maximumf>, %234, %cst_96 [1] : vector<16x16xf32> to vector<16xf32>
    %236 = vector.shape_cast %235 : vector<16xf32> to vector<16x1xf32>
    %237 = vector.broadcast %236 : vector<16x1xf32> to vector<16x16xf32>
    %238 = arith.subf %234, %237 : vector<16x16xf32>
    %239 = math.exp %238 : vector<16x16xf32>
    %cst_97 = arith.constant dense<0.000000e+00> : vector<16xf32>
    %240 = vector.multi_reduction <add>, %239, %cst_97 [1] : vector<16x16xf32> to vector<16xf32>
    %241 = vector.shape_cast %240 : vector<16xf32> to vector<16x1xf32>
    %242 = tpu.reciprocal %241 {approx = true} : vector<16x1xf32> -> vector<16x1xf32>
    %243 = vector.broadcast %242 : vector<16x1xf32> to vector<16x16xf32>
    %244 = arith.mulf %239, %243 : vector<16x16xf32>
    %cst_98 = arith.constant dense<0.000000e+00> : vector<16x8xf32>
    %245 = tpu.matmul %244, %230, %cst_98 {dimension_numbers = #tpu.dot_dimension_numbers<[1], [0], [0], [1], [0, 0, 1, 1], [], []>} : vector<16x16xf32>, vector<16x8xf32>, vector<16x8xf32> -> vector<16x8xf32>
    %246 = vector.extract_strided_slice %227 {offsets = [0, 8], sizes = [16, 8], strides = [1, 1]} : vector<16x96xf32> to vector<16x8xf32>
    %247 = vector.extract_strided_slice %227 {offsets = [0, 40], sizes = [16, 8], strides = [1, 1]} : vector<16x96xf32> to vector<16x8xf32>
    %248 = vector.extract_strided_slice %227 {offsets = [0, 72], sizes = [16, 8], strides = [1, 1]} : vector<16x96xf32> to vector<16x8xf32>
    %cst_99 = arith.constant dense<0.000000e+00> : vector<16x16xf32>
    %249 = tpu.matmul %246, %247, %cst_99 {dimension_numbers = #tpu.dot_dimension_numbers<[1], [1], [0], [0], [0, 0, 1, 0], [], []>} : vector<16x8xf32>, vector<16x8xf32>, vector<16x16xf32> -> vector<16x16xf32>
    %cst_100 = arith.constant 0.353553385 : f32
    %250 = vector.broadcast %cst_100 : f32 to vector<16x16xf32>
    %251 = arith.mulf %249, %250 : vector<16x16xf32>
    %252 = arith.addf %251, %37 : vector<16x16xf32>
    %cst_101 = arith.constant dense<0xFF800000> : vector<16xf32>
    %253 = vector.multi_reduction <maximumf>, %252, %cst_101 [1] : vector<16x16xf32> to vector<16xf32>
    %254 = vector.shape_cast %253 : vector<16xf32> to vector<16x1xf32>
    %255 = vector.broadcast %254 : vector<16x1xf32> to vector<16x16xf32>
    %256 = arith.subf %252, %255 : vector<16x16xf32>
    %257 = math.exp %256 : vector<16x16xf32>
    %cst_102 = arith.constant dense<0.000000e+00> : vector<16xf32>
    %258 = vector.multi_reduction <add>, %257, %cst_102 [1] : vector<16x16xf32> to vector<16xf32>
    %259 = vector.shape_cast %258 : vector<16xf32> to vector<16x1xf32>
    %260 = tpu.reciprocal %259 {approx = true} : vector<16x1xf32> -> vector<16x1xf32>
    %261 = vector.broadcast %260 : vector<16x1xf32> to vector<16x16xf32>
    %262 = arith.mulf %257, %261 : vector<16x16xf32>
    %cst_103 = arith.constant dense<0.000000e+00> : vector<16x8xf32>
    %263 = tpu.matmul %262, %248, %cst_103 {dimension_numbers = #tpu.dot_dimension_numbers<[1], [0], [0], [1], [0, 0, 1, 1], [], []>} : vector<16x16xf32>, vector<16x8xf32>, vector<16x8xf32> -> vector<16x8xf32>
    %264 = vector.extract_strided_slice %227 {offsets = [0, 16], sizes = [16, 8], strides = [1, 1]} : vector<16x96xf32> to vector<16x8xf32>
    %265 = vector.extract_strided_slice %227 {offsets = [0, 48], sizes = [16, 8], strides = [1, 1]} : vector<16x96xf32> to vector<16x8xf32>
    %266 = vector.extract_strided_slice %227 {offsets = [0, 80], sizes = [16, 8], strides = [1, 1]} : vector<16x96xf32> to vector<16x8xf32>
    %cst_104 = arith.constant dense<0.000000e+00> : vector<16x16xf32>
    %267 = tpu.matmul %264, %265, %cst_104 {dimension_numbers = #tpu.dot_dimension_numbers<[1], [1], [0], [0], [0, 0, 1, 0], [], []>} : vector<16x8xf32>, vector<16x8xf32>, vector<16x16xf32> -> vector<16x16xf32>
    %cst_105 = arith.constant 0.353553385 : f32
    %268 = vector.broadcast %cst_105 : f32 to vector<16x16xf32>
    %269 = arith.mulf %267, %268 : vector<16x16xf32>
    %270 = arith.addf %269, %37 : vector<16x16xf32>
    %cst_106 = arith.constant dense<0xFF800000> : vector<16xf32>
    %271 = vector.multi_reduction <maximumf>, %270, %cst_106 [1] : vector<16x16xf32> to vector<16xf32>
    %272 = vector.shape_cast %271 : vector<16xf32> to vector<16x1xf32>
    %273 = vector.broadcast %272 : vector<16x1xf32> to vector<16x16xf32>
    %274 = arith.subf %270, %273 : vector<16x16xf32>
    %275 = math.exp %274 : vector<16x16xf32>
    %cst_107 = arith.constant dense<0.000000e+00> : vector<16xf32>
    %276 = vector.multi_reduction <add>, %275, %cst_107 [1] : vector<16x16xf32> to vector<16xf32>
    %277 = vector.shape_cast %276 : vector<16xf32> to vector<16x1xf32>
    %278 = tpu.reciprocal %277 {approx = true} : vector<16x1xf32> -> vector<16x1xf32>
    %279 = vector.broadcast %278 : vector<16x1xf32> to vector<16x16xf32>
    %280 = arith.mulf %275, %279 : vector<16x16xf32>
    %cst_108 = arith.constant dense<0.000000e+00> : vector<16x8xf32>
    %281 = tpu.matmul %280, %266, %cst_108 {dimension_numbers = #tpu.dot_dimension_numbers<[1], [0], [0], [1], [0, 0, 1, 1], [], []>} : vector<16x16xf32>, vector<16x8xf32>, vector<16x8xf32> -> vector<16x8xf32>
    %282 = vector.extract_strided_slice %227 {offsets = [0, 24], sizes = [16, 8], strides = [1, 1]} : vector<16x96xf32> to vector<16x8xf32>
    %283 = vector.extract_strided_slice %227 {offsets = [0, 56], sizes = [16, 8], strides = [1, 1]} : vector<16x96xf32> to vector<16x8xf32>
    %284 = vector.extract_strided_slice %227 {offsets = [0, 88], sizes = [16, 8], strides = [1, 1]} : vector<16x96xf32> to vector<16x8xf32>
    %cst_109 = arith.constant dense<0.000000e+00> : vector<16x16xf32>
    %285 = tpu.matmul %282, %283, %cst_109 {dimension_numbers = #tpu.dot_dimension_numbers<[1], [1], [0], [0], [0, 0, 1, 0], [], []>} : vector<16x8xf32>, vector<16x8xf32>, vector<16x16xf32> -> vector<16x16xf32>
    %cst_110 = arith.constant 0.353553385 : f32
    %286 = vector.broadcast %cst_110 : f32 to vector<16x16xf32>
    %287 = arith.mulf %285, %286 : vector<16x16xf32>
    %288 = arith.addf %287, %37 : vector<16x16xf32>
    %cst_111 = arith.constant dense<0xFF800000> : vector<16xf32>
    %289 = vector.multi_reduction <maximumf>, %288, %cst_111 [1] : vector<16x16xf32> to vector<16xf32>
    %290 = vector.shape_cast %289 : vector<16xf32> to vector<16x1xf32>
    %291 = vector.broadcast %290 : vector<16x1xf32> to vector<16x16xf32>
    %292 = arith.subf %288, %291 : vector<16x16xf32>
    %293 = math.exp %292 : vector<16x16xf32>
    %cst_112 = arith.constant dense<0.000000e+00> : vector<16xf32>
    %294 = vector.multi_reduction <add>, %293, %cst_112 [1] : vector<16x16xf32> to vector<16xf32>
    %295 = vector.shape_cast %294 : vector<16xf32> to vector<16x1xf32>
    %296 = tpu.reciprocal %295 {approx = true} : vector<16x1xf32> -> vector<16x1xf32>
    %297 = vector.broadcast %296 : vector<16x1xf32> to vector<16x16xf32>
    %298 = arith.mulf %293, %297 : vector<16x16xf32>
    %cst_113 = arith.constant dense<0.000000e+00> : vector<16x8xf32>
    %299 = tpu.matmul %298, %284, %cst_113 {dimension_numbers = #tpu.dot_dimension_numbers<[1], [0], [0], [1], [0, 0, 1, 1], [], []>} : vector<16x16xf32>, vector<16x8xf32>, vector<16x8xf32> -> vector<16x8xf32>
    %300 = tpu.concatenate %245, %263, %281, %299 in 1 : vector<16x8xf32>, vector<16x8xf32>, vector<16x8xf32>, vector<16x8xf32> -> vector<16x32xf32>
    %301 = arith.truncf %300 : vector<16x32xf32> to vector<16x32xbf16>
    %cst_114 = arith.constant dense<0.000000e+00> : vector<16x32xf32>
    %302 = tpu.matmul %301, %217, %cst_114 {dimension_numbers = #tpu.dot_dimension_numbers<[1], [0], [0], [1], [0, 0, 1, 1], [], []>} : vector<16x32xbf16>, vector<32x32xbf16>, vector<16x32xf32> -> vector<16x32xf32>
    %c1_115 = arith.constant 1 : index
    %c1_116 = arith.constant 1 : index
    %c0_117 = arith.constant 0 : index
    %303 = vector.load %arg4[%c1_115, %c1_116, %c0_117] : memref<2x8x128xf32, #tpu.memory_space<vmem>>, vector<1x1x32xf32>
    %304 = vector.shape_cast %303 : vector<1x1x32xf32> to vector<1x32xf32>
    %305 = vector.broadcast %304 : vector<1x32xf32> to vector<16x32xf32>
    %306 = arith.addf %302, %305 : vector<16x32xf32>
    %307 = arith.addf %213, %306 : vector<16x32xf32>
    %c1_118 = arith.constant 1 : index
    %c2_119 = arith.constant 2 : index
    %c0_120 = arith.constant 0 : index
    %308 = vector.load %arg4[%c1_118, %c2_119, %c0_120] : memref<2x8x128xf32, #tpu.memory_space<vmem>>, vector<1x1x32xf32>
    %309 = vector.shape_cast %308 : vector<1x1x32xf32> to vector<1x32xf32>
    %c1_121 = arith.constant 1 : index
    %c3_122 = arith.constant 3 : index
    %c0_123 = arith.constant 0 : index
    %310 = vector.load %arg4[%c1_121, %c3_122, %c0_123] : memref<2x8x128xf32, #tpu.memory_space<vmem>>, vector<1x1x32xf32>
    %311 = vector.shape_cast %310 : vector<1x1x32xf32> to vector<1x32xf32>
    %cst_124 = arith.constant dense<0.000000e+00> : vector<16xf32>
    %312 = vector.multi_reduction <add>, %307, %cst_124 [1] : vector<16x32xf32> to vector<16xf32>
    %313 = vector.shape_cast %312 : vector<16xf32> to vector<16x1xf32>
    %cst_125 = arith.constant 3.200000e+01 : f32
    %314 = vector.broadcast %cst_125 : f32 to vector<16x1xf32>
    %315 = arith.divf %313, %314 : vector<16x1xf32>
    %316 = vector.broadcast %315 : vector<16x1xf32> to vector<16x32xf32>
    %317 = arith.subf %307, %316 : vector<16x32xf32>
    %318 = vector.broadcast %315 : vector<16x1xf32> to vector<16x32xf32>
    %319 = arith.subf %307, %318 : vector<16x32xf32>
    %320 = arith.mulf %317, %319 : vector<16x32xf32>
    %cst_126 = arith.constant dense<0.000000e+00> : vector<16xf32>
    %321 = vector.multi_reduction <add>, %320, %cst_126 [1] : vector<16x32xf32> to vector<16xf32>
    %322 = vector.shape_cast %321 : vector<16xf32> to vector<16x1xf32>
    %cst_127 = arith.constant 3.200000e+01 : f32
    %323 = vector.broadcast %cst_127 : f32 to vector<16x1xf32>
    %324 = arith.divf %322, %323 : vector<16x1xf32>
    %325 = vector.broadcast %315 : vector<16x1xf32> to vector<16x32xf32>
    %326 = arith.subf %307, %325 : vector<16x32xf32>
    %cst_128 = arith.constant 9.99999996E-13 : f32
    %327 = vector.broadcast %cst_128 : f32 to vector<16x1xf32>
    %328 = arith.addf %324, %327 : vector<16x1xf32>
    %329 = math.rsqrt %328 : vector<16x1xf32>
    %330 = vector.broadcast %329 : vector<16x1xf32> to vector<16x32xf32>
    %331 = arith.mulf %326, %330 : vector<16x32xf32>
    %332 = vector.broadcast %309 : vector<1x32xf32> to vector<16x32xf32>
    %333 = arith.mulf %331, %332 : vector<16x32xf32>
    %334 = vector.broadcast %311 : vector<1x32xf32> to vector<16x32xf32>
    %335 = arith.addf %333, %334 : vector<16x32xf32>
    %336 = arith.truncf %335 : vector<16x32xf32> to vector<16x32xbf16>
    %cst_129 = arith.constant dense<0.000000e+00> : vector<16x64xf32>
    %337 = tpu.matmul %336, %219, %cst_129 {dimension_numbers = #tpu.dot_dimension_numbers<[1], [0], [0], [1], [0, 0, 1, 1], [], []>} : vector<16x32xbf16>, vector<32x64xbf16>, vector<16x64xf32> -> vector<16x64xf32>
    %c1_130 = arith.constant 1 : index
    %c4_131 = arith.constant 4 : index
    %c0_132 = arith.constant 0 : index
    %338 = vector.load %arg4[%c1_130, %c4_131, %c0_132] : memref<2x8x128xf32, #tpu.memory_space<vmem>>, vector<1x1x64xf32>
    %339 = vector.shape_cast %338 : vector<1x1x64xf32> to vector<1x64xf32>
    %340 = vector.broadcast %339 : vector<1x64xf32> to vector<16x64xf32>
    %341 = arith.addf %337, %340 : vector<16x64xf32>
    %342 = arith.mulf %341, %341 : vector<16x64xf32>
    %343 = arith.mulf %341, %342 : vector<16x64xf32>
    %cst_133 = arith.constant 4.471500e-02 : f32
    %344 = vector.broadcast %cst_133 : f32 to vector<16x64xf32>
    %345 = arith.mulf %344, %343 : vector<16x64xf32>
    %346 = arith.addf %341, %345 : vector<16x64xf32>
    %cst_134 = arith.constant 0.797884583 : f32
    %347 = vector.broadcast %cst_134 : f32 to vector<16x64xf32>
    %348 = arith.mulf %347, %346 : vector<16x64xf32>
    %349 = math.tanh %348 : vector<16x64xf32>
    %cst_135 = arith.constant 1.000000e+00 : f32
    %350 = vector.broadcast %cst_135 : f32 to vector<16x64xf32>
    %351 = arith.addf %350, %349 : vector<16x64xf32>
    %cst_136 = arith.constant 5.000000e-01 : f32
    %352 = vector.broadcast %cst_136 : f32 to vector<16x64xf32>
    %353 = arith.mulf %352, %351 : vector<16x64xf32>
    %354 = arith.mulf %341, %353 : vector<16x64xf32>
    %355 = arith.truncf %354 : vector<16x64xf32> to vector<16x64xbf16>
    %cst_137 = arith.constant dense<0.000000e+00> : vector<16x32xf32>
    %356 = tpu.matmul %355, %221, %cst_137 {dimension_numbers = #tpu.dot_dimension_numbers<[1], [0], [0], [1], [0, 0, 1, 1], [], []>} : vector<16x64xbf16>, vector<64x32xbf16>, vector<16x32xf32> -> vector<16x32xf32>
    %c1_138 = arith.constant 1 : index
    %c5_139 = arith.constant 5 : index
    %c0_140 = arith.constant 0 : index
    %357 = vector.load %arg4[%c1_138, %c5_139, %c0_140] : memref<2x8x128xf32, #tpu.memory_space<vmem>>, vector<1x1x32xf32>
    %358 = vector.shape_cast %357 : vector<1x1x32xf32> to vector<1x32xf32>
    %359 = vector.broadcast %358 : vector<1x32xf32> to vector<16x32xf32>
    %360 = arith.addf %356, %359 : vector<16x32xf32>
    %361 = arith.addf %335, %360 : vector<16x32xf32>
    %c1_141 = arith.constant 1 : index
    %c6_142 = arith.constant 6 : index
    %c0_143 = arith.constant 0 : index
    %362 = vector.load %arg4[%c1_141, %c6_142, %c0_143] : memref<2x8x128xf32, #tpu.memory_space<vmem>>, vector<1x1x32xf32>
    %363 = vector.shape_cast %362 : vector<1x1x32xf32> to vector<1x32xf32>
    %c1_144 = arith.constant 1 : index
    %c7_145 = arith.constant 7 : index
    %c0_146 = arith.constant 0 : index
    %364 = vector.load %arg4[%c1_144, %c7_145, %c0_146] : memref<2x8x128xf32, #tpu.memory_space<vmem>>, vector<1x1x32xf32>
    %365 = vector.shape_cast %364 : vector<1x1x32xf32> to vector<1x32xf32>
    %cst_147 = arith.constant dense<0.000000e+00> : vector<16xf32>
    %366 = vector.multi_reduction <add>, %361, %cst_147 [1] : vector<16x32xf32> to vector<16xf32>
    %367 = vector.shape_cast %366 : vector<16xf32> to vector<16x1xf32>
    %cst_148 = arith.constant 3.200000e+01 : f32
    %368 = vector.broadcast %cst_148 : f32 to vector<16x1xf32>
    %369 = arith.divf %367, %368 : vector<16x1xf32>
    %370 = vector.broadcast %369 : vector<16x1xf32> to vector<16x32xf32>
    %371 = arith.subf %361, %370 : vector<16x32xf32>
    %372 = vector.broadcast %369 : vector<16x1xf32> to vector<16x32xf32>
    %373 = arith.subf %361, %372 : vector<16x32xf32>
    %374 = arith.mulf %371, %373 : vector<16x32xf32>
    %cst_149 = arith.constant dense<0.000000e+00> : vector<16xf32>
    %375 = vector.multi_reduction <add>, %374, %cst_149 [1] : vector<16x32xf32> to vector<16xf32>
    %376 = vector.shape_cast %375 : vector<16xf32> to vector<16x1xf32>
    %cst_150 = arith.constant 3.200000e+01 : f32
    %377 = vector.broadcast %cst_150 : f32 to vector<16x1xf32>
    %378 = arith.divf %376, %377 : vector<16x1xf32>
    %379 = vector.broadcast %369 : vector<16x1xf32> to vector<16x32xf32>
    %380 = arith.subf %361, %379 : vector<16x32xf32>
    %cst_151 = arith.constant 9.99999996E-13 : f32
    %381 = vector.broadcast %cst_151 : f32 to vector<16x1xf32>
    %382 = arith.addf %378, %381 : vector<16x1xf32>
    %383 = math.rsqrt %382 : vector<16x1xf32>
    %384 = vector.broadcast %383 : vector<16x1xf32> to vector<16x32xf32>
    %385 = arith.mulf %380, %384 : vector<16x32xf32>
    %386 = vector.broadcast %363 : vector<1x32xf32> to vector<16x32xf32>
    %387 = arith.mulf %385, %386 : vector<16x32xf32>
    %388 = vector.broadcast %365 : vector<1x32xf32> to vector<16x32xf32>
    %389 = arith.addf %387, %388 : vector<16x32xf32>
    %c128 = arith.constant 128 : index
    %c0_152 = arith.constant 0 : index
    %390 = vector.load %arg5[%c128, %c0_152] : memref<192x128xbf16, #tpu.memory_space<vmem>>, vector<32x32xbf16>
    %391 = arith.truncf %389 : vector<16x32xf32> to vector<16x32xbf16>
    %cst_153 = arith.constant dense<0.000000e+00> : vector<16x32xf32>
    %392 = tpu.matmul %391, %390, %cst_153 {dimension_numbers = #tpu.dot_dimension_numbers<[1], [0], [0], [1], [0, 0, 1, 1], [], []>} : vector<16x32xbf16>, vector<32x32xbf16>, vector<16x32xf32> -> vector<16x32xf32>
    %c18 = arith.constant 18 : index
    %c0_154 = arith.constant 0 : index
    %393 = vector.load %arg6[%c18, %c0_154] : memref<24x128xf32, #tpu.memory_space<vmem>>, vector<1x32xf32>
    %394 = vector.broadcast %393 : vector<1x32xf32> to vector<16x32xf32>
    %395 = arith.addf %392, %394 : vector<16x32xf32>
    %396 = arith.mulf %395, %395 : vector<16x32xf32>
    %397 = arith.mulf %395, %396 : vector<16x32xf32>
    %cst_155 = arith.constant 4.471500e-02 : f32
    %398 = vector.broadcast %cst_155 : f32 to vector<16x32xf32>
    %399 = arith.mulf %398, %397 : vector<16x32xf32>
    %400 = arith.addf %395, %399 : vector<16x32xf32>
    %cst_156 = arith.constant 0.797884583 : f32
    %401 = vector.broadcast %cst_156 : f32 to vector<16x32xf32>
    %402 = arith.mulf %401, %400 : vector<16x32xf32>
    %403 = math.tanh %402 : vector<16x32xf32>
    %cst_157 = arith.constant 1.000000e+00 : f32
    %404 = vector.broadcast %cst_157 : f32 to vector<16x32xf32>
    %405 = arith.addf %404, %403 : vector<16x32xf32>
    %cst_158 = arith.constant 5.000000e-01 : f32
    %406 = vector.broadcast %cst_158 : f32 to vector<16x32xf32>
    %407 = arith.mulf %406, %405 : vector<16x32xf32>
    %408 = arith.mulf %395, %407 : vector<16x32xf32>
    %c19 = arith.constant 19 : index
    %c0_159 = arith.constant 0 : index
    %409 = vector.load %arg6[%c19, %c0_159] : memref<24x128xf32, #tpu.memory_space<vmem>>, vector<1x32xf32>
    %c20 = arith.constant 20 : index
    %c0_160 = arith.constant 0 : index
    %410 = vector.load %arg6[%c20, %c0_160] : memref<24x128xf32, #tpu.memory_space<vmem>>, vector<1x32xf32>
    %cst_161 = arith.constant dense<0.000000e+00> : vector<16xf32>
    %411 = vector.multi_reduction <add>, %408, %cst_161 [1] : vector<16x32xf32> to vector<16xf32>
    %412 = vector.shape_cast %411 : vector<16xf32> to vector<16x1xf32>
    %cst_162 = arith.constant 3.200000e+01 : f32
    %413 = vector.broadcast %cst_162 : f32 to vector<16x1xf32>
    %414 = arith.divf %412, %413 : vector<16x1xf32>
    %415 = vector.broadcast %414 : vector<16x1xf32> to vector<16x32xf32>
    %416 = arith.subf %408, %415 : vector<16x32xf32>
    %417 = vector.broadcast %414 : vector<16x1xf32> to vector<16x32xf32>
    %418 = arith.subf %408, %417 : vector<16x32xf32>
    %419 = arith.mulf %416, %418 : vector<16x32xf32>
    %cst_163 = arith.constant dense<0.000000e+00> : vector<16xf32>
    %420 = vector.multi_reduction <add>, %419, %cst_163 [1] : vector<16x32xf32> to vector<16xf32>
    %421 = vector.shape_cast %420 : vector<16xf32> to vector<16x1xf32>
    %cst_164 = arith.constant 3.200000e+01 : f32
    %422 = vector.broadcast %cst_164 : f32 to vector<16x1xf32>
    %423 = arith.divf %421, %422 : vector<16x1xf32>
    %424 = vector.broadcast %414 : vector<16x1xf32> to vector<16x32xf32>
    %425 = arith.subf %408, %424 : vector<16x32xf32>
    %cst_165 = arith.constant 9.99999996E-13 : f32
    %426 = vector.broadcast %cst_165 : f32 to vector<16x1xf32>
    %427 = arith.addf %423, %426 : vector<16x1xf32>
    %428 = math.rsqrt %427 : vector<16x1xf32>
    %429 = vector.broadcast %428 : vector<16x1xf32> to vector<16x32xf32>
    %430 = arith.mulf %425, %429 : vector<16x32xf32>
    %431 = vector.broadcast %409 : vector<1x32xf32> to vector<16x32xf32>
    %432 = arith.mulf %430, %431 : vector<16x32xf32>
    %433 = vector.broadcast %410 : vector<1x32xf32> to vector<16x32xf32>
    %434 = arith.addf %432, %433 : vector<16x32xf32>
    %c160 = arith.constant 160 : index
    %c0_166 = arith.constant 0 : index
    %435 = vector.load %arg5[%c160, %c0_166] : memref<192x128xbf16, #tpu.memory_space<vmem>>, vector<32x128xbf16>
    %436 = arith.truncf %434 : vector<16x32xf32> to vector<16x32xbf16>
    %cst_167 = arith.constant dense<0.000000e+00> : vector<16x128xf32>
    %437 = tpu.matmul %436, %435, %cst_167 {dimension_numbers = #tpu.dot_dimension_numbers<[1], [0], [0], [1], [0, 0, 1, 1], [], []>} : vector<16x32xbf16>, vector<32x128xbf16>, vector<16x128xf32> -> vector<16x128xf32>
    %c21 = arith.constant 21 : index
    %c0_168 = arith.constant 0 : index
    %438 = vector.load %arg6[%c21, %c0_168] : memref<24x128xf32, #tpu.memory_space<vmem>>, vector<1x128xf32>
    %439 = vector.broadcast %438 : vector<1x128xf32> to vector<16x128xf32>
    %440 = arith.addf %437, %439 : vector<16x128xf32>
    %c0_169 = arith.constant 0 : index
    %c0_170 = arith.constant 0 : index
    %441 = vector.load %arg7[%c0_169, %c0_170] : memref<16x128xf32, #tpu.memory_space<vmem>>, vector<16x128xf32>
    tpu.vector_store %arg7[%c0_169, %c0_170], %440 {strides = array<i32>} : memref<16x128xf32, #tpu.memory_space<vmem>>, vector<16x128xf32>,
    return
  }
  func.func @transform_0(%arg0: i32) -> (i32, i32) {
    %c0_i32 = arith.constant 0 : i32
    %c0_i32_0 = arith.constant 0 : i32
    %c0_i32_1 = arith.constant 0 : i32
    return %c0_i32, %c0_i32_0 : i32, i32
  }
  func.func @transform_1(%arg0: i32) -> (i32, i32) {
    %c0_i32 = arith.constant 0 : i32
    %c0_i32_0 = arith.constant 0 : i32
    %c0_i32_1 = arith.constant 0 : i32
    return %c0_i32, %c0_i32_0 : i32, i32
  }
  func.func @transform_2(%arg0: i32) -> (i32, i32, i32) {
    %c0_i32 = arith.constant 0 : i32
    %c0_i32_0 = arith.constant 0 : i32
    %c0_i32_1 = arith.constant 0 : i32
    %c0_i32_2 = arith.constant 0 : i32
    return %c0_i32, %c0_i32_0, %c0_i32_1 : i32, i32, i32
  }
  func.func @transform_3(%arg0: i32) -> (i32, i32, i32) {
    %c0_i32 = arith.constant 0 : i32
    %c0_i32_0 = arith.constant 0 : i32
    %c0_i32_1 = arith.constant 0 : i32
    %c0_i32_2 = arith.constant 0 : i32
    return %c0_i32, %c0_i32_0, %c0_i32_1 : i32, i32, i32
  }
  func.func @transform_4(%arg0: i32) -> (i32, i32) {
    %c0_i32 = arith.constant 0 : i32
    %c0_i32_0 = arith.constant 0 : i32
    %c0_i32_1 = arith.constant 0 : i32
    return %c0_i32, %c0_i32_0 : i32, i32
  }
  func.func @transform_5(%arg0: i32) -> (i32, i32) {
    %c0_i32 = arith.constant 0 : i32
    %c0_i32_0 = arith.constant 0 : i32
    %c0_i32_1 = arith.constant 0 : i32
    return %c0_i32, %c0_i32_0 : i32, i32
  }
  func.func @transform_6(%arg0: i32) -> (i32, i32) {
    %c0_i32 = arith.constant 0 : i32
    %c0_i32_0 = arith.constant 0 : i32
    %c0_i32_1 = arith.constant 0 : i32
    return %c0_i32, %c0_i32_0 : i32, i32
  }
}

</mosaic_0001>

<llo_original>
// kernel: eq.8
$region0: #{eq.8}
  %s0 = inlined_call_operand.vmem [shape: s32[2,8], index: 0, kind: input, shape index: {}]
  %s1 = inlined_call_operand.vmem [shape: s32[16], index: 1, kind: output, shape index: {}]
  $region1: #{eq.8} parent=0
    #allocation0 [shape = 'u8[4096]{0}', space=vmem, size = 0x1000, scoped, tag = 'scoped mem for output reshape']
    #allocation1 [shape = 'u8[4096]{0}', space=vmem, size = 0x1000, scoped, tag = 'scoped mem for input reshape']
    %s3 = sshllo.u32 0, 2
    %v4 = vld [vmem:[%s0] sm:%s3]
    %5 = vst [vmem:[#allocation1] sm:%s3] %v4
    %v6 = vld [vmem:[#allocation1] sm:$0x1]
    %vm7 = vcmask 64512
    %8 = vst.msk [vmem:[#allocation0] sm:$0x1] %vm7, %v6
    %s9 = scalar_lea.vmem [#allocation1], 1
    %v10 = vld [vmem:[%s9] sm:$0x1]
    %11 = vrot.lane.b32.xlu0 %v10, 8
    %v12 = vpop.permute.xlu0 %11
    %vm13 = vcmask 130112
    %14 = vst.msk [vmem:[#allocation0] sm:$0x1] %vm13, %v12
    %s16 = sshllo.u32 0, 1
    %v18 = vld [vmem:[#allocation0] sm:%s16]
    %s19 = sshllo.u32 0, 1
    %20 = vst [vmem:[%s1] sm:%s19] %v18

// kernel: masked_lm_forward.1
$region0: #{masked_lm_forward.1}
  #allocation0 [shape = 'u32[]', space=smem, size = 0x4, offset = 0x4, fixed_abs, tag = 'smem constant byte address 0x4 - core index']
  #allocation1 [shape = 'u32[144,128]{1,0:T(1,128)}', space=vmem, size = 0x12000, scoped, tag = 'internal scratch']
  %s0 = inlined_call_operand.vmem [shape: s32[16,1], index: 0, kind: input, shape index: {}]
  %s1 = inlined_call_operand.vmem [shape: f32[16,16], index: 1, kind: input, shape index: {}]
  %s2 = inlined_call_operand.hbm [shape: bf16[2,160,128], index: 2, kind: input, shape index: {}]
  %s3 = inlined_call_operand.vmem [shape: f32[2,8,128], index: 3, kind: input, shape index: {}]
  %s4 = inlined_call_operand.hbm [shape: bf16[192,128], index: 4, kind: input, shape index: {}]
  %s5 = inlined_call_operand.vmem [shape: f32[24,128], index: 5, kind: input, shape index: {}]
  %s6 = inlined_call_operand.hbm [shape: f32[16,128], index: 6, kind: output, shape index: {}]
  %s7 = sld [smem:[#allocation0]]
  $region42: #{masked_lm_forward.1} parent=0
    _
  %s9 = ssub.s32 1, %s7
  %s10 = scalar_select 0, %s9, %s7
  $region1: #{masked_lm_forward.1} parent=0
    #allocation2 [shape = 'u8[81920]{0}', space=vmem, size = 0x14000, scoped, tag = 'input window, operand 2, single buffered']
    #allocation3 [shape = 's32[1]{0}', space=sflag, size = 0x4, scoped, tag = 'scoped memory for masked_lm_forward.1']
    #allocation4 [shape = 's32[1]{0}', space=sflag, size = 0x4, scoped, tag = 'scoped memory for masked_lm_forward.1']
    #allocation5 [shape = 'u8[49152]{0}', space=vmem, size = 0xc000, scoped, tag = 'input window, operand 4, single buffered']
    #allocation6 [shape = 's32[1]{0}', space=sflag, size = 0x4, scoped, tag = 'scoped memory for masked_lm_forward.1']
    #allocation7 [shape = 'u8[8192]{0}', space=vmem, size = 0x2000, scoped, tag = 'output window, operand 0, single buffered']
    %11 = vsyncpa [#allocation3], 0
    %12 = vsyncpa [#allocation6], 0
    %13 = vsyncpa [#allocation4], 0
    // Predicated region
    $region2: #{masked_lm_forward.1} parent=1 // pred_check
      _
    $region3: #{masked_lm_forward.1} parent=1 // pred_check_branch
      %15 = sbr.rel (0) target = $region5
    $region4: #{masked_lm_forward.1} parent=1 // pred_region
      _
    $region5: #{masked_lm_forward.1} parent=1 // pred_fallthru
      _
    // Predicated region
    $region6: #{masked_lm_forward.1} parent=1 // pred_check
      _
    $region7: #{masked_lm_forward.1} parent=1 // pred_check_branch
      %17 = sbr.rel (0) target = $region9
    $region8: #{masked_lm_forward.1} parent=1 // pred_region
      _
    $region9: #{masked_lm_forward.1} parent=1 // pred_fallthru
      _
    // Predicated region
    $region10: #{masked_lm_forward.1} parent=1 // pred_check
      _
    $region11: #{masked_lm_forward.1} parent=1 // pred_check_branch
      %19 = sbr.rel (0) target = $region13
    $region12: #{masked_lm_forward.1} parent=1 // pred_region
      %s21 = ssub.s32 2560, 2560
      %22 = vsyncadd [#allocation3], %s21
      %s23 = sshll.u32 [#allocation2], 4
      %s24 = int_to_ptr.vmem [resolvable:$true] %s23
      %29 = dma.hbm_to_vmem [thread:$0]  %s2, 2560, %s24, [#allocation3], 64, 64, 4
    $region13: #{masked_lm_forward.1} parent=1 // pred_fallthru
      _
    // Predicated region
    $region14: #{masked_lm_forward.1} parent=1 // pred_check
      _
    $region15: #{masked_lm_forward.1} parent=1 // pred_check_branch
      %31 = sbr.rel (0) target = $region17
    $region16: #{masked_lm_forward.1} parent=1 // pred_region
      _
    $region17: #{masked_lm_forward.1} parent=1 // pred_fallthru
      _
    // Predicated region
    $region18: #{masked_lm_forward.1} parent=1 // pred_check
      _
    $region19: #{masked_lm_forward.1} parent=1 // pred_check_branch
      %33 = sbr.rel (0) target = $region21
    $region20: #{masked_lm_forward.1} parent=1 // pred_region
      %s35 = ssub.s32 1536, 1536
      %36 = vsyncadd [#allocation6], %s35
      %s37 = sshll.u32 [#allocation5], 4
      %s38 = int_to_ptr.vmem [resolvable:$true] %s37
      %43 = dma.hbm_to_vmem [thread:$0]  %s4, 1536, %s38, [#allocation6], 64, 64, 4
    $region21: #{masked_lm_forward.1} parent=1 // pred_fallthru
      _
    // Predicated region
    $region22: #{masked_lm_forward.1} parent=1 // pred_check
      _
    $region23: #{masked_lm_forward.1} parent=1 // pred_check_branch
      %45 = sbr.rel (0) target = $region25
    $region24: #{masked_lm_forward.1} parent=1 // pred_region
      _
    $region25: #{masked_lm_forward.1} parent=1 // pred_fallthru
      _
    // Predicated region
    $region26: #{masked_lm_forward.1} parent=1 // pred_check
      _
    $region27: #{masked_lm_forward.1} parent=1 // pred_check_branch
      %47 = sbr.rel (0) target = $region29
    $region28: #{masked_lm_forward.1} parent=1 // pred_region
      %48 = dma.done [#allocation3], 2560
    $region29: #{masked_lm_forward.1} parent=1 // pred_fallthru
      _
    // Predicated region
    $region30: #{masked_lm_forward.1} parent=1 // pred_check
      _
    $region31: #{masked_lm_forward.1} parent=1 // pred_check_branch
      %50 = sbr.rel (0) target = $region33
    $region32: #{masked_lm_forward.1} parent=1 // pred_region
      %51 = dma.done [#allocation6], 1536
    $region33: #{masked_lm_forward.1} parent=1 // pred_fallthru
      _
    %v53 = vld [vmem:[%s0] sm:$0xff]
    %v54 = vld [vmem:[%s0 + $0x8] sm:$0xff]
    %v55 = vlaneseq
    %v56 = vand.u32 %v55, 127
    %57 = vset.pattern.permute.xlu0 0
    %58 = vperm.xlu0 %57, %v53
    %v59 = vpop.permute.xlu0 %58
    %60 = vset.pattern.permute.xlu0 0
    %61 = vperm.xlu0 %60, %v54
    %v62 = vpop.permute.xlu0 %61
    %vm63 = vcmp.eq.s32.totalorder %v59, %v56
    %vm64 = vcmp.eq.s32.totalorder %v62, %v56
    %v65 = vsel %vm63, 1, 0
    %v66 = vsel %vm64, 1, 0
    %v67 = vcvt.s32.f32 %v65
    %v68 = vcvt.s32.f32 %v66
    %v69 = vpack.c.bf16 %v68, %v67
    %v70 = vld [vmem:[#allocation5] sm:$0xf]
    %v71 = vld [vmem:[#allocation5 + $0x4] sm:$0xf]
    %v72 = vld [vmem:[#allocation5 + $0x8] sm:$0xf]
    %v73 = vld [vmem:[#allocation5 + $0xc] sm:$0xf]
    %v74 = vld [vmem:[#allocation5 + $0x10] sm:$0xf]
    %v75 = vld [vmem:[#allocation5 + $0x14] sm:$0xf]
    %v76 = vld [vmem:[#allocation5 + $0x18] sm:$0xf]
    %v77 = vld [vmem:[#allocation5 + $0x1c] sm:$0xf]
    %v78 = vld [vmem:[#allocation5 + $0x20] sm:$0xf]
    %v79 = vld [vmem:[#allocation5 + $0x24] sm:$0xf]
    %v80 = vld [vmem:[#allocation5 + $0x28] sm:$0xf]
    %v81 = vld [vmem:[#allocation5 + $0x2c] sm:$0xf]
    %v82 = vld [vmem:[#allocation5 + $0x30] sm:$0xf]
    %v83 = vld [vmem:[#allocation5 + $0x34] sm:$0xf]
    %v84 = vld [vmem:[#allocation5 + $0x38] sm:$0xf]
    %v85 = vld [vmem:[#allocation5 + $0x3c] sm:$0xf]
    %v86 = vld [vmem:[%s5] sm:$0xff]
    %v87 = vld [vmem:[%s5 + $0x8] sm:$0xff]
    %v104 = vunpack.c.l.b16 %v70
    %v105 = vunpack.c.l.b16 %v71
    %v106 = vunpack.c.l.b16 %v72
    %v107 = vunpack.c.l.b16 %v73
    %v108 = vunpack.c.l.b16 %v74
    %v109 = vunpack.c.l.b16 %v75
    %v110 = vunpack.c.l.b16 %v76
    %v111 = vunpack.c.l.b16 %v77
    %v112 = vunpack.c.l.b16 %v78
    %v113 = vunpack.c.l.b16 %v79
    %v114 = vunpack.c.l.b16 %v80
    %v115 = vunpack.c.l.b16 %v81
    %v116 = vunpack.c.l.b16 %v82
    %v117 = vunpack.c.l.b16 %v83
    %v118 = vunpack.c.l.b16 %v84
    %v119 = vunpack.c.l.b16 %v85
    %v120 = vpack.c.b16 %v105, %v104
    %v121 = vpack.c.b16 %v107, %v106
    %v122 = vpack.c.b16 %v109, %v108
    %v123 = vpack.c.b16 %v111, %v110
    %v124 = vpack.c.b16 %v113, %v112
    %v125 = vpack.c.b16 %v115, %v114
    %v126 = vpack.c.b16 %v117, %v116
    %v127 = vpack.c.b16 %v119, %v118
    %136 = vmatprep.subr.bf16.mxu0 0
    %137 = vmatpush1.bf16.msra.mxu0 %v120
    %138 = vmatprep.subr.bf16.mxu0 0
    %139 = vmatpush1.bf16.msra.mxu0 %v121
    %140 = vmatprep.subr.bf16.mxu0 0
    %141 = vmatpush1.bf16.msra.mxu0 %v122
    %142 = vmatprep.subr.bf16.mxu0 0
    %143 = vmatpush1.bf16.msra.mxu0 %v123
    %144 = vmatprep.subr.bf16.mxu0 0
    %145 = vmatpush1.bf16.msra.mxu0 %v124
    %146 = vmatprep.subr.bf16.mxu0 0
    %147 = vmatpush1.bf16.msra.mxu0 %v125
    %148 = vmatprep.subr.bf16.mxu0 0
    %149 = vmatpush1.bf16.msra.mxu0 %v126
    %150 = vmatprep.subr.bf16.mxu0 0
    %151 = vmatpush1.bf16.msra.mxu0 %v127
    %152 = vmatprep.subr.bf16.mxu0 0
    %153 = vmatpush1.bf16.msra.mxu0 0
    %154 = vmatprep.subr.bf16.mxu0 0
    %155 = vmatpush1.bf16.msra.mxu0 0
    %156 = vmatprep.subr.bf16.mxu0 0
    %157 = vmatpush1.bf16.msra.mxu0 0
    %158 = vmatprep.subr.bf16.mxu0 0
    %159 = vmatpush1.bf16.msra.mxu0 0
    %160 = vmatprep.subr.bf16.mxu0 0
    %161 = vmatpush1.bf16.msra.mxu0 0
    %162 = vmatprep.subr.bf16.mxu0 0
    %163 = vmatpush1.bf16.msra.mxu0 0
    %164 = vmatprep.subr.bf16.mxu0 0
    %165 = vmatpush1.bf16.msra.mxu0 0
    %166 = vmatprep.subr.bf16.mxu0 0
    %167 = vmatpush1.bf16.msra.mxu0 0
    %168 = vmatprep.mubr.bf16.mxu0 0
    %169 = vmatmul.mubr.bf16.gmra.mrb[0].mxu0 %v69
    %v170 = vpop.f32.mrb[0].mxu0
    %v171 = vadd.f32 %v86, %v170
    %v172 = vpop.f32.mrb[0].mxu0
    %v173 = vpop.f32.mrb[0].mxu0
    %v174 = vadd.f32 %v87, %v173
    %v175 = vpop.f32.mrb[0].mxu0
    %176 = vdwg.mxu0
    %v177 = vld [vmem:[%s5 + $0x10] sm:$0x1]
    %v178 = vld [vmem:[%s5 + $0x11] sm:$0x1]
    %vm179 = vcmask 261120
    %v180 = vsel %vm179, %v171, 0.0
    %181 = vadd.xlane.f32.xlu0 %v180
    %v182 = vpop.xlane.xlu0 %181
    %v183 = vsel %vm179, %v174, 0.0
    %184 = vadd.xlane.f32.xlu0 %v183
    %v185 = vpop.xlane.xlu0 %184
    %v186 = vrcp.pop 32.0
    %v187 = vmul.f32 %v182, %v186
    %v188 = vmul.f32 %v185, %v186
    %v189 = vsub.f32 %v171, %v187
    %v190 = vsub.f32 %v174, %v188
    %v191 = vmul.f32 %v189, %v189
    %v192 = vmul.f32 %v190, %v190
    %v193 = vsel %vm179, %v191, 0.0
    %194 = vadd.xlane.f32.xlu0 %v193
    %v195 = vpop.xlane.xlu0 %194
    %v196 = vsel %vm179, %v192, 0.0
    %197 = vadd.xlane.f32.xlu0 %v196
    %v198 = vpop.xlane.xlu0 %197
    %v199 = vmul.f32 %v195, %v186
    %v200 = vmul.f32 %v198, %v186
    %v201 = vadd.f32 %v199, 1e-12
    %v202 = vadd.f32 %v200, 1e-12
    %v203 = vrsqrt.pop %v201
    %v204 = vrsqrt.pop %v202
    %v205 = vmul.f32 %v189, %v203
    %v206 = vmul.f32 %v190, %v204
    %v207 = vlaneseq
    %v208 = vshrl.u32 %v207, 7
    %v209 = vsub.s32 0, %v208
    %v210 = vrot.slane %v177, %v209
    %v211 = vmul.f32 %v205, %v210
    %v212 = vmul.f32 %v206, %v210
    %v213 = vlaneseq
    %v214 = vshrl.u32 %v213, 7
    %v215 = vsub.s32 0, %v214
    %v216 = vrot.slane %v178, %v215
    %v217 = vadd.f32 %v211, %v216
    %v218 = vadd.f32 %v212, %v216
    %v219 = vld [vmem:[%s1] sm:$0xff]
    %v220 = vld [vmem:[%s1 + $0x8] sm:$0xff]
    %v221 = vld [vmem:[#allocation2] sm:$0xf]
    %v222 = vld [vmem:[#allocation2 + $0x4] sm:$0xf]
    %v223 = vld [vmem:[#allocation2 + $0x8] sm:$0xf]
    %v224 = vld [vmem:[#allocation2 + $0xc] sm:$0xf]
    %v225 = vld [vmem:[#allocation2 + $0x10] sm:$0xf]
    %v226 = vld [vmem:[#allocation2 + $0x14] sm:$0xf]
    %v227 = vld [vmem:[#allocation2 + $0x18] sm:$0xf]
    %v228 = vld [vmem:[#allocation2 + $0x1c] sm:$0xf]
    %v229 = vld [vmem:[#allocation2 + $0x20] sm:$0xf]
    %v230 = vld [vmem:[#allocation2 + $0x24] sm:$0xf]
    %v231 = vld [vmem:[#allocation2 + $0x28] sm:$0xf]
    %v232 = vld [vmem:[#allocation2 + $0x2c] sm:$0xf]
    %v233 = vld [vmem:[#allocation2 + $0x30] sm:$0xf]
    %v234 = vld [vmem:[#allocation2 + $0x34] sm:$0xf]
    %v235 = vld [vmem:[#allocation2 + $0x38] sm:$0xf]
    %v236 = vld [vmem:[#allocation2 + $0x3c] sm:$0xf]
    %v237 = vld [vmem:[#allocation2 + $0x40] sm:$0xf]
    %v238 = vld [vmem:[#allocation2 + $0x44] sm:$0xf]
    %v239 = vld [vmem:[#allocation2 + $0x48] sm:$0xf]
    %v240 = vld [vmem:[#allocation2 + $0x4c] sm:$0xf]
    %v241 = vpack.c.bf16 %v218, %v217
    %v242 = vld [vmem:[%s3] sm:$0x1]
    %v243 = vlaneseq
    %v244 = vshrl.u32 %v243, 7
    %v245 = vsub.s32 0, %v244
    %v246 = vrot.slane %v242, %v245
    %v251 = vunpack.c.l.b16 %v221
    %v252 = vunpack.c.l.b16 %v222
    %v253 = vunpack.c.l.b16 %v223
    %v254 = vunpack.c.l.b16 %v224
    %v255 = vpack.c.b16 %v252, %v251
    %v256 = vpack.c.b16 %v254, %v253
    %v260 = vsel %vm179, %v241, 0
    %262 = vmatprep.subr.bf16.mxu0 0
    %263 = vmatpush1.bf16.msra.mxu0 %v255
    %264 = vmatprep.subr.bf16.mxu0 0
    %265 = vmatpush1.bf16.msra.mxu0 %v256
    %266 = vmatprep.subr.bf16.mxu0 0
    %267 = vmatpush1.bf16.msra.mxu0 0
    %268 = vmatprep.subr.bf16.mxu0 0
    %269 = vmatpush1.bf16.msra.mxu0 0
    %270 = vmatprep.subr.bf16.mxu0 0
    %271 = vmatpush1.bf16.msra.mxu0 0
    %272 = vmatprep.subr.bf16.mxu0 0
    %273 = vmatpush1.bf16.msra.mxu0 0
    %274 = vmatprep.subr.bf16.mxu0 0
    %275 = vmatpush1.bf16.msra.mxu0 0
    %276 = vmatprep.subr.bf16.mxu0 0
    %277 = vmatpush1.bf16.msra.mxu0 0
    %278 = vmatprep.subr.bf16.mxu0 0
    %279 = vmatpush1.bf16.msra.mxu0 0
    %280 = vmatprep.subr.bf16.mxu0 0
    %281 = vmatpush1.bf16.msra.mxu0 0
    %282 = vmatprep.subr.bf16.mxu0 0
    %283 = vmatpush1.bf16.msra.mxu0 0
    %284 = vmatprep.subr.bf16.mxu0 0
    %285 = vmatpush1.bf16.msra.mxu0 0
    %286 = vmatprep.subr.bf16.mxu0 0
    %287 = vmatpush1.bf16.msra.mxu0 0
    %288 = vmatprep.subr.bf16.mxu0 0
    %289 = vmatpush1.bf16.msra.mxu0 0
    %290 = vmatprep.subr.bf16.mxu0 0
    %291 = vmatpush1.bf16.msra.mxu0 0
    %292 = vmatprep.subr.bf16.mxu0 0
    %293 = vmatpush1.bf16.msra.mxu0 0
    %294 = vmatprep.mubr.bf16.mxu0 0
    %295 = vmatmul.mubr.bf16.gmra.mrb[0].mxu0 %v260
    %v296 = vpop.f32.mrb[0].mxu0
    %v297 = vadd.f32 %v246, %v296
    %v298 = vpop.f32.mrb[0].mxu0
    %v299 = vpop.f32.mrb[0].mxu0
    %v300 = vadd.f32 %v246, %v299
    %v301 = vpop.f32.mrb[0].mxu0
    %302 = vdwg.mxu0
    %305 = vrot.lane.b32.xlu0 %v297, 96
    %v306 = vpop.permute.xlu0 %305
    %307 = vrot.lane.b32.xlu0 %v300, 96
    %v308 = vpop.permute.xlu0 %307
    %vm309 = vcmask 64512
    %v310 = vsel %vm309, %v297, 0
    %v312 = vsel %vm309, %v300, 0
    %v314 = vsel %vm309, %v306, 0
    %v316 = vsel %vm309, %v308, 0
    %318 = vmatprep.subr.mxu0 0.0
    %319 = vmatpush1.xpose.msra.mxu0 %v314
    %320 = vmatprep.subr.mxu0 0.0
    %321 = vmatpush1.xpose.msra.mxu0 %v316
    %322 = vmatprep.subr.mxu0 0.0
    %323 = vmatpush1.xpose.msra.mxu0 0.0
    %324 = vmatprep.subr.mxu0 0.0
    %325 = vmatpush1.xpose.msra.mxu0 0.0
    %326 = vmatprep.subr.mxu0 0.0
    %327 = vmatpush1.xpose.msra.mxu0 0.0
    %328 = vmatprep.subr.mxu0 0.0
    %329 = vmatpush1.xpose.msra.mxu0 0.0
    %330 = vmatprep.subr.mxu0 0.0
    %331 = vmatpush1.xpose.msra.mxu0 0.0
    %332 = vmatprep.subr.mxu0 0.0
    %333 = vmatpush1.xpose.msra.mxu0 0.0
    %334 = vmatprep.subr.mxu0 0.0
    %335 = vmatpush1.xpose.msra.mxu0 0.0
    %336 = vmatprep.subr.mxu0 0.0
    %337 = vmatpush1.xpose.msra.mxu0 0.0
    %338 = vmatprep.subr.mxu0 0.0
    %339 = vmatpush1.xpose.msra.mxu0 0.0
    %340 = vmatprep.subr.mxu0 0.0
    %341 = vmatpush1.xpose.msra.mxu0 0.0
    %342 = vmatprep.subr.mxu0 0.0
    %343 = vmatpush1.xpose.msra.mxu0 0.0
    %344 = vmatprep.subr.mxu0 0.0
    %345 = vmatpush1.xpose.msra.mxu0 0.0
    %346 = vmatprep.subr.mxu0 0.0
    %347 = vmatpush1.xpose.msra.mxu0 0.0
    %348 = vmatprep.subr.mxu0 0.0
    %349 = vmatpush1.xpose.msra.mxu0 0.0
    %350 = vmatprep.subr.mxu0 0.0
    %351 = vmatpush1.xpose.msra.mxu0 0.0
    %352 = vmatprep.subr.mxu0 0.0
    %353 = vmatpush1.xpose.msra.mxu0 0.0
    %354 = vmatprep.subr.mxu0 0.0
    %355 = vmatpush1.xpose.msra.mxu0 0.0
    %356 = vmatprep.subr.mxu0 0.0
    %357 = vmatpush1.xpose.msra.mxu0 0.0
    %358 = vmatprep.subr.mxu0 0.0
    %359 = vmatpush1.xpose.msra.mxu0 0.0
    %360 = vmatprep.subr.mxu0 0.0
    %361 = vmatpush1.xpose.msra.mxu0 0.0
    %362 = vmatprep.subr.mxu0 0.0
    %363 = vmatpush1.xpose.msra.mxu0 0.0
    %364 = vmatprep.subr.mxu0 0.0
    %365 = vmatpush1.xpose.msra.mxu0 0.0
    %366 = vmatprep.subr.mxu0 0.0
    %367 = vmatpush1.xpose.msra.mxu0 0.0
    %368 = vmatprep.subr.mxu0 0.0
    %369 = vmatpush1.xpose.msra.mxu0 0.0
    %370 = vmatprep.subr.mxu0 0.0
    %371 = vmatpush1.xpose.msra.mxu0 0.0
    %372 = vmatprep.subr.mxu0 0.0
    %373 = vmatpush1.xpose.msra.mxu0 0.0
    %374 = vmatprep.subr.mxu0 0.0
    %375 = vmatpush1.xpose.msra.mxu0 0.0
    %376 = vmatprep.subr.mxu0 0.0
    %377 = vmatpush1.xpose.msra.mxu0 0.0
    %378 = vmatprep.subr.mxu0 0.0
    %379 = vmatpush1.xpose.msra.mxu0 0.0
    %380 = vmatprep.subr.mxu0 0.0
    %381 = vmatpush1.xpose.msra.mxu0 0.0
    %382 = vmatprep.mubr.f32.mxu0 0.0
    %383 = vmatmul.mubr.f32.gmra.mrb[0].mxu0 %v310
    %v384 = vpop.f32.mrb[0].mxu0
    %v385 = vadd.f32 0.0, %v384
    %v386 = vpop.f32.mrb[0].mxu0
    %387 = vmatprep.mubr.f32.mxu0 0.0
    %388 = vmatmul.mubr.f32.gmra.mrb[0].mxu0 %v312
    %v389 = vpop.f32.mrb[0].mxu0
    %v390 = vadd.f32 0.0, %v389
    %v391 = vpop.f32.mrb[0].mxu0
    %392 = vdwg.mxu0
    %v393 = vmul.f32 %v385, 0.35355338
    %v394 = vmul.f32 %v390, 0.35355338
    %v395 = vadd.f32 %v393, %v219
    %v396 = vadd.f32 %v394, %v220
    %vm397 = vcmask 130048
    %v398 = vsel %vm397, %v395, -inf
    %399 = vmax.xlane.f32.xlu0 %v398
    %v400 = vpop.xlane.xlu0 %399
    %v401 = vsel %vm397, %v396, -inf
    %402 = vmax.xlane.f32.xlu0 %v401
    %v403 = vpop.xlane.xlu0 %402
    %v404 = vsub.f32 %v395, %v400
    %v405 = vsub.f32 %v396, %v403
    %v406 = vmul.f32 %v404, 1.442695
    %v407 = vpow.pop %v406
    %v408 = vmul.f32 %v405, 1.442695
    %v409 = vpow.pop %v408
    %v410 = vsel %vm397, %v407, 0.0
    %411 = vadd.xlane.f32.xlu0 %v410
    %v412 = vpop.xlane.xlu0 %411
    %v413 = vsel %vm397, %v409, 0.0
    %414 = vadd.xlane.f32.xlu0 %v413
    %v415 = vpop.xlane.xlu0 %414
    %v416 = vrcp.pop %v412
    %v417 = vrcp.pop %v415
    %v418 = vmul.f32 %v407, %v416
    %v419 = vmul.f32 %v409, %v417
    %420 = vrot.lane.b32.xlu0 %v297, 64
    %v421 = vpop.permute.xlu0 %420
    %422 = vrot.lane.b32.xlu0 %v300, 64
    %v423 = vpop.permute.xlu0 %422
    %v427 = vsel %vm397, %v418, 0
    %v430 = vsel %vm397, %v419, 0
    %432 = vmatprep.subr.mxu0 0.0
    %433 = vmatpush1.msra.mxu0 %v421
    %434 = vmatprep.subr.mxu0 0.0
    %435 = vmatpush1.msra.mxu0 %v423
    %436 = vmatprep.subr.mxu0 0.0
    %437 = vmatpush1.msra.mxu0 0.0
    %438 = vmatprep.subr.mxu0 0.0
    %439 = vmatpush1.msra.mxu0 0.0
    %440 = vmatprep.subr.mxu0 0.0
    %441 = vmatpush1.msra.mxu0 0.0
    %442 = vmatprep.subr.mxu0 0.0
    %443 = vmatpush1.msra.mxu0 0.0
    %444 = vmatprep.subr.mxu0 0.0
    %445 = vmatpush1.msra.mxu0 0.0
    %446 = vmatprep.subr.mxu0 0.0
    %447 = vmatpush1.msra.mxu0 0.0
    %448 = vmatprep.subr.mxu0 0.0
    %449 = vmatpush1.msra.mxu0 0.0
    %450 = vmatprep.subr.mxu0 0.0
    %451 = vmatpush1.msra.mxu0 0.0
    %452 = vmatprep.subr.mxu0 0.0
    %453 = vmatpush1.msra.mxu0 0.0
    %454 = vmatprep.subr.mxu0 0.0
    %455 = vmatpush1.msra.mxu0 0.0
    %456 = vmatprep.subr.mxu0 0.0
    %457 = vmatpush1.msra.mxu0 0.0
    %458 = vmatprep.subr.mxu0 0.0
    %459 = vmatpush1.msra.mxu0 0.0
    %460 = vmatprep.subr.mxu0 0.0
    %461 = vmatpush1.msra.mxu0 0.0
    %462 = vmatprep.subr.mxu0 0.0
    %463 = vmatpush1.msra.mxu0 0.0
    %464 = vmatprep.subr.mxu0 0.0
    %465 = vmatpush1.msra.mxu0 0.0
    %466 = vmatprep.subr.mxu0 0.0
    %467 = vmatpush1.msra.mxu0 0.0
    %468 = vmatprep.subr.mxu0 0.0
    %469 = vmatpush1.msra.mxu0 0.0
    %470 = vmatprep.subr.mxu0 0.0
    %471 = vmatpush1.msra.mxu0 0.0
    %472 = vmatprep.subr.mxu0 0.0
    %473 = vmatpush1.msra.mxu0 0.0
    %474 = vmatprep.subr.mxu0 0.0
    %475 = vmatpush1.msra.mxu0 0.0
    %476 = vmatprep.subr.mxu0 0.0
    %477 = vmatpush1.msra.mxu0 0.0
    %478 = vmatprep.subr.mxu0 0.0
    %479 = vmatpush1.msra.mxu0 0.0
    %480 = vmatprep.subr.mxu0 0.0
    %481 = vmatpush1.msra.mxu0 0.0
    %482 = vmatprep.subr.mxu0 0.0
    %483 = vmatpush1.msra.mxu0 0.0
    %484 = vmatprep.subr.mxu0 0.0
    %485 = vmatpush1.msra.mxu0 0.0
    %486 = vmatprep.subr.mxu0 0.0
    %487 = vmatpush1.msra.mxu0 0.0
    %488 = vmatprep.subr.mxu0 0.0
    %489 = vmatpush1.msra.mxu0 0.0
    %490 = vmatprep.subr.mxu0 0.0
    %491 = vmatpush1.msra.mxu0 0.0
    %492 = vmatprep.subr.mxu0 0.0
    %493 = vmatpush1.msra.mxu0 0.0
    %494 = vmatprep.subr.mxu0 0.0
    %495 = vmatpush1.msra.mxu0 0.0
    %496 = vmatprep.mubr.f32.mxu0 0.0
    %497 = vmatmul.mubr.f32.gmra.mrb[0].mxu0 %v427
    %v498 = vpop.f32.mrb[0].mxu0
    %v499 = vadd.f32 0.0, %v498
    %v500 = vpop.f32.mrb[0].mxu0
    %501 = vmatprep.mubr.f32.mxu0 0.0
    %502 = vmatmul.mubr.f32.gmra.mrb[0].mxu0 %v430
    %v503 = vpop.f32.mrb[0].mxu0
    %v504 = vadd.f32 0.0, %v503
    %v505 = vpop.f32.mrb[0].mxu0
    %506 = vdwg.mxu0
    %507 = vrot.lane.b32.xlu0 %v297, 120
    %v508 = vpop.permute.xlu0 %507
    %509 = vrot.lane.b32.xlu0 %v300, 120
    %v510 = vpop.permute.xlu0 %509
    %511 = vrot.lane.b32.xlu0 %v297, 88
    %v512 = vpop.permute.xlu0 %511
    %513 = vrot.lane.b32.xlu0 %v300, 88
    %v514 = vpop.permute.xlu0 %513
    %v515 = vsel %vm309, %v508, 0
    %v517 = vsel %vm309, %v510, 0
    %v519 = vsel %vm309, %v512, 0
    %v521 = vsel %vm309, %v514, 0
    %523 = vmatprep.subr.mxu0 0.0
    %524 = vmatpush1.xpose.msra.mxu0 %v519
    %525 = vmatprep.subr.mxu0 0.0
    %526 = vmatpush1.xpose.msra.mxu0 %v521
    %527 = vmatprep.subr.mxu0 0.0
    %528 = vmatpush1.xpose.msra.mxu0 0.0
    %529 = vmatprep.subr.mxu0 0.0
    %530 = vmatpush1.xpose.msra.mxu0 0.0
    %531 = vmatprep.subr.mxu0 0.0
    %532 = vmatpush1.xpose.msra.mxu0 0.0
    %533 = vmatprep.subr.mxu0 0.0
    %534 = vmatpush1.xpose.msra.mxu0 0.0
    %535 = vmatprep.subr.mxu0 0.0
    %536 = vmatpush1.xpose.msra.mxu0 0.0
    %537 = vmatprep.subr.mxu0 0.0
    %538 = vmatpush1.xpose.msra.mxu0 0.0
    %539 = vmatprep.subr.mxu0 0.0
    %540 = vmatpush1.xpose.msra.mxu0 0.0
    %541 = vmatprep.subr.mxu0 0.0
    %542 = vmatpush1.xpose.msra.mxu0 0.0
    %543 = vmatprep.subr.mxu0 0.0
    %544 = vmatpush1.xpose.msra.mxu0 0.0
    %545 = vmatprep.subr.mxu0 0.0
    %546 = vmatpush1.xpose.msra.mxu0 0.0
    %547 = vmatprep.subr.mxu0 0.0
    %548 = vmatpush1.xpose.msra.mxu0 0.0
    %549 = vmatprep.subr.mxu0 0.0
    %550 = vmatpush1.xpose.msra.mxu0 0.0
    %551 = vmatprep.subr.mxu0 0.0
    %552 = vmatpush1.xpose.msra.mxu0 0.0
    %553 = vmatprep.subr.mxu0 0.0
    %554 = vmatpush1.xpose.msra.mxu0 0.0
    %555 = vmatprep.subr.mxu0 0.0
    %556 = vmatpush1.xpose.msra.mxu0 0.0
    %557 = vmatprep.subr.mxu0 0.0
    %558 = vmatpush1.xpose.msra.mxu0 0.0
    %559 = vmatprep.subr.mxu0 0.0
    %560 = vmatpush1.xpose.msra.mxu0 0.0
    %561 = vmatprep.subr.mxu0 0.0
    %562 = vmatpush1.xpose.msra.mxu0 0.0
    %563 = vmatprep.subr.mxu0 0.0
    %564 = vmatpush1.xpose.msra.mxu0 0.0
    %565 = vmatprep.subr.mxu0 0.0
    %566 = vmatpush1.xpose.msra.mxu0 0.0
    %567 = vmatprep.subr.mxu0 0.0
    %568 = vmatpush1.xpose.msra.mxu0 0.0
    %569 = vmatprep.subr.mxu0 0.0
    %570 = vmatpush1.xpose.msra.mxu0 0.0
    %571 = vmatprep.subr.mxu0 0.0
    %572 = vmatpush1.xpose.msra.mxu0 0.0
    %573 = vmatprep.subr.mxu0 0.0
    %574 = vmatpush1.xpose.msra.mxu0 0.0
    %575 = vmatprep.subr.mxu0 0.0
    %576 = vmatpush1.xpose.msra.mxu0 0.0
    %577 = vmatprep.subr.mxu0 0.0
    %578 = vmatpush1.xpose.msra.mxu0 0.0
    %579 = vmatprep.subr.mxu0 0.0
    %580 = vmatpush1.xpose.msra.mxu0 0.0
    %581 = vmatprep.subr.mxu0 0.0
    %582 = vmatpush1.xpose.msra.mxu0 0.0
    %583 = vmatprep.subr.mxu0 0.0
    %584 = vmatpush1.xpose.msra.mxu0 0.0
    %585 = vmatprep.subr.mxu0 0.0
    %586 = vmatpush1.xpose.msra.mxu0 0.0
    %587 = vmatprep.mubr.f32.mxu0 0.0
    %588 = vmatmul.mubr.f32.gmra.mrb[0].mxu0 %v515
    %v589 = vpop.f32.mrb[0].mxu0
    %v590 = vadd.f32 0.0, %v589
    %v591 = vpop.f32.mrb[0].mxu0
    %592 = vmatprep.mubr.f32.mxu0 0.0
    %593 = vmatmul.mubr.f32.gmra.mrb[0].mxu0 %v517
    %v594 = vpop.f32.mrb[0].mxu0
    %v595 = vadd.f32 0.0, %v594
    %v596 = vpop.f32.mrb[0].mxu0
    %597 = vdwg.mxu0
    %v598 = vmul.f32 %v590, 0.35355338
    %v599 = vmul.f32 %v595, 0.35355338
    %v600 = vadd.f32 %v598, %v219
    %v601 = vadd.f32 %v599, %v220
    %v602 = vsel %vm397, %v600, -inf
    %603 = vmax.xlane.f32.xlu0 %v602
    %v604 = vpop.xlane.xlu0 %603
    %v605 = vsel %vm397, %v601, -inf
    %606 = vmax.xlane.f32.xlu0 %v605
    %v607 = vpop.xlane.xlu0 %606
    %v608 = vsub.f32 %v600, %v604
    %v609 = vsub.f32 %v601, %v607
    %v610 = vmul.f32 %v608, 1.442695
    %v611 = vpow.pop %v610
    %v612 = vmul.f32 %v609, 1.442695
    %v613 = vpow.pop %v612
    %v614 = vsel %vm397, %v611, 0.0
    %615 = vadd.xlane.f32.xlu0 %v614
    %v616 = vpop.xlane.xlu0 %615
    %v617 = vsel %vm397, %v613, 0.0
    %618 = vadd.xlane.f32.xlu0 %v617
    %v619 = vpop.xlane.xlu0 %618
    %v620 = vrcp.pop %v616
    %v621 = vrcp.pop %v619
    %v622 = vmul.f32 %v611, %v620
    %v623 = vmul.f32 %v613, %v621
    %624 = vrot.lane.b32.xlu0 %v297, 56
    %v625 = vpop.permute.xlu0 %624
    %626 = vrot.lane.b32.xlu0 %v300, 56
    %v627 = vpop.permute.xlu0 %626
    %v631 = vsel %vm397, %v622, 0
    %v634 = vsel %vm397, %v623, 0
    %636 = vmatprep.subr.mxu0 0.0
    %637 = vmatpush1.msra.mxu0 %v625
    %638 = vmatprep.subr.mxu0 0.0
    %639 = vmatpush1.msra.mxu0 %v627
    %640 = vmatprep.subr.mxu0 0.0
    %641 = vmatpush1.msra.mxu0 0.0
    %642 = vmatprep.subr.mxu0 0.0
    %643 = vmatpush1.msra.mxu0 0.0
    %644 = vmatprep.subr.mxu0 0.0
    %645 = vmatpush1.msra.mxu0 0.0
    %646 = vmatprep.subr.mxu0 0.0
    %647 = vmatpush1.msra.mxu0 0.0
    %648 = vmatprep.subr.mxu0 0.0
    %649 = vmatpush1.msra.mxu0 0.0
    %650 = vmatprep.subr.mxu0 0.0
    %651 = vmatpush1.msra.mxu0 0.0
    %652 = vmatprep.subr.mxu0 0.0
    %653 = vmatpush1.msra.mxu0 0.0
    %654 = vmatprep.subr.mxu0 0.0
    %655 = vmatpush1.msra.mxu0 0.0
    %656 = vmatprep.subr.mxu0 0.0
    %657 = vmatpush1.msra.mxu0 0.0
    %658 = vmatprep.subr.mxu0 0.0
    %659 = vmatpush1.msra.mxu0 0.0
    %660 = vmatprep.subr.mxu0 0.0
    %661 = vmatpush1.msra.mxu0 0.0
    %662 = vmatprep.subr.mxu0 0.0
    %663 = vmatpush1.msra.mxu0 0.0
    %664 = vmatprep.subr.mxu0 0.0
    %665 = vmatpush1.msra.mxu0 0.0
    %666 = vmatprep.subr.mxu0 0.0
    %667 = vmatpush1.msra.mxu0 0.0
    %668 = vmatprep.subr.mxu0 0.0
    %669 = vmatpush1.msra.mxu0 0.0
    %670 = vmatprep.subr.mxu0 0.0
    %671 = vmatpush1.msra.mxu0 0.0
    %672 = vmatprep.subr.mxu0 0.0
    %673 = vmatpush1.msra.mxu0 0.0
    %674 = vmatprep.subr.mxu0 0.0
    %675 = vmatpush1.msra.mxu0 0.0
    %676 = vmatprep.subr.mxu0 0.0
    %677 = vmatpush1.msra.mxu0 0.0
    %678 = vmatprep.subr.mxu0 0.0
    %679 = vmatpush1.msra.mxu0 0.0
    %680 = vmatprep.subr.mxu0 0.0
    %681 = vmatpush1.msra.mxu0 0.0
    %682 = vmatprep.subr.mxu0 0.0
    %683 = vmatpush1.msra.mxu0 0.0
    %684 = vmatprep.subr.mxu0 0.0
    %685 = vmatpush1.msra.mxu0 0.0
    %686 = vmatprep.subr.mxu0 0.0
    %687 = vmatpush1.msra.mxu0 0.0
    %688 = vmatprep.subr.mxu0 0.0
    %689 = vmatpush1.msra.mxu0 0.0
    %690 = vmatprep.subr.mxu0 0.0
    %691 = vmatpush1.msra.mxu0 0.0
    %692 = vmatprep.subr.mxu0 0.0
    %693 = vmatpush1.msra.mxu0 0.0
    %694 = vmatprep.subr.mxu0 0.0
    %695 = vmatpush1.msra.mxu0 0.0
    %696 = vmatprep.subr.mxu0 0.0
    %697 = vmatpush1.msra.mxu0 0.0
    %698 = vmatprep.subr.mxu0 0.0
    %699 = vmatpush1.msra.mxu0 0.0
    %700 = vmatprep.mubr.f32.mxu0 0.0
    %701 = vmatmul.mubr.f32.gmra.mrb[0].mxu0 %v631
    %v702 = vpop.f32.mrb[0].mxu0
    %v703 = vadd.f32 0.0, %v702
    %v704 = vpop.f32.mrb[0].mxu0
    %705 = vmatprep.mubr.f32.mxu0 0.0
    %706 = vmatmul.mubr.f32.gmra.mrb[0].mxu0 %v634
    %v707 = vpop.f32.mrb[0].mxu0
    %v708 = vadd.f32 0.0, %v707
    %v709 = vpop.f32.mrb[0].mxu0
    %710 = vdwg.mxu0
    %711 = vrot.lane.b32.xlu0 %v297, 112
    %v712 = vpop.permute.xlu0 %711
    %713 = vrot.lane.b32.xlu0 %v300, 112
    %v714 = vpop.permute.xlu0 %713
    %715 = vrot.lane.b32.xlu0 %v297, 80
    %v716 = vpop.permute.xlu0 %715
    %717 = vrot.lane.b32.xlu0 %v300, 80
    %v718 = vpop.permute.xlu0 %717
    %v719 = vsel %vm309, %v712, 0
    %v721 = vsel %vm309, %v714, 0
    %v723 = vsel %vm309, %v716, 0
    %v725 = vsel %vm309, %v718, 0
    %727 = vmatprep.subr.mxu0 0.0
    %728 = vmatpush1.xpose.msra.mxu0 %v723
    %729 = vmatprep.subr.mxu0 0.0
    %730 = vmatpush1.xpose.msra.mxu0 %v725
    %731 = vmatprep.subr.mxu0 0.0
    %732 = vmatpush1.xpose.msra.mxu0 0.0
    %733 = vmatprep.subr.mxu0 0.0
    %734 = vmatpush1.xpose.msra.mxu0 0.0
    %735 = vmatprep.subr.mxu0 0.0
    %736 = vmatpush1.xpose.msra.mxu0 0.0
    %737 = vmatprep.subr.mxu0 0.0
    %738 = vmatpush1.xpose.msra.mxu0 0.0
    %739 = vmatprep.subr.mxu0 0.0
    %740 = vmatpush1.xpose.msra.mxu0 0.0
    %741 = vmatprep.subr.mxu0 0.0
    %742 = vmatpush1.xpose.msra.mxu0 0.0
    %743 = vmatprep.subr.mxu0 0.0
    %744 = vmatpush1.xpose.msra.mxu0 0.0
    %745 = vmatprep.subr.mxu0 0.0
    %746 = vmatpush1.xpose.msra.mxu0 0.0
    %747 = vmatprep.subr.mxu0 0.0
    %748 = vmatpush1.xpose.msra.mxu0 0.0
    %749 = vmatprep.subr.mxu0 0.0
    %750 = vmatpush1.xpose.msra.mxu0 0.0
    %751 = vmatprep.subr.mxu0 0.0
    %752 = vmatpush1.xpose.msra.mxu0 0.0
    %753 = vmatprep.subr.mxu0 0.0
    %754 = vmatpush1.xpose.msra.mxu0 0.0
    %755 = vmatprep.subr.mxu0 0.0
    %756 = vmatpush1.xpose.msra.mxu0 0.0
    %757 = vmatprep.subr.mxu0 0.0
    %758 = vmatpush1.xpose.msra.mxu0 0.0
    %759 = vmatprep.subr.mxu0 0.0
    %760 = vmatpush1.xpose.msra.mxu0 0.0
    %761 = vmatprep.subr.mxu0 0.0
    %762 = vmatpush1.xpose.msra.mxu0 0.0
    %763 = vmatprep.subr.mxu0 0.0
    %764 = vmatpush1.xpose.msra.mxu0 0.0
    %765 = vmatprep.subr.mxu0 0.0
    %766 = vmatpush1.xpose.msra.mxu0 0.0
    %767 = vmatprep.subr.mxu0 0.0
    %768 = vmatpush1.xpose.msra.mxu0 0.0
    %769 = vmatprep.subr.mxu0 0.0
    %770 = vmatpush1.xpose.msra.mxu0 0.0
    %771 = vmatprep.subr.mxu0 0.0
    %772 = vmatpush1.xpose.msra.mxu0 0.0
    %773 = vmatprep.subr.mxu0 0.0
    %774 = vmatpush1.xpose.msra.mxu0 0.0
    %775 = vmatprep.subr.mxu0 0.0
    %776 = vmatpush1.xpose.msra.mxu0 0.0
    %777 = vmatprep.subr.mxu0 0.0
    %778 = vmatpush1.xpose.msra.mxu0 0.0
    %779 = vmatprep.subr.mxu0 0.0
    %780 = vmatpush1.xpose.msra.mxu0 0.0
    %781 = vmatprep.subr.mxu0 0.0
    %782 = vmatpush1.xpose.msra.mxu0 0.0
    %783 = vmatprep.subr.mxu0 0.0
    %784 = vmatpush1.xpose.msra.mxu0 0.0
    %785 = vmatprep.subr.mxu0 0.0
    %786 = vmatpush1.xpose.msra.mxu0 0.0
    %787 = vmatprep.subr.mxu0 0.0
    %788 = vmatpush1.xpose.msra.mxu0 0.0
    %789 = vmatprep.subr.mxu0 0.0
    %790 = vmatpush1.xpose.msra.mxu0 0.0
    %791 = vmatprep.mubr.f32.mxu0 0.0
    %792 = vmatmul.mubr.f32.gmra.mrb[0].mxu0 %v719
    %v793 = vpop.f32.mrb[0].mxu0
    %v794 = vadd.f32 0.0, %v793
    %v795 = vpop.f32.mrb[0].mxu0
    %796 = vmatprep.mubr.f32.mxu0 0.0
    %797 = vmatmul.mubr.f32.gmra.mrb[0].mxu0 %v721
    %v798 = vpop.f32.mrb[0].mxu0
    %v799 = vadd.f32 0.0, %v798
    %v800 = vpop.f32.mrb[0].mxu0
    %801 = vdwg.mxu0
    %v802 = vmul.f32 %v794, 0.35355338
    %v803 = vmul.f32 %v799, 0.35355338
    %v804 = vadd.f32 %v802, %v219
    %v805 = vadd.f32 %v803, %v220
    %v806 = vsel %vm397, %v804, -inf
    %807 = vmax.xlane.f32.xlu0 %v806
    %v808 = vpop.xlane.xlu0 %807
    %v809 = vsel %vm397, %v805, -inf
    %810 = vmax.xlane.f32.xlu0 %v809
    %v811 = vpop.xlane.xlu0 %810
    %v812 = vsub.f32 %v804, %v808
    %v813 = vsub.f32 %v805, %v811
    %v814 = vmul.f32 %v812, 1.442695
    %v815 = vpow.pop %v814
    %v816 = vmul.f32 %v813, 1.442695
    %v817 = vpow.pop %v816
    %v818 = vsel %vm397, %v815, 0.0
    %819 = vadd.xlane.f32.xlu0 %v818
    %v820 = vpop.xlane.xlu0 %819
    %v821 = vsel %vm397, %v817, 0.0
    %822 = vadd.xlane.f32.xlu0 %v821
    %v823 = vpop.xlane.xlu0 %822
    %v824 = vrcp.pop %v820
    %v825 = vrcp.pop %v823
    %v826 = vmul.f32 %v815, %v824
    %v827 = vmul.f32 %v817, %v825
    %828 = vrot.lane.b32.xlu0 %v297, 48
    %v829 = vpop.permute.xlu0 %828
    %830 = vrot.lane.b32.xlu0 %v300, 48
    %v831 = vpop.permute.xlu0 %830
    %v835 = vsel %vm397, %v826, 0
    %v838 = vsel %vm397, %v827, 0
    %840 = vmatprep.subr.mxu0 0.0
    %841 = vmatpush1.msra.mxu0 %v829
    %842 = vmatprep.subr.mxu0 0.0
    %843 = vmatpush1.msra.mxu0 %v831
    %844 = vmatprep.subr.mxu0 0.0
    %845 = vmatpush1.msra.mxu0 0.0
    %846 = vmatprep.subr.mxu0 0.0
    %847 = vmatpush1.msra.mxu0 0.0
    %848 = vmatprep.subr.mxu0 0.0
    %849 = vmatpush1.msra.mxu0 0.0
    %850 = vmatprep.subr.mxu0 0.0
    %851 = vmatpush1.msra.mxu0 0.0
    %852 = vmatprep.subr.mxu0 0.0
    %853 = vmatpush1.msra.mxu0 0.0
    %854 = vmatprep.subr.mxu0 0.0
    %855 = vmatpush1.msra.mxu0 0.0
    %856 = vmatprep.subr.mxu0 0.0
    %857 = vmatpush1.msra.mxu0 0.0
    %858 = vmatprep.subr.mxu0 0.0
    %859 = vmatpush1.msra.mxu0 0.0
    %860 = vmatprep.subr.mxu0 0.0
    %861 = vmatpush1.msra.mxu0 0.0
    %862 = vmatprep.subr.mxu0 0.0
    %863 = vmatpush1.msra.mxu0 0.0
    %864 = vmatprep.subr.mxu0 0.0
    %865 = vmatpush1.msra.mxu0 0.0
    %866 = vmatprep.subr.mxu0 0.0
    %867 = vmatpush1.msra.mxu0 0.0
    %868 = vmatprep.subr.mxu0 0.0
    %869 = vmatpush1.msra.mxu0 0.0
    %870 = vmatprep.subr.mxu0 0.0
    %871 = vmatpush1.msra.mxu0 0.0
    %872 = vmatprep.subr.mxu0 0.0
    %873 = vmatpush1.msra.mxu0 0.0
    %874 = vmatprep.subr.mxu0 0.0
    %875 = vmatpush1.msra.mxu0 0.0
    %876 = vmatprep.subr.mxu0 0.0
    %877 = vmatpush1.msra.mxu0 0.0
    %878 = vmatprep.subr.mxu0 0.0
    %879 = vmatpush1.msra.mxu0 0.0
    %880 = vmatprep.subr.mxu0 0.0
    %881 = vmatpush1.msra.mxu0 0.0
    %882 = vmatprep.subr.mxu0 0.0
    %883 = vmatpush1.msra.mxu0 0.0
    %884 = vmatprep.subr.mxu0 0.0
    %885 = vmatpush1.msra.mxu0 0.0
    %886 = vmatprep.subr.mxu0 0.0
    %887 = vmatpush1.msra.mxu0 0.0
    %888 = vmatprep.subr.mxu0 0.0
    %889 = vmatpush1.msra.mxu0 0.0
    %890 = vmatprep.subr.mxu0 0.0
    %891 = vmatpush1.msra.mxu0 0.0
    %892 = vmatprep.subr.mxu0 0.0
    %893 = vmatpush1.msra.mxu0 0.0
    %894 = vmatprep.subr.mxu0 0.0
    %895 = vmatpush1.msra.mxu0 0.0
    %896 = vmatprep.subr.mxu0 0.0
    %897 = vmatpush1.msra.mxu0 0.0
    %898 = vmatprep.subr.mxu0 0.0
    %899 = vmatpush1.msra.mxu0 0.0
    %900 = vmatprep.subr.mxu0 0.0
    %901 = vmatpush1.msra.mxu0 0.0
    %902 = vmatprep.subr.mxu0 0.0
    %903 = vmatpush1.msra.mxu0 0.0
    %904 = vmatprep.mubr.f32.mxu0 0.0
    %905 = vmatmul.mubr.f32.gmra.mrb[0].mxu0 %v835
    %v906 = vpop.f32.mrb[0].mxu0
    %v907 = vadd.f32 0.0, %v906
    %v908 = vpop.f32.mrb[0].mxu0
    %909 = vmatprep.mubr.f32.mxu0 0.0
    %910 = vmatmul.mubr.f32.gmra.mrb[0].mxu0 %v838
    %v911 = vpop.f32.mrb[0].mxu0
    %v912 = vadd.f32 0.0, %v911
    %v913 = vpop.f32.mrb[0].mxu0
    %914 = vdwg.mxu0
    %915 = vrot.lane.b32.xlu0 %v297, 104
    %v916 = vpop.permute.xlu0 %915
    %917 = vrot.lane.b32.xlu0 %v300, 104
    %v918 = vpop.permute.xlu0 %917
    %919 = vrot.lane.b32.xlu0 %v297, 72
    %v920 = vpop.permute.xlu0 %919
    %921 = vrot.lane.b32.xlu0 %v300, 72
    %v922 = vpop.permute.xlu0 %921
    %v923 = vsel %vm309, %v916, 0
    %v925 = vsel %vm309, %v918, 0
    %v927 = vsel %vm309, %v920, 0
    %v929 = vsel %vm309, %v922, 0
    %931 = vmatprep.subr.mxu0 0.0
    %932 = vmatpush1.xpose.msra.mxu0 %v927
    %933 = vmatprep.subr.mxu0 0.0
    %934 = vmatpush1.xpose.msra.mxu0 %v929
    %935 = vmatprep.subr.mxu0 0.0
    %936 = vmatpush1.xpose.msra.mxu0 0.0
    %937 = vmatprep.subr.mxu0 0.0
    %938 = vmatpush1.xpose.msra.mxu0 0.0
    %939 = vmatprep.subr.mxu0 0.0
    %940 = vmatpush1.xpose.msra.mxu0 0.0
    %941 = vmatprep.subr.mxu0 0.0
    %942 = vmatpush1.xpose.msra.mxu0 0.0
    %943 = vmatprep.subr.mxu0 0.0
    %944 = vmatpush1.xpose.msra.mxu0 0.0
    %945 = vmatprep.subr.mxu0 0.0
    %946 = vmatpush1.xpose.msra.mxu0 0.0
    %947 = vmatprep.subr.mxu0 0.0
    %948 = vmatpush1.xpose.msra.mxu0 0.0
    %949 = vmatprep.subr.mxu0 0.0
    %950 = vmatpush1.xpose.msra.mxu0 0.0
    %951 = vmatprep.subr.mxu0 0.0
    %952 = vmatpush1.xpose.msra.mxu0 0.0
    %953 = vmatprep.subr.mxu0 0.0
    %954 = vmatpush1.xpose.msra.mxu0 0.0
    %955 = vmatprep.subr.mxu0 0.0
    %956 = vmatpush1.xpose.msra.mxu0 0.0
    %957 = vmatprep.subr.mxu0 0.0
    %958 = vmatpush1.xpose.msra.mxu0 0.0
    %959 = vmatprep.subr.mxu0 0.0
    %960 = vmatpush1.xpose.msra.mxu0 0.0
    %961 = vmatprep.subr.mxu0 0.0
    %962 = vmatpush1.xpose.msra.mxu0 0.0
    %963 = vmatprep.subr.mxu0 0.0
    %964 = vmatpush1.xpose.msra.mxu0 0.0
    %965 = vmatprep.subr.mxu0 0.0
    %966 = vmatpush1.xpose.msra.mxu0 0.0
    %967 = vmatprep.subr.mxu0 0.0
    %968 = vmatpush1.xpose.msra.mxu0 0.0
    %969 = vmatprep.subr.mxu0 0.0
    %970 = vmatpush1.xpose.msra.mxu0 0.0
    %971 = vmatprep.subr.mxu0 0.0
    %972 = vmatpush1.xpose.msra.mxu0 0.0
    %973 = vmatprep.subr.mxu0 0.0
    %974 = vmatpush1.xpose.msra.mxu0 0.0
    %975 = vmatprep.subr.mxu0 0.0
    %976 = vmatpush1.xpose.msra.mxu0 0.0
    %977 = vmatprep.subr.mxu0 0.0
    %978 = vmatpush1.xpose.msra.mxu0 0.0
    %979 = vmatprep.subr.mxu0 0.0
    %980 = vmatpush1.xpose.msra.mxu0 0.0
    %981 = vmatprep.subr.mxu0 0.0
    %982 = vmatpush1.xpose.msra.mxu0 0.0
    %983 = vmatprep.subr.mxu0 0.0
    %984 = vmatpush1.xpose.msra.mxu0 0.0
    %985 = vmatprep.subr.mxu0 0.0
    %986 = vmatpush1.xpose.msra.mxu0 0.0
    %987 = vmatprep.subr.mxu0 0.0
    %988 = vmatpush1.xpose.msra.mxu0 0.0
    %989 = vmatprep.subr.mxu0 0.0
    %990 = vmatpush1.xpose.msra.mxu0 0.0
    %991 = vmatprep.subr.mxu0 0.0
    %992 = vmatpush1.xpose.msra.mxu0 0.0
    %993 = vmatprep.subr.mxu0 0.0
    %994 = vmatpush1.xpose.msra.mxu0 0.0
    %995 = vmatprep.mubr.f32.mxu0 0.0
    %996 = vmatmul.mubr.f32.gmra.mrb[0].mxu0 %v923
    %v997 = vpop.f32.mrb[0].mxu0
    %v998 = vadd.f32 0.0, %v997
    %v999 = vpop.f32.mrb[0].mxu0
    %1000 = vmatprep.mubr.f32.mxu0 0.0
    %1001 = vmatmul.mubr.f32.gmra.mrb[0].mxu0 %v925
    %v1002 = vpop.f32.mrb[0].mxu0
    %v1003 = vadd.f32 0.0, %v1002
    %v1004 = vpop.f32.mrb[0].mxu0
    %1005 = vdwg.mxu0
    %v1006 = vmul.f32 %v998, 0.35355338
    %v1007 = vmul.f32 %v1003, 0.35355338
    %v1008 = vadd.f32 %v1006, %v219
    %v1009 = vadd.f32 %v1007, %v220
    %v1010 = vsel %vm397, %v1008, -inf
    %1011 = vmax.xlane.f32.xlu0 %v1010
    %v1012 = vpop.xlane.xlu0 %1011
    %v1013 = vsel %vm397, %v1009, -inf
    %1014 = vmax.xlane.f32.xlu0 %v1013
    %v1015 = vpop.xlane.xlu0 %1014
    %v1016 = vsub.f32 %v1008, %v1012
    %v1017 = vsub.f32 %v1009, %v1015
    %v1018 = vmul.f32 %v1016, 1.442695
    %v1019 = vpow.pop %v1018
    %v1020 = vmul.f32 %v1017, 1.442695
    %v1021 = vpow.pop %v1020
    %v1022 = vsel %vm397, %v1019, 0.0
    %1023 = vadd.xlane.f32.xlu0 %v1022
    %v1024 = vpop.xlane.xlu0 %1023
    %v1025 = vsel %vm397, %v1021, 0.0
    %1026 = vadd.xlane.f32.xlu0 %v1025
    %v1027 = vpop.xlane.xlu0 %1026
    %v1028 = vrcp.pop %v1024
    %v1029 = vrcp.pop %v1027
    %v1030 = vmul.f32 %v1019, %v1028
    %v1031 = vmul.f32 %v1021, %v1029
    %1032 = vrot.lane.b32.xlu0 %v297, 40
    %v1033 = vpop.permute.xlu0 %1032
    %1034 = vrot.lane.b32.xlu0 %v300, 40
    %v1035 = vpop.permute.xlu0 %1034
    %v1039 = vsel %vm397, %v1030, 0
    %v1042 = vsel %vm397, %v1031, 0
    %1044 = vmatprep.subr.mxu0 0.0
    %1045 = vmatpush1.msra.mxu0 %v1033
    %1046 = vmatprep.subr.mxu0 0.0
    %1047 = vmatpush1.msra.mxu0 %v1035
    %1048 = vmatprep.subr.mxu0 0.0
    %1049 = vmatpush1.msra.mxu0 0.0
    %1050 = vmatprep.subr.mxu0 0.0
    %1051 = vmatpush1.msra.mxu0 0.0
    %1052 = vmatprep.subr.mxu0 0.0
    %1053 = vmatpush1.msra.mxu0 0.0
    %1054 = vmatprep.subr.mxu0 0.0
    %1055 = vmatpush1.msra.mxu0 0.0
    %1056 = vmatprep.subr.mxu0 0.0
    %1057 = vmatpush1.msra.mxu0 0.0
    %1058 = vmatprep.subr.mxu0 0.0
    %1059 = vmatpush1.msra.mxu0 0.0
    %1060 = vmatprep.subr.mxu0 0.0
    %1061 = vmatpush1.msra.mxu0 0.0
    %1062 = vmatprep.subr.mxu0 0.0
    %1063 = vmatpush1.msra.mxu0 0.0
    %1064 = vmatprep.subr.mxu0 0.0
    %1065 = vmatpush1.msra.mxu0 0.0
    %1066 = vmatprep.subr.mxu0 0.0
    %1067 = vmatpush1.msra.mxu0 0.0
    %1068 = vmatprep.subr.mxu0 0.0
    %1069 = vmatpush1.msra.mxu0 0.0
    %1070 = vmatprep.subr.mxu0 0.0
    %1071 = vmatpush1.msra.mxu0 0.0
    %1072 = vmatprep.subr.mxu0 0.0
    %1073 = vmatpush1.msra.mxu0 0.0
    %1074 = vmatprep.subr.mxu0 0.0
    %1075 = vmatpush1.msra.mxu0 0.0
    %1076 = vmatprep.subr.mxu0 0.0
    %1077 = vmatpush1.msra.mxu0 0.0
    %1078 = vmatprep.subr.mxu0 0.0
    %1079 = vmatpush1.msra.mxu0 0.0
    %1080 = vmatprep.subr.mxu0 0.0
    %1081 = vmatpush1.msra.mxu0 0.0
    %1082 = vmatprep.subr.mxu0 0.0
    %1083 = vmatpush1.msra.mxu0 0.0
    %1084 = vmatprep.subr.mxu0 0.0
    %1085 = vmatpush1.msra.mxu0 0.0
    %1086 = vmatprep.subr.mxu0 0.0
    %1087 = vmatpush1.msra.mxu0 0.0
    %1088 = vmatprep.subr.mxu0 0.0
    %1089 = vmatpush1.msra.mxu0 0.0
    %1090 = vmatprep.subr.mxu0 0.0
    %1091 = vmatpush1.msra.mxu0 0.0
    %1092 = vmatprep.subr.mxu0 0.0
    %1093 = vmatpush1.msra.mxu0 0.0
    %1094 = vmatprep.subr.mxu0 0.0
    %1095 = vmatpush1.msra.mxu0 0.0
    %1096 = vmatprep.subr.mxu0 0.0
    %1097 = vmatpush1.msra.mxu0 0.0
    %1098 = vmatprep.subr.mxu0 0.0
    %1099 = vmatpush1.msra.mxu0 0.0
    %1100 = vmatprep.subr.mxu0 0.0
    %1101 = vmatpush1.msra.mxu0 0.0
    %1102 = vmatprep.subr.mxu0 0.0
    %1103 = vmatpush1.msra.mxu0 0.0
    %1104 = vmatprep.subr.mxu0 0.0
    %1105 = vmatpush1.msra.mxu0 0.0
    %1106 = vmatprep.subr.mxu0 0.0
    %1107 = vmatpush1.msra.mxu0 0.0
    %1108 = vmatprep.mubr.f32.mxu0 0.0
    %1109 = vmatmul.mubr.f32.gmra.mrb[0].mxu0 %v1039
    %v1110 = vpop.f32.mrb[0].mxu0
    %v1111 = vadd.f32 0.0, %v1110
    %v1112 = vpop.f32.mrb[0].mxu0
    %1113 = vmatprep.mubr.f32.mxu0 0.0
    %1114 = vmatmul.mubr.f32.gmra.mrb[0].mxu0 %v1042
    %v1115 = vpop.f32.mrb[0].mxu0
    %v1116 = vadd.f32 0.0, %v1115
    %v1117 = vpop.f32.mrb[0].mxu0
    %1118 = vdwg.mxu0
    %1121 = vrot.lane.b32.xlu0 %v703, 8
    %v1122 = vpop.permute.xlu0 %1121
    %1123 = vrot.lane.b32.xlu0 %v708, 8
    %v1124 = vpop.permute.xlu0 %1123
    %1129 = vrot.lane.b32.xlu0 %v907, 16
    %v1130 = vpop.permute.xlu0 %1129
    %1131 = vrot.lane.b32.xlu0 %v912, 16
    %v1132 = vpop.permute.xlu0 %1131
    %1137 = vrot.lane.b32.xlu0 %v1111, 24
    %v1138 = vpop.permute.xlu0 %1137
    %1139 = vrot.lane.b32.xlu0 %v1116, 24
    %v1140 = vpop.permute.xlu0 %1139
    %v1143 = vsel %vm309, %v499, %v1122
    %v1144 = vsel %vm309, %v504, %v1124
    %v1145 = vsel %vm397, %v1143, %v1130
    %v1146 = vsel %vm397, %v1144, %v1132
    %vm1147 = vcmask 195584
    %v1148 = vsel %vm1147, %v1145, %v1138
    %v1149 = vsel %vm1147, %v1146, %v1140
    %v1150 = vpack.c.bf16 %v1149, %v1148
    %v1151 = vld [vmem:[%s3 + $0x1] sm:$0x1]
    %v1152 = vlaneseq
    %v1153 = vshrl.u32 %v1152, 7
    %v1154 = vsub.s32 0, %v1153
    %v1155 = vrot.slane %v1151, %v1154
    %v1160 = vunpack.c.l.b16 %v225
    %v1161 = vunpack.c.l.b16 %v226
    %v1162 = vunpack.c.l.b16 %v227
    %v1163 = vunpack.c.l.b16 %v228
    %v1164 = vpack.c.b16 %v1161, %v1160
    %v1165 = vpack.c.b16 %v1163, %v1162
    %v1169 = vsel %vm179, %v1150, 0
    %1171 = vmatprep.subr.bf16.mxu0 0
    %1172 = vmatpush1.bf16.msra.mxu0 %v1164
    %1173 = vmatprep.subr.bf16.mxu0 0
    %1174 = vmatpush1.bf16.msra.mxu0 %v1165
    %1175 = vmatprep.subr.bf16.mxu0 0
    %1176 = vmatpush1.bf16.msra.mxu0 0
    %1177 = vmatprep.subr.bf16.mxu0 0
    %1178 = vmatpush1.bf16.msra.mxu0 0
    %1179 = vmatprep.subr.bf16.mxu0 0
    %1180 = vmatpush1.bf16.msra.mxu0 0
    %1181 = vmatprep.subr.bf16.mxu0 0
    %1182 = vmatpush1.bf16.msra.mxu0 0
    %1183 = vmatprep.subr.bf16.mxu0 0
    %1184 = vmatpush1.bf16.msra.mxu0 0
    %1185 = vmatprep.subr.bf16.mxu0 0
    %1186 = vmatpush1.bf16.msra.mxu0 0
    %1187 = vmatprep.subr.bf16.mxu0 0
    %1188 = vmatpush1.bf16.msra.mxu0 0
    %1189 = vmatprep.subr.bf16.mxu0 0
    %1190 = vmatpush1.bf16.msra.mxu0 0
    %1191 = vmatprep.subr.bf16.mxu0 0
    %1192 = vmatpush1.bf16.msra.mxu0 0
    %1193 = vmatprep.subr.bf16.mxu0 0
    %1194 = vmatpush1.bf16.msra.mxu0 0
    %1195 = vmatprep.subr.bf16.mxu0 0
    %1196 = vmatpush1.bf16.msra.mxu0 0
    %1197 = vmatprep.subr.bf16.mxu0 0
    %1198 = vmatpush1.bf16.msra.mxu0 0
    %1199 = vmatprep.subr.bf16.mxu0 0
    %1200 = vmatpush1.bf16.msra.mxu0 0
    %1201 = vmatprep.subr.bf16.mxu0 0
    %1202 = vmatpush1.bf16.msra.mxu0 0
    %1203 = vmatprep.mubr.bf16.mxu0 0
    %1204 = vmatmul.mubr.bf16.gmra.mrb[0].mxu0 %v1169
    %v1205 = vpop.f32.mrb[0].mxu0
    %v1206 = vadd.f32 %v1155, %v1205
    %v1207 = vpop.f32.mrb[0].mxu0
    %v1208 = vpop.f32.mrb[0].mxu0
    %v1209 = vadd.f32 %v1155, %v1208
    %v1210 = vpop.f32.mrb[0].mxu0
    %1211 = vdwg.mxu0
    %v1212 = vadd.f32 %v217, %v1206
    %v1213 = vadd.f32 %v218, %v1209
    %v1214 = vld [vmem:[%s3 + $0x2] sm:$0x1]
    %v1215 = vld [vmem:[%s3 + $0x3] sm:$0x1]
    %v1216 = vsel %vm179, %v1212, 0.0
    %1217 = vadd.xlane.f32.xlu0 %v1216
    %v1218 = vpop.xlane.xlu0 %1217
    %v1219 = vsel %vm179, %v1213, 0.0
    %1220 = vadd.xlane.f32.xlu0 %v1219
    %v1221 = vpop.xlane.xlu0 %1220
    %v1222 = vmul.f32 %v1218, %v186
    %v1223 = vmul.f32 %v1221, %v186
    %v1224 = vsub.f32 %v1212, %v1222
    %v1225 = vsub.f32 %v1213, %v1223
    %v1226 = vmul.f32 %v1224, %v1224
    %v1227 = vmul.f32 %v1225, %v1225
    %v1228 = vsel %vm179, %v1226, 0.0
    %1229 = vadd.xlane.f32.xlu0 %v1228
    %v1230 = vpop.xlane.xlu0 %1229
    %v1231 = vsel %vm179, %v1227, 0.0
    %1232 = vadd.xlane.f32.xlu0 %v1231
    %v1233 = vpop.xlane.xlu0 %1232
    %v1234 = vmul.f32 %v1230, %v186
    %v1235 = vmul.f32 %v1233, %v186
    %v1236 = vadd.f32 %v1234, 1e-12
    %v1237 = vadd.f32 %v1235, 1e-12
    %v1238 = vrsqrt.pop %v1236
    %v1239 = vrsqrt.pop %v1237
    %v1240 = vmul.f32 %v1224, %v1238
    %v1241 = vmul.f32 %v1225, %v1239
    %v1242 = vlaneseq
    %v1243 = vshrl.u32 %v1242, 7
    %v1244 = vsub.s32 0, %v1243
    %v1245 = vrot.slane %v1214, %v1244
    %v1246 = vmul.f32 %v1240, %v1245
    %v1247 = vmul.f32 %v1241, %v1245
    %v1248 = vlaneseq
    %v1249 = vshrl.u32 %v1248, 7
    %v1250 = vsub.s32 0, %v1249
    %v1251 = vrot.slane %v1215, %v1250
    %v1252 = vadd.f32 %v1246, %v1251
    %v1253 = vadd.f32 %v1247, %v1251
    %v1254 = vpack.c.bf16 %v1253, %v1252
    %v1255 = vld [vmem:[%s3 + $0x4] sm:$0x1]
    %v1256 = vlaneseq
    %v1257 = vshrl.u32 %v1256, 7
    %v1258 = vsub.s32 0, %v1257
    %v1259 = vrot.slane %v1255, %v1258
    %v1264 = vunpack.c.l.b16 %v229
    %v1265 = vunpack.c.l.b16 %v230
    %v1266 = vunpack.c.l.b16 %v231
    %v1267 = vunpack.c.l.b16 %v232
    %v1268 = vpack.c.b16 %v1265, %v1264
    %v1269 = vpack.c.b16 %v1267, %v1266
    %v1273 = vsel %vm179, %v1254, 0
    %1275 = vmatprep.subr.bf16.mxu0 0
    %1276 = vmatpush1.bf16.msra.mxu0 %v1268
    %1277 = vmatprep.subr.bf16.mxu0 0
    %1278 = vmatpush1.bf16.msra.mxu0 %v1269
    %1279 = vmatprep.subr.bf16.mxu0 0
    %1280 = vmatpush1.bf16.msra.mxu0 0
    %1281 = vmatprep.subr.bf16.mxu0 0
    %1282 = vmatpush1.bf16.msra.mxu0 0
    %1283 = vmatprep.subr.bf16.mxu0 0
    %1284 = vmatpush1.bf16.msra.mxu0 0
    %1285 = vmatprep.subr.bf16.mxu0 0
    %1286 = vmatpush1.bf16.msra.mxu0 0
    %1287 = vmatprep.subr.bf16.mxu0 0
    %1288 = vmatpush1.bf16.msra.mxu0 0
    %1289 = vmatprep.subr.bf16.mxu0 0
    %1290 = vmatpush1.bf16.msra.mxu0 0
    %1291 = vmatprep.subr.bf16.mxu0 0
    %1292 = vmatpush1.bf16.msra.mxu0 0
    %1293 = vmatprep.subr.bf16.mxu0 0
    %1294 = vmatpush1.bf16.msra.mxu0 0
    %1295 = vmatprep.subr.bf16.mxu0 0
    %1296 = vmatpush1.bf16.msra.mxu0 0
    %1297 = vmatprep.subr.bf16.mxu0 0
    %1298 = vmatpush1.bf16.msra.mxu0 0
    %1299 = vmatprep.subr.bf16.mxu0 0
    %1300 = vmatpush1.bf16.msra.mxu0 0
    %1301 = vmatprep.subr.bf16.mxu0 0
    %1302 = vmatpush1.bf16.msra.mxu0 0
    %1303 = vmatprep.subr.bf16.mxu0 0
    %1304 = vmatpush1.bf16.msra.mxu0 0
    %1305 = vmatprep.subr.bf16.mxu0 0
    %1306 = vmatpush1.bf16.msra.mxu0 0
    %1307 = vmatprep.mubr.bf16.mxu0 0
    %1308 = vmatmul.mubr.bf16.gmra.mrb[0].mxu0 %v1273
    %v1309 = vpop.f32.mrb[0].mxu0
    %v1310 = vadd.f32 %v1259, %v1309
    %v1311 = vpop.f32.mrb[0].mxu0
    %v1312 = vpop.f32.mrb[0].mxu0
    %v1313 = vadd.f32 %v1259, %v1312
    %v1314 = vpop.f32.mrb[0].mxu0
    %1315 = vdwg.mxu0
    %v1316 = vmul.f32 %v1310, %v1310
    %v1317 = vmul.f32 %v1313, %v1313
    %v1318 = vmul.f32 %v1310, %v1316
    %v1319 = vmul.f32 %v1313, %v1317
    %v1320 = vmul.f32 %v1318, 0.044715
    %v1321 = vmul.f32 %v1319, 0.044715
    %v1322 = vadd.f32 %v1310, %v1320
    %v1323 = vadd.f32 %v1313, %v1321
    %v1324 = vmul.f32 %v1322, 0.7978846
    %v1325 = vmul.f32 %v1323, 0.7978846
    %v1326 = vtanh.pop %v1324
    %v1327 = vtanh.pop %v1325
    %v1328 = vadd.f32 %v1326, 1.0
    %v1329 = vadd.f32 %v1327, 1.0
    %v1330 = vmul.f32 %v1328, 0.5
    %v1331 = vmul.f32 %v1329, 0.5
    %v1332 = vmul.f32 %v1310, %v1330
    %v1333 = vmul.f32 %v1313, %v1331
    %v1334 = vpack.c.bf16 %v1333, %v1332
    %v1335 = vld [vmem:[%s3 + $0x5] sm:$0x1]
    %v1336 = vlaneseq
    %v1337 = vshrl.u32 %v1336, 7
    %v1338 = vsub.s32 0, %v1337
    %v1339 = vrot.slane %v1335, %v1338
    %v1348 = vunpack.c.l.b16 %v233
    %v1349 = vunpack.c.l.b16 %v234
    %v1350 = vunpack.c.l.b16 %v235
    %v1351 = vunpack.c.l.b16 %v236
    %v1352 = vunpack.c.l.b16 %v237
    %v1353 = vunpack.c.l.b16 %v238
    %v1354 = vunpack.c.l.b16 %v239
    %v1355 = vunpack.c.l.b16 %v240
    %v1356 = vpack.c.b16 %v1349, %v1348
    %v1357 = vpack.c.b16 %v1351, %v1350
    %v1358 = vpack.c.b16 %v1353, %v1352
    %v1359 = vpack.c.b16 %v1355, %v1354
    %vm1364 = vcmask 523264
    %v1366 = vsel %vm1364, %v1334, 0
    %1368 = vmatprep.subr.bf16.mxu0 0
    %1369 = vmatpush1.bf16.msra.mxu0 %v1356
    %1370 = vmatprep.subr.bf16.mxu0 0
    %1371 = vmatpush1.bf16.msra.mxu0 %v1357
    %1372 = vmatprep.subr.bf16.mxu0 0
    %1373 = vmatpush1.bf16.msra.mxu0 %v1358
    %1374 = vmatprep.subr.bf16.mxu0 0
    %1375 = vmatpush1.bf16.msra.mxu0 %v1359
    %1376 = vmatprep.subr.bf16.mxu0 0
    %1377 = vmatpush1.bf16.msra.mxu0 0
    %1378 = vmatprep.subr.bf16.mxu0 0
    %1379 = vmatpush1.bf16.msra.mxu0 0
    %1380 = vmatprep.subr.bf16.mxu0 0
    %1381 = vmatpush1.bf16.msra.mxu0 0
    %1382 = vmatprep.subr.bf16.mxu0 0
    %1383 = vmatpush1.bf16.msra.mxu0 0
    %1384 = vmatprep.subr.bf16.mxu0 0
    %1385 = vmatpush1.bf16.msra.mxu0 0
    %1386 = vmatprep.subr.bf16.mxu0 0
    %1387 = vmatpush1.bf16.msra.mxu0 0
    %1388 = vmatprep.subr.bf16.mxu0 0
    %1389 = vmatpush1.bf16.msra.mxu0 0
    %1390 = vmatprep.subr.bf16.mxu0 0
    %1391 = vmatpush1.bf16.msra.mxu0 0
    %1392 = vmatprep.subr.bf16.mxu0 0
    %1393 = vmatpush1.bf16.msra.mxu0 0
    %1394 = vmatprep.subr.bf16.mxu0 0
    %1395 = vmatpush1.bf16.msra.mxu0 0
    %1396 = vmatprep.subr.bf16.mxu0 0
    %1397 = vmatpush1.bf16.msra.mxu0 0
    %1398 = vmatprep.subr.bf16.mxu0 0
    %1399 = vmatpush1.bf16.msra.mxu0 0
    %1400 = vmatprep.mubr.bf16.mxu0 0
    %1401 = vmatmul.mubr.bf16.gmra.mrb[0].mxu0 %v1366
    %v1402 = vpop.f32.mrb[0].mxu0
    %v1403 = vadd.f32 %v1339, %v1402
    %v1404 = vpop.f32.mrb[0].mxu0
    %v1405 = vpop.f32.mrb[0].mxu0
    %v1406 = vadd.f32 %v1339, %v1405
    %v1407 = vpop.f32.mrb[0].mxu0
    %1408 = vdwg.mxu0
    %v1409 = vadd.f32 %v1252, %v1403
    %v1410 = vadd.f32 %v1253, %v1406
    %v1411 = vld [vmem:[%s3 + $0x6] sm:$0x1]
    %v1412 = vld [vmem:[%s3 + $0x7] sm:$0x1]
    %v1413 = vsel %vm179, %v1409, 0.0
    %1414 = vadd.xlane.f32.xlu0 %v1413
    %v1415 = vpop.xlane.xlu0 %1414
    %v1416 = vsel %vm179, %v1410, 0.0
    %1417 = vadd.xlane.f32.xlu0 %v1416
    %v1418 = vpop.xlane.xlu0 %1417
    %v1419 = vmul.f32 %v1415, %v186
    %v1420 = vmul.f32 %v1418, %v186
    %v1421 = vsub.f32 %v1409, %v1419
    %v1422 = vsub.f32 %v1410, %v1420
    %v1423 = vmul.f32 %v1421, %v1421
    %v1424 = vmul.f32 %v1422, %v1422
    %v1425 = vsel %vm179, %v1423, 0.0
    %1426 = vadd.xlane.f32.xlu0 %v1425
    %v1427 = vpop.xlane.xlu0 %1426
    %v1428 = vsel %vm179, %v1424, 0.0
    %1429 = vadd.xlane.f32.xlu0 %v1428
    %v1430 = vpop.xlane.xlu0 %1429
    %v1431 = vmul.f32 %v1427, %v186
    %v1432 = vmul.f32 %v1430, %v186
    %v1433 = vadd.f32 %v1431, 1e-12
    %v1434 = vadd.f32 %v1432, 1e-12
    %v1435 = vrsqrt.pop %v1433
    %v1436 = vrsqrt.pop %v1434
    %v1437 = vmul.f32 %v1421, %v1435
    %v1438 = vmul.f32 %v1422, %v1436
    %v1439 = vlaneseq
    %v1440 = vshrl.u32 %v1439, 7
    %v1441 = vsub.s32 0, %v1440
    %v1442 = vrot.slane %v1411, %v1441
    %v1443 = vmul.f32 %v1437, %v1442
    %v1444 = vmul.f32 %v1438, %v1442
    %v1445 = vlaneseq
    %v1446 = vshrl.u32 %v1445, 7
    %v1447 = vsub.s32 0, %v1446
    %v1448 = vrot.slane %v1412, %v1447
    %v1449 = vadd.f32 %v1443, %v1448
    %v1450 = vadd.f32 %v1444, %v1448
    %s1451 = scalar_lea.vmem [#allocation2], 80
    %v1452 = vld [vmem:[%s1451] sm:$0xf]
    %v1453 = vld [vmem:[%s1451 + $0x4] sm:$0xf]
    %v1454 = vld [vmem:[%s1451 + $0x8] sm:$0xf]
    %v1455 = vld [vmem:[%s1451 + $0xc] sm:$0xf]
    %v1456 = vld [vmem:[%s1451 + $0x10] sm:$0xf]
    %v1457 = vld [vmem:[%s1451 + $0x14] sm:$0xf]
    %v1458 = vld [vmem:[%s1451 + $0x18] sm:$0xf]
    %v1459 = vld [vmem:[%s1451 + $0x1c] sm:$0xf]
    %v1460 = vld [vmem:[%s1451 + $0x20] sm:$0xf]
    %v1461 = vld [vmem:[%s1451 + $0x24] sm:$0xf]
    %v1462 = vld [vmem:[%s1451 + $0x28] sm:$0xf]
    %v1463 = vld [vmem:[%s1451 + $0x2c] sm:$0xf]
    %v1464 = vld [vmem:[%s1451 + $0x30] sm:$0xf]
    %v1465 = vld [vmem:[%s1451 + $0x34] sm:$0xf]
    %v1466 = vld [vmem:[%s1451 + $0x38] sm:$0xf]
    %v1467 = vld [vmem:[%s1451 + $0x3c] sm:$0xf]
    %v1468 = vld [vmem:[%s1451 + $0x40] sm:$0xf]
    %v1469 = vld [vmem:[%s1451 + $0x44] sm:$0xf]
    %v1470 = vld [vmem:[%s1451 + $0x48] sm:$0xf]
    %v1471 = vld [vmem:[%s1451 + $0x4c] sm:$0xf]
    %v1472 = vpack.c.bf16 %v1450, %v1449
    %s1473 = scalar_lea.vmem %s3, 8
    %v1474 = vld [vmem:[%s1473] sm:$0x1]
    %v1475 = vlaneseq
    %v1476 = vshrl.u32 %v1475, 7
    %v1477 = vsub.s32 0, %v1476
    %v1478 = vrot.slane %v1474, %v1477
    %v1483 = vunpack.c.l.b16 %v1452
    %v1484 = vunpack.c.l.b16 %v1453
    %v1485 = vunpack.c.l.b16 %v1454
    %v1486 = vunpack.c.l.b16 %v1455
    %v1487 = vpack.c.b16 %v1484, %v1483
    %v1488 = vpack.c.b16 %v1486, %v1485
    %v1492 = vsel %vm179, %v1472, 0
    %1494 = vmatprep.subr.bf16.mxu0 0
    %1495 = vmatpush1.bf16.msra.mxu0 %v1487
    %1496 = vmatprep.subr.bf16.mxu0 0
    %1497 = vmatpush1.bf16.msra.mxu0 %v1488
    %1498 = vmatprep.subr.bf16.mxu0 0
    %1499 = vmatpush1.bf16.msra.mxu0 0
    %1500 = vmatprep.subr.bf16.mxu0 0
    %1501 = vmatpush1.bf16.msra.mxu0 0
    %1502 = vmatprep.subr.bf16.mxu0 0
    %1503 = vmatpush1.bf16.msra.mxu0 0
    %1504 = vmatprep.subr.bf16.mxu0 0
    %1505 = vmatpush1.bf16.msra.mxu0 0
    %1506 = vmatprep.subr.bf16.mxu0 0
    %1507 = vmatpush1.bf16.msra.mxu0 0
    %1508 = vmatprep.subr.bf16.mxu0 0
    %1509 = vmatpush1.bf16.msra.mxu0 0
    %1510 = vmatprep.subr.bf16.mxu0 0
    %1511 = vmatpush1.bf16.msra.mxu0 0
    %1512 = vmatprep.subr.bf16.mxu0 0
    %1513 = vmatpush1.bf16.msra.mxu0 0
    %1514 = vmatprep.subr.bf16.mxu0 0
    %1515 = vmatpush1.bf16.msra.mxu0 0
    %1516 = vmatprep.subr.bf16.mxu0 0
    %1517 = vmatpush1.bf16.msra.mxu0 0
    %1518 = vmatprep.subr.bf16.mxu0 0
    %1519 = vmatpush1.bf16.msra.mxu0 0
    %1520 = vmatprep.subr.bf16.mxu0 0
    %1521 = vmatpush1.bf16.msra.mxu0 0
    %1522 = vmatprep.subr.bf16.mxu0 0
    %1523 = vmatpush1.bf16.msra.mxu0 0
    %1524 = vmatprep.subr.bf16.mxu0 0
    %1525 = vmatpush1.bf16.msra.mxu0 0
    %1526 = vmatprep.mubr.bf16.mxu0 0
    %1527 = vmatmul.mubr.bf16.gmra.mrb[0].mxu0 %v1492
    %v1528 = vpop.f32.mrb[0].mxu0
    %v1529 = vadd.f32 %v1478, %v1528
    %v1530 = vpop.f32.mrb[0].mxu0
    %v1531 = vpop.f32.mrb[0].mxu0
    %v1532 = vadd.f32 %v1478, %v1531
    %v1533 = vpop.f32.mrb[0].mxu0
    %1534 = vdwg.mxu0
    %1537 = vrot.lane.b32.xlu0 %v1529, 96
    %v1538 = vpop.permute.xlu0 %1537
    %1539 = vrot.lane.b32.xlu0 %v1532, 96
    %v1540 = vpop.permute.xlu0 %1539
    %v1541 = vsel %vm309, %v1529, 0
    %v1543 = vsel %vm309, %v1532, 0
    %v1545 = vsel %vm309, %v1538, 0
    %v1547 = vsel %vm309, %v1540, 0
    %1549 = vmatprep.subr.mxu0 0.0
    %1550 = vmatpush1.xpose.msra.mxu0 %v1545
    %1551 = vmatprep.subr.mxu0 0.0
    %1552 = vmatpush1.xpose.msra.mxu0 %v1547
    %1553 = vmatprep.subr.mxu0 0.0
    %1554 = vmatpush1.xpose.msra.mxu0 0.0
    %1555 = vmatprep.subr.mxu0 0.0
    %1556 = vmatpush1.xpose.msra.mxu0 0.0
    %1557 = vmatprep.subr.mxu0 0.0
    %1558 = vmatpush1.xpose.msra.mxu0 0.0
    %1559 = vmatprep.subr.mxu0 0.0
    %1560 = vmatpush1.xpose.msra.mxu0 0.0
    %1561 = vmatprep.subr.mxu0 0.0
    %1562 = vmatpush1.xpose.msra.mxu0 0.0
    %1563 = vmatprep.subr.mxu0 0.0
    %1564 = vmatpush1.xpose.msra.mxu0 0.0
    %1565 = vmatprep.subr.mxu0 0.0
    %1566 = vmatpush1.xpose.msra.mxu0 0.0
    %1567 = vmatprep.subr.mxu0 0.0
    %1568 = vmatpush1.xpose.msra.mxu0 0.0
    %1569 = vmatprep.subr.mxu0 0.0
    %1570 = vmatpush1.xpose.msra.mxu0 0.0
    %1571 = vmatprep.subr.mxu0 0.0
    %1572 = vmatpush1.xpose.msra.mxu0 0.0
    %1573 = vmatprep.subr.mxu0 0.0
    %1574 = vmatpush1.xpose.msra.mxu0 0.0
    %1575 = vmatprep.subr.mxu0 0.0
    %1576 = vmatpush1.xpose.msra.mxu0 0.0
    %1577 = vmatprep.subr.mxu0 0.0
    %1578 = vmatpush1.xpose.msra.mxu0 0.0
    %1579 = vmatprep.subr.mxu0 0.0
    %1580 = vmatpush1.xpose.msra.mxu0 0.0
    %1581 = vmatprep.subr.mxu0 0.0
    %1582 = vmatpush1.xpose.msra.mxu0 0.0
    %1583 = vmatprep.subr.mxu0 0.0
    %1584 = vmatpush1.xpose.msra.mxu0 0.0
    %1585 = vmatprep.subr.mxu0 0.0
    %1586 = vmatpush1.xpose.msra.mxu0 0.0
    %1587 = vmatprep.subr.mxu0 0.0
    %1588 = vmatpush1.xpose.msra.mxu0 0.0
    %1589 = vmatprep.subr.mxu0 0.0
    %1590 = vmatpush1.xpose.msra.mxu0 0.0
    %1591 = vmatprep.subr.mxu0 0.0
    %1592 = vmatpush1.xpose.msra.mxu0 0.0
    %1593 = vmatprep.subr.mxu0 0.0
    %1594 = vmatpush1.xpose.msra.mxu0 0.0
    %1595 = vmatprep.subr.mxu0 0.0
    %1596 = vmatpush1.xpose.msra.mxu0 0.0
    %1597 = vmatprep.subr.mxu0 0.0
    %1598 = vmatpush1.xpose.msra.mxu0 0.0
    %1599 = vmatprep.subr.mxu0 0.0
    %1600 = vmatpush1.xpose.msra.mxu0 0.0
    %1601 = vmatprep.subr.mxu0 0.0
    %1602 = vmatpush1.xpose.msra.mxu0 0.0
    %1603 = vmatprep.subr.mxu0 0.0
    %1604 = vmatpush1.xpose.msra.mxu0 0.0
    %1605 = vmatprep.subr.mxu0 0.0
    %1606 = vmatpush1.xpose.msra.mxu0 0.0
    %1607 = vmatprep.subr.mxu0 0.0
    %1608 = vmatpush1.xpose.msra.mxu0 0.0
    %1609 = vmatprep.subr.mxu0 0.0
    %1610 = vmatpush1.xpose.msra.mxu0 0.0
    %1611 = vmatprep.subr.mxu0 0.0
    %1612 = vmatpush1.xpose.msra.mxu0 0.0
    %1613 = vmatprep.mubr.f32.mxu0 0.0
    %1614 = vmatmul.mubr.f32.gmra.mrb[0].mxu0 %v1541
    %v1615 = vpop.f32.mrb[0].mxu0
    %v1616 = vadd.f32 0.0, %v1615
    %v1617 = vpop.f32.mrb[0].mxu0
    %1618 = vmatprep.mubr.f32.mxu0 0.0
    %1619 = vmatmul.mubr.f32.gmra.mrb[0].mxu0 %v1543
    %v1620 = vpop.f32.mrb[0].mxu0
    %v1621 = vadd.f32 0.0, %v1620
    %v1622 = vpop.f32.mrb[0].mxu0
    %1623 = vdwg.mxu0
    %v1624 = vmul.f32 %v1616, 0.35355338
    %v1625 = vmul.f32 %v1621, 0.35355338
    %v1626 = vadd.f32 %v1624, %v219
    %v1627 = vadd.f32 %v1625, %v220
    %v1628 = vsel %vm397, %v1626, -inf
    %1629 = vmax.xlane.f32.xlu0 %v1628
    %v1630 = vpop.xlane.xlu0 %1629
    %v1631 = vsel %vm397, %v1627, -inf
    %1632 = vmax.xlane.f32.xlu0 %v1631
    %v1633 = vpop.xlane.xlu0 %1632
    %v1634 = vsub.f32 %v1626, %v1630
    %v1635 = vsub.f32 %v1627, %v1633
    %v1636 = vmul.f32 %v1634, 1.442695
    %v1637 = vpow.pop %v1636
    %v1638 = vmul.f32 %v1635, 1.442695
    %v1639 = vpow.pop %v1638
    %v1640 = vsel %vm397, %v1637, 0.0
    %1641 = vadd.xlane.f32.xlu0 %v1640
    %v1642 = vpop.xlane.xlu0 %1641
    %v1643 = vsel %vm397, %v1639, 0.0
    %1644 = vadd.xlane.f32.xlu0 %v1643
    %v1645 = vpop.xlane.xlu0 %1644
    %v1646 = vrcp.pop %v1642
    %v1647 = vrcp.pop %v1645
    %v1648 = vmul.f32 %v1637, %v1646
    %v1649 = vmul.f32 %v1639, %v1647
    %1650 = vrot.lane.b32.xlu0 %v1529, 64
    %v1651 = vpop.permute.xlu0 %1650
    %1652 = vrot.lane.b32.xlu0 %v1532, 64
    %v1653 = vpop.permute.xlu0 %1652
    %v1657 = vsel %vm397, %v1648, 0
    %v1660 = vsel %vm397, %v1649, 0
    %1662 = vmatprep.subr.mxu0 0.0
    %1663 = vmatpush1.msra.mxu0 %v1651
    %1664 = vmatprep.subr.mxu0 0.0
    %1665 = vmatpush1.msra.mxu0 %v1653
    %1666 = vmatprep.subr.mxu0 0.0
    %1667 = vmatpush1.msra.mxu0 0.0
    %1668 = vmatprep.subr.mxu0 0.0
    %1669 = vmatpush1.msra.mxu0 0.0
    %1670 = vmatprep.subr.mxu0 0.0
    %1671 = vmatpush1.msra.mxu0 0.0
    %1672 = vmatprep.subr.mxu0 0.0
    %1673 = vmatpush1.msra.mxu0 0.0
    %1674 = vmatprep.subr.mxu0 0.0
    %1675 = vmatpush1.msra.mxu0 0.0
    %1676 = vmatprep.subr.mxu0 0.0
    %1677 = vmatpush1.msra.mxu0 0.0
    %1678 = vmatprep.subr.mxu0 0.0
    %1679 = vmatpush1.msra.mxu0 0.0
    %1680 = vmatprep.subr.mxu0 0.0
    %1681 = vmatpush1.msra.mxu0 0.0
    %1682 = vmatprep.subr.mxu0 0.0
    %1683 = vmatpush1.msra.mxu0 0.0
    %1684 = vmatprep.subr.mxu0 0.0
    %1685 = vmatpush1.msra.mxu0 0.0
    %1686 = vmatprep.subr.mxu0 0.0
    %1687 = vmatpush1.msra.mxu0 0.0
    %1688 = vmatprep.subr.mxu0 0.0
    %1689 = vmatpush1.msra.mxu0 0.0
    %1690 = vmatprep.subr.mxu0 0.0
    %1691 = vmatpush1.msra.mxu0 0.0
    %1692 = vmatprep.subr.mxu0 0.0
    %1693 = vmatpush1.msra.mxu0 0.0
    %1694 = vmatprep.subr.mxu0 0.0
    %1695 = vmatpush1.msra.mxu0 0.0
    %1696 = vmatprep.subr.mxu0 0.0
    %1697 = vmatpush1.msra.mxu0 0.0
    %1698 = vmatprep.subr.mxu0 0.0
    %1699 = vmatpush1.msra.mxu0 0.0
    %1700 = vmatprep.subr.mxu0 0.0
    %1701 = vmatpush1.msra.mxu0 0.0
    %1702 = vmatprep.subr.mxu0 0.0
    %1703 = vmatpush1.msra.mxu0 0.0
    %1704 = vmatprep.subr.mxu0 0.0
    %1705 = vmatpush1.msra.mxu0 0.0
    %1706 = vmatprep.subr.mxu0 0.0
    %1707 = vmatpush1.msra.mxu0 0.0
    %1708 = vmatprep.subr.mxu0 0.0
    %1709 = vmatpush1.msra.mxu0 0.0
    %1710 = vmatprep.subr.mxu0 0.0
    %1711 = vmatpush1.msra.mxu0 0.0
    %1712 = vmatprep.subr.mxu0 0.0
    %1713 = vmatpush1.msra.mxu0 0.0
    %1714 = vmatprep.subr.mxu0 0.0
    %1715 = vmatpush1.msra.mxu0 0.0
    %1716 = vmatprep.subr.mxu0 0.0
    %1717 = vmatpush1.msra.mxu0 0.0
    %1718 = vmatprep.subr.mxu0 0.0
    %1719 = vmatpush1.msra.mxu0 0.0
    %1720 = vmatprep.subr.mxu0 0.0
    %1721 = vmatpush1.msra.mxu0 0.0
    %1722 = vmatprep.subr.mxu0 0.0
    %1723 = vmatpush1.msra.mxu0 0.0
    %1724 = vmatprep.subr.mxu0 0.0
    %1725 = vmatpush1.msra.mxu0 0.0
    %1726 = vmatprep.mubr.f32.mxu0 0.0
    %1727 = vmatmul.mubr.f32.gmra.mrb[0].mxu0 %v1657
    %v1728 = vpop.f32.mrb[0].mxu0
    %v1729 = vadd.f32 0.0, %v1728
    %v1730 = vpop.f32.mrb[0].mxu0
    %1731 = vmatprep.mubr.f32.mxu0 0.0
    %1732 = vmatmul.mubr.f32.gmra.mrb[0].mxu0 %v1660
    %v1733 = vpop.f32.mrb[0].mxu0
    %v1734 = vadd.f32 0.0, %v1733
    %v1735 = vpop.f32.mrb[0].mxu0
    %1736 = vdwg.mxu0
    %1737 = vrot.lane.b32.xlu0 %v1529, 120
    %v1738 = vpop.permute.xlu0 %1737
    %1739 = vrot.lane.b32.xlu0 %v1532, 120
    %v1740 = vpop.permute.xlu0 %1739
    %1741 = vrot.lane.b32.xlu0 %v1529, 88
    %v1742 = vpop.permute.xlu0 %1741
    %1743 = vrot.lane.b32.xlu0 %v1532, 88
    %v1744 = vpop.permute.xlu0 %1743
    %v1745 = vsel %vm309, %v1738, 0
    %v1747 = vsel %vm309, %v1740, 0
    %v1749 = vsel %vm309, %v1742, 0
    %v1751 = vsel %vm309, %v1744, 0
    %1753 = vmatprep.subr.mxu0 0.0
    %1754 = vmatpush1.xpose.msra.mxu0 %v1749
    %1755 = vmatprep.subr.mxu0 0.0
    %1756 = vmatpush1.xpose.msra.mxu0 %v1751
    %1757 = vmatprep.subr.mxu0 0.0
    %1758 = vmatpush1.xpose.msra.mxu0 0.0
    %1759 = vmatprep.subr.mxu0 0.0
    %1760 = vmatpush1.xpose.msra.mxu0 0.0
    %1761 = vmatprep.subr.mxu0 0.0
    %1762 = vmatpush1.xpose.msra.mxu0 0.0
    %1763 = vmatprep.subr.mxu0 0.0
    %1764 = vmatpush1.xpose.msra.mxu0 0.0
    %1765 = vmatprep.subr.mxu0 0.0
    %1766 = vmatpush1.xpose.msra.mxu0 0.0
    %1767 = vmatprep.subr.mxu0 0.0
    %1768 = vmatpush1.xpose.msra.mxu0 0.0
    %1769 = vmatprep.subr.mxu0 0.0
    %1770 = vmatpush1.xpose.msra.mxu0 0.0
    %1771 = vmatprep.subr.mxu0 0.0
    %1772 = vmatpush1.xpose.msra.mxu0 0.0
    %1773 = vmatprep.subr.mxu0 0.0
    %1774 = vmatpush1.xpose.msra.mxu0 0.0
    %1775 = vmatprep.subr.mxu0 0.0
    %1776 = vmatpush1.xpose.msra.mxu0 0.0
    %1777 = vmatprep.subr.mxu0 0.0
    %1778 = vmatpush1.xpose.msra.mxu0 0.0
    %1779 = vmatprep.subr.mxu0 0.0
    %1780 = vmatpush1.xpose.msra.mxu0 0.0
    %1781 = vmatprep.subr.mxu0 0.0
    %1782 = vmatpush1.xpose.msra.mxu0 0.0
    %1783 = vmatprep.subr.mxu0 0.0
    %1784 = vmatpush1.xpose.msra.mxu0 0.0
    %1785 = vmatprep.subr.mxu0 0.0
    %1786 = vmatpush1.xpose.msra.mxu0 0.0
    %1787 = vmatprep.subr.mxu0 0.0
    %1788 = vmatpush1.xpose.msra.mxu0 0.0
    %1789 = vmatprep.subr.mxu0 0.0
    %1790 = vmatpush1.xpose.msra.mxu0 0.0
    %1791 = vmatprep.subr.mxu0 0.0
    %1792 = vmatpush1.xpose.msra.mxu0 0.0
    %1793 = vmatprep.subr.mxu0 0.0
    %1794 = vmatpush1.xpose.msra.mxu0 0.0
    %1795 = vmatprep.subr.mxu0 0.0
    %1796 = vmatpush1.xpose.msra.mxu0 0.0
    %1797 = vmatprep.subr.mxu0 0.0
    %1798 = vmatpush1.xpose.msra.mxu0 0.0
    %1799 = vmatprep.subr.mxu0 0.0
    %1800 = vmatpush1.xpose.msra.mxu0 0.0
    %1801 = vmatprep.subr.mxu0 0.0
    %1802 = vmatpush1.xpose.msra.mxu0 0.0
    %1803 = vmatprep.subr.mxu0 0.0
    %1804 = vmatpush1.xpose.msra.mxu0 0.0
    %1805 = vmatprep.subr.mxu0 0.0
    %1806 = vmatpush1.xpose.msra.mxu0 0.0
    %1807 = vmatprep.subr.mxu0 0.0
    %1808 = vmatpush1.xpose.msra.mxu0 0.0
    %1809 = vmatprep.subr.mxu0 0.0
    %1810 = vmatpush1.xpose.msra.mxu0 0.0
    %1811 = vmatprep.subr.mxu0 0.0
    %1812 = vmatpush1.xpose.msra.mxu0 0.0
    %1813 = vmatprep.subr.mxu0 0.0
    %1814 = vmatpush1.xpose.msra.mxu0 0.0
    %1815 = vmatprep.subr.mxu0 0.0
    %1816 = vmatpush1.xpose.msra.mxu0 0.0
    %1817 = vmatprep.mubr.f32.mxu0 0.0
    %1818 = vmatmul.mubr.f32.gmra.mrb[0].mxu0 %v1745
    %v1819 = vpop.f32.mrb[0].mxu0
    %v1820 = vadd.f32 0.0, %v1819
    %v1821 = vpop.f32.mrb[0].mxu0
    %1822 = vmatprep.mubr.f32.mxu0 0.0
    %1823 = vmatmul.mubr.f32.gmra.mrb[0].mxu0 %v1747
    %v1824 = vpop.f32.mrb[0].mxu0
    %v1825 = vadd.f32 0.0, %v1824
    %v1826 = vpop.f32.mrb[0].mxu0
    %1827 = vdwg.mxu0
    %v1828 = vmul.f32 %v1820, 0.35355338
    %v1829 = vmul.f32 %v1825, 0.35355338
    %v1830 = vadd.f32 %v1828, %v219
    %v1831 = vadd.f32 %v1829, %v220
    %v1832 = vsel %vm397, %v1830, -inf
    %1833 = vmax.xlane.f32.xlu0 %v1832
    %v1834 = vpop.xlane.xlu0 %1833
    %v1835 = vsel %vm397, %v1831, -inf
    %1836 = vmax.xlane.f32.xlu0 %v1835
    %v1837 = vpop.xlane.xlu0 %1836
    %v1838 = vsub.f32 %v1830, %v1834
    %v1839 = vsub.f32 %v1831, %v1837
    %v1840 = vmul.f32 %v1838, 1.442695
    %v1841 = vpow.pop %v1840
    %v1842 = vmul.f32 %v1839, 1.442695
    %v1843 = vpow.pop %v1842
    %v1844 = vsel %vm397, %v1841, 0.0
    %1845 = vadd.xlane.f32.xlu0 %v1844
    %v1846 = vpop.xlane.xlu0 %1845
    %v1847 = vsel %vm397, %v1843, 0.0
    %1848 = vadd.xlane.f32.xlu0 %v1847
    %v1849 = vpop.xlane.xlu0 %1848
    %v1850 = vrcp.pop %v1846
    %v1851 = vrcp.pop %v1849
    %v1852 = vmul.f32 %v1841, %v1850
    %v1853 = vmul.f32 %v1843, %v1851
    %1854 = vrot.lane.b32.xlu0 %v1529, 56
    %v1855 = vpop.permute.xlu0 %1854
    %1856 = vrot.lane.b32.xlu0 %v1532, 56
    %v1857 = vpop.permute.xlu0 %1856
    %v1861 = vsel %vm397, %v1852, 0
    %v1864 = vsel %vm397, %v1853, 0
    %1866 = vmatprep.subr.mxu0 0.0
    %1867 = vmatpush1.msra.mxu0 %v1855
    %1868 = vmatprep.subr.mxu0 0.0
    %1869 = vmatpush1.msra.mxu0 %v1857
    %1870 = vmatprep.subr.mxu0 0.0
    %1871 = vmatpush1.msra.mxu0 0.0
    %1872 = vmatprep.subr.mxu0 0.0
    %1873 = vmatpush1.msra.mxu0 0.0
    %1874 = vmatprep.subr.mxu0 0.0
    %1875 = vmatpush1.msra.mxu0 0.0
    %1876 = vmatprep.subr.mxu0 0.0
    %1877 = vmatpush1.msra.mxu0 0.0
    %1878 = vmatprep.subr.mxu0 0.0
    %1879 = vmatpush1.msra.mxu0 0.0
    %1880 = vmatprep.subr.mxu0 0.0
    %1881 = vmatpush1.msra.mxu0 0.0
    %1882 = vmatprep.subr.mxu0 0.0
    %1883 = vmatpush1.msra.mxu0 0.0
    %1884 = vmatprep.subr.mxu0 0.0
    %1885 = vmatpush1.msra.mxu0 0.0
    %1886 = vmatprep.subr.mxu0 0.0
    %1887 = vmatpush1.msra.mxu0 0.0
    %1888 = vmatprep.subr.mxu0 0.0
    %1889 = vmatpush1.msra.mxu0 0.0
    %1890 = vmatprep.subr.mxu0 0.0
    %1891 = vmatpush1.msra.mxu0 0.0
    %1892 = vmatprep.subr.mxu0 0.0
    %1893 = vmatpush1.msra.mxu0 0.0
    %1894 = vmatprep.subr.mxu0 0.0
    %1895 = vmatpush1.msra.mxu0 0.0
    %1896 = vmatprep.subr.mxu0 0.0
    %1897 = vmatpush1.msra.mxu0 0.0
    %1898 = vmatprep.subr.mxu0 0.0
    %1899 = vmatpush1.msra.mxu0 0.0
    %1900 = vmatprep.subr.mxu0 0.0
    %1901 = vmatpush1.msra.mxu0 0.0
    %1902 = vmatprep.subr.mxu0 0.0
    %1903 = vmatpush1.msra.mxu0 0.0
    %1904 = vmatprep.subr.mxu0 0.0
    %1905 = vmatpush1.msra.mxu0 0.0
    %1906 = vmatprep.subr.mxu0 0.0
    %1907 = vmatpush1.msra.mxu0 0.0
    %1908 = vmatprep.subr.mxu0 0.0
    %1909 = vmatpush1.msra.mxu0 0.0
    %1910 = vmatprep.subr.mxu0 0.0
    %1911 = vmatpush1.msra.mxu0 0.0
    %1912 = vmatprep.subr.mxu0 0.0
    %1913 = vmatpush1.msra.mxu0 0.0
    %1914 = vmatprep.subr.mxu0 0.0
    %1915 = vmatpush1.msra.mxu0 0.0
    %1916 = vmatprep.subr.mxu0 0.0
    %1917 = vmatpush1.msra.mxu0 0.0
    %1918 = vmatprep.subr.mxu0 0.0
    %1919 = vmatpush1.msra.mxu0 0.0
    %1920 = vmatprep.subr.mxu0 0.0
    %1921 = vmatpush1.msra.mxu0 0.0
    %1922 = vmatprep.subr.mxu0 0.0
    %1923 = vmatpush1.msra.mxu0 0.0
    %1924 = vmatprep.subr.mxu0 0.0
    %1925 = vmatpush1.msra.mxu0 0.0
    %1926 = vmatprep.subr.mxu0 0.0
    %1927 = vmatpush1.msra.mxu0 0.0
    %1928 = vmatprep.subr.mxu0 0.0
    %1929 = vmatpush1.msra.mxu0 0.0
    %1930 = vmatprep.mubr.f32.mxu0 0.0
    %1931 = vmatmul.mubr.f32.gmra.mrb[0].mxu0 %v1861
    %v1932 = vpop.f32.mrb[0].mxu0
    %v1933 = vadd.f32 0.0, %v1932
    %v1934 = vpop.f32.mrb[0].mxu0
    %1935 = vmatprep.mubr.f32.mxu0 0.0
    %1936 = vmatmul.mubr.f32.gmra.mrb[0].mxu0 %v1864
    %v1937 = vpop.f32.mrb[0].mxu0
    %v1938 = vadd.f32 0.0, %v1937
    %v1939 = vpop.f32.mrb[0].mxu0
    %1940 = vdwg.mxu0
    %1941 = vrot.lane.b32.xlu0 %v1529, 112
    %v1942 = vpop.permute.xlu0 %1941
    %1943 = vrot.lane.b32.xlu0 %v1532, 112
    %v1944 = vpop.permute.xlu0 %1943
    %1945 = vrot.lane.b32.xlu0 %v1529, 80
    %v1946 = vpop.permute.xlu0 %1945
    %1947 = vrot.lane.b32.xlu0 %v1532, 80
    %v1948 = vpop.permute.xlu0 %1947
    %v1949 = vsel %vm309, %v1942, 0
    %v1951 = vsel %vm309, %v1944, 0
    %v1953 = vsel %vm309, %v1946, 0
    %v1955 = vsel %vm309, %v1948, 0
    %1957 = vmatprep.subr.mxu0 0.0
    %1958 = vmatpush1.xpose.msra.mxu0 %v1953
    %1959 = vmatprep.subr.mxu0 0.0
    %1960 = vmatpush1.xpose.msra.mxu0 %v1955
    %1961 = vmatprep.subr.mxu0 0.0
    %1962 = vmatpush1.xpose.msra.mxu0 0.0
    %1963 = vmatprep.subr.mxu0 0.0
    %1964 = vmatpush1.xpose.msra.mxu0 0.0
    %1965 = vmatprep.subr.mxu0 0.0
    %1966 = vmatpush1.xpose.msra.mxu0 0.0
    %1967 = vmatprep.subr.mxu0 0.0
    %1968 = vmatpush1.xpose.msra.mxu0 0.0
    %1969 = vmatprep.subr.mxu0 0.0
    %1970 = vmatpush1.xpose.msra.mxu0 0.0
    %1971 = vmatprep.subr.mxu0 0.0
    %1972 = vmatpush1.xpose.msra.mxu0 0.0
    %1973 = vmatprep.subr.mxu0 0.0
    %1974 = vmatpush1.xpose.msra.mxu0 0.0
    %1975 = vmatprep.subr.mxu0 0.0
    %1976 = vmatpush1.xpose.msra.mxu0 0.0
    %1977 = vmatprep.subr.mxu0 0.0
    %1978 = vmatpush1.xpose.msra.mxu0 0.0
    %1979 = vmatprep.subr.mxu0 0.0
    %1980 = vmatpush1.xpose.msra.mxu0 0.0
    %1981 = vmatprep.subr.mxu0 0.0
    %1982 = vmatpush1.xpose.msra.mxu0 0.0
    %1983 = vmatprep.subr.mxu0 0.0
    %1984 = vmatpush1.xpose.msra.mxu0 0.0
    %1985 = vmatprep.subr.mxu0 0.0
    %1986 = vmatpush1.xpose.msra.mxu0 0.0
    %1987 = vmatprep.subr.mxu0 0.0
    %1988 = vmatpush1.xpose.msra.mxu0 0.0
    %1989 = vmatprep.subr.mxu0 0.0
    %1990 = vmatpush1.xpose.msra.mxu0 0.0
    %1991 = vmatprep.subr.mxu0 0.0
    %1992 = vmatpush1.xpose.msra.mxu0 0.0
    %1993 = vmatprep.subr.mxu0 0.0
    %1994 = vmatpush1.xpose.msra.mxu0 0.0
    %1995 = vmatprep.subr.mxu0 0.0
    %1996 = vmatpush1.xpose.msra.mxu0 0.0
    %1997 = vmatprep.subr.mxu0 0.0
    %1998 = vmatpush1.xpose.msra.mxu0 0.0
    %1999 = vmatprep.subr.mxu0 0.0
    %2000 = vmatpush1.xpose.msra.mxu0 0.0
    %2001 = vmatprep.subr.mxu0 0.0
    %2002 = vmatpush1.xpose.msra.mxu0 0.0
    %2003 = vmatprep.subr.mxu0 0.0
    %2004 = vmatpush1.xpose.msra.mxu0 0.0
    %2005 = vmatprep.subr.mxu0 0.0
    %2006 = vmatpush1.xpose.msra.mxu0 0.0
    %2007 = vmatprep.subr.mxu0 0.0
    %2008 = vmatpush1.xpose.msra.mxu0 0.0
    %2009 = vmatprep.subr.mxu0 0.0
    %2010 = vmatpush1.xpose.msra.mxu0 0.0
    %2011 = vmatprep.subr.mxu0 0.0
    %2012 = vmatpush1.xpose.msra.mxu0 0.0
    %2013 = vmatprep.subr.mxu0 0.0
    %2014 = vmatpush1.xpose.msra.mxu0 0.0
    %2015 = vmatprep.subr.mxu0 0.0
    %2016 = vmatpush1.xpose.msra.mxu0 0.0
    %2017 = vmatprep.subr.mxu0 0.0
    %2018 = vmatpush1.xpose.msra.mxu0 0.0
    %2019 = vmatprep.subr.mxu0 0.0
    %2020 = vmatpush1.xpose.msra.mxu0 0.0
    %2021 = vmatprep.mubr.f32.mxu0 0.0
    %2022 = vmatmul.mubr.f32.gmra.mrb[0].mxu0 %v1949
    %v2023 = vpop.f32.mrb[0].mxu0
    %v2024 = vadd.f32 0.0, %v2023
    %v2025 = vpop.f32.mrb[0].mxu0
    %2026 = vmatprep.mubr.f32.mxu0 0.0
    %2027 = vmatmul.mubr.f32.gmra.mrb[0].mxu0 %v1951
    %v2028 = vpop.f32.mrb[0].mxu0
    %v2029 = vadd.f32 0.0, %v2028
    %v2030 = vpop.f32.mrb[0].mxu0
    %2031 = vdwg.mxu0
    %v2032 = vmul.f32 %v2024, 0.35355338
    %v2033 = vmul.f32 %v2029, 0.35355338
    %v2034 = vadd.f32 %v2032, %v219
    %v2035 = vadd.f32 %v2033, %v220
    %v2036 = vsel %vm397, %v2034, -inf
    %2037 = vmax.xlane.f32.xlu0 %v2036
    %v2038 = vpop.xlane.xlu0 %2037
    %v2039 = vsel %vm397, %v2035, -inf
    %2040 = vmax.xlane.f32.xlu0 %v2039
    %v2041 = vpop.xlane.xlu0 %2040
    %v2042 = vsub.f32 %v2034, %v2038
    %v2043 = vsub.f32 %v2035, %v2041
    %v2044 = vmul.f32 %v2042, 1.442695
    %v2045 = vpow.pop %v2044
    %v2046 = vmul.f32 %v2043, 1.442695
    %v2047 = vpow.pop %v2046
    %v2048 = vsel %vm397, %v2045, 0.0
    %2049 = vadd.xlane.f32.xlu0 %v2048
    %v2050 = vpop.xlane.xlu0 %2049
    %v2051 = vsel %vm397, %v2047, 0.0
    %2052 = vadd.xlane.f32.xlu0 %v2051
    %v2053 = vpop.xlane.xlu0 %2052
    %v2054 = vrcp.pop %v2050
    %v2055 = vrcp.pop %v2053
    %v2056 = vmul.f32 %v2045, %v2054
    %v2057 = vmul.f32 %v2047, %v2055
    %2058 = vrot.lane.b32.xlu0 %v1529, 48
    %v2059 = vpop.permute.xlu0 %2058
    %2060 = vrot.lane.b32.xlu0 %v1532, 48
    %v2061 = vpop.permute.xlu0 %2060
    %v2065 = vsel %vm397, %v2056, 0
    %v2068 = vsel %vm397, %v2057, 0
    %2070 = vmatprep.subr.mxu0 0.0
    %2071 = vmatpush1.msra.mxu0 %v2059
    %2072 = vmatprep.subr.mxu0 0.0
    %2073 = vmatpush1.msra.mxu0 %v2061
    %2074 = vmatprep.subr.mxu0 0.0
    %2075 = vmatpush1.msra.mxu0 0.0
    %2076 = vmatprep.subr.mxu0 0.0
    %2077 = vmatpush1.msra.mxu0 0.0
    %2078 = vmatprep.subr.mxu0 0.0
    %2079 = vmatpush1.msra.mxu0 0.0
    %2080 = vmatprep.subr.mxu0 0.0
    %2081 = vmatpush1.msra.mxu0 0.0
    %2082 = vmatprep.subr.mxu0 0.0
    %2083 = vmatpush1.msra.mxu0 0.0
    %2084 = vmatprep.subr.mxu0 0.0
    %2085 = vmatpush1.msra.mxu0 0.0
    %2086 = vmatprep.subr.mxu0 0.0
    %2087 = vmatpush1.msra.mxu0 0.0
    %2088 = vmatprep.subr.mxu0 0.0
    %2089 = vmatpush1.msra.mxu0 0.0
    %2090 = vmatprep.subr.mxu0 0.0
    %2091 = vmatpush1.msra.mxu0 0.0
    %2092 = vmatprep.subr.mxu0 0.0
    %2093 = vmatpush1.msra.mxu0 0.0
    %2094 = vmatprep.subr.mxu0 0.0
    %2095 = vmatpush1.msra.mxu0 0.0
    %2096 = vmatprep.subr.mxu0 0.0
    %2097 = vmatpush1.msra.mxu0 0.0
    %2098 = vmatprep.subr.mxu0 0.0
    %2099 = vmatpush1.msra.mxu0 0.0
    %2100 = vmatprep.subr.mxu0 0.0
    %2101 = vmatpush1.msra.mxu0 0.0
    %2102 = vmatprep.subr.mxu0 0.0
    %2103 = vmatpush1.msra.mxu0 0.0
    %2104 = vmatprep.subr.mxu0 0.0
    %2105 = vmatpush1.msra.mxu0 0.0
    %2106 = vmatprep.subr.mxu0 0.0
    %2107 = vmatpush1.msra.mxu0 0.0
    %2108 = vmatprep.subr.mxu0 0.0
    %2109 = vmatpush1.msra.mxu0 0.0
    %2110 = vmatprep.subr.mxu0 0.0
    %2111 = vmatpush1.msra.mxu0 0.0
    %2112 = vmatprep.subr.mxu0 0.0
    %2113 = vmatpush1.msra.mxu0 0.0
    %2114 = vmatprep.subr.mxu0 0.0
    %2115 = vmatpush1.msra.mxu0 0.0
    %2116 = vmatprep.subr.mxu0 0.0
    %2117 = vmatpush1.msra.mxu0 0.0
    %2118 = vmatprep.subr.mxu0 0.0
    %2119 = vmatpush1.msra.mxu0 0.0
    %2120 = vmatprep.subr.mxu0 0.0
    %2121 = vmatpush1.msra.mxu0 0.0
    %2122 = vmatprep.subr.mxu0 0.0
    %2123 = vmatpush1.msra.mxu0 0.0
    %2124 = vmatprep.subr.mxu0 0.0
    %2125 = vmatpush1.msra.mxu0 0.0
    %2126 = vmatprep.subr.mxu0 0.0
    %2127 = vmatpush1.msra.mxu0 0.0
    %2128 = vmatprep.subr.mxu0 0.0
    %2129 = vmatpush1.msra.mxu0 0.0
    %2130 = vmatprep.subr.mxu0 0.0
    %2131 = vmatpush1.msra.mxu0 0.0
    %2132 = vmatprep.subr.mxu0 0.0
    %2133 = vmatpush1.msra.mxu0 0.0
    %2134 = vmatprep.mubr.f32.mxu0 0.0
    %2135 = vmatmul.mubr.f32.gmra.mrb[0].mxu0 %v2065
    %v2136 = vpop.f32.mrb[0].mxu0
    %v2137 = vadd.f32 0.0, %v2136
    %v2138 = vpop.f32.mrb[0].mxu0
    %2139 = vmatprep.mubr.f32.mxu0 0.0
    %2140 = vmatmul.mubr.f32.gmra.mrb[0].mxu0 %v2068
    %v2141 = vpop.f32.mrb[0].mxu0
    %v2142 = vadd.f32 0.0, %v2141
    %v2143 = vpop.f32.mrb[0].mxu0
    %2144 = vdwg.mxu0
    %2145 = vrot.lane.b32.xlu0 %v1529, 104
    %v2146 = vpop.permute.xlu0 %2145
    %2147 = vrot.lane.b32.xlu0 %v1532, 104
    %v2148 = vpop.permute.xlu0 %2147
    %2149 = vrot.lane.b32.xlu0 %v1529, 72
    %v2150 = vpop.permute.xlu0 %2149
    %2151 = vrot.lane.b32.xlu0 %v1532, 72
    %v2152 = vpop.permute.xlu0 %2151
    %v2153 = vsel %vm309, %v2146, 0
    %v2155 = vsel %vm309, %v2148, 0
    %v2157 = vsel %vm309, %v2150, 0
    %v2159 = vsel %vm309, %v2152, 0
    %2161 = vmatprep.subr.mxu0 0.0
    %2162 = vmatpush1.xpose.msra.mxu0 %v2157
    %2163 = vmatprep.subr.mxu0 0.0
    %2164 = vmatpush1.xpose.msra.mxu0 %v2159
    %2165 = vmatprep.subr.mxu0 0.0
    %2166 = vmatpush1.xpose.msra.mxu0 0.0
    %2167 = vmatprep.subr.mxu0 0.0
    %2168 = vmatpush1.xpose.msra.mxu0 0.0
    %2169 = vmatprep.subr.mxu0 0.0
    %2170 = vmatpush1.xpose.msra.mxu0 0.0
    %2171 = vmatprep.subr.mxu0 0.0
    %2172 = vmatpush1.xpose.msra.mxu0 0.0
    %2173 = vmatprep.subr.mxu0 0.0
    %2174 = vmatpush1.xpose.msra.mxu0 0.0
    %2175 = vmatprep.subr.mxu0 0.0
    %2176 = vmatpush1.xpose.msra.mxu0 0.0
    %2177 = vmatprep.subr.mxu0 0.0
    %2178 = vmatpush1.xpose.msra.mxu0 0.0
    %2179 = vmatprep.subr.mxu0 0.0
    %2180 = vmatpush1.xpose.msra.mxu0 0.0
    %2181 = vmatprep.subr.mxu0 0.0
    %2182 = vmatpush1.xpose.msra.mxu0 0.0
    %2183 = vmatprep.subr.mxu0 0.0
    %2184 = vmatpush1.xpose.msra.mxu0 0.0
    %2185 = vmatprep.subr.mxu0 0.0
    %2186 = vmatpush1.xpose.msra.mxu0 0.0
    %2187 = vmatprep.subr.mxu0 0.0
    %2188 = vmatpush1.xpose.msra.mxu0 0.0
    %2189 = vmatprep.subr.mxu0 0.0
    %2190 = vmatpush1.xpose.msra.mxu0 0.0
    %2191 = vmatprep.subr.mxu0 0.0
    %2192 = vmatpush1.xpose.msra.mxu0 0.0
    %2193 = vmatprep.subr.mxu0 0.0
    %2194 = vmatpush1.xpose.msra.mxu0 0.0
    %2195 = vmatprep.subr.mxu0 0.0
    %2196 = vmatpush1.xpose.msra.mxu0 0.0
    %2197 = vmatprep.subr.mxu0 0.0
    %2198 = vmatpush1.xpose.msra.mxu0 0.0
    %2199 = vmatprep.subr.mxu0 0.0
    %2200 = vmatpush1.xpose.msra.mxu0 0.0
    %2201 = vmatprep.subr.mxu0 0.0
    %2202 = vmatpush1.xpose.msra.mxu0 0.0
    %2203 = vmatprep.subr.mxu0 0.0
    %2204 = vmatpush1.xpose.msra.mxu0 0.0
    %2205 = vmatprep.subr.mxu0 0.0
    %2206 = vmatpush1.xpose.msra.mxu0 0.0
    %2207 = vmatprep.subr.mxu0 0.0
    %2208 = vmatpush1.xpose.msra.mxu0 0.0
    %2209 = vmatprep.subr.mxu0 0.0
    %2210 = vmatpush1.xpose.msra.mxu0 0.0
    %2211 = vmatprep.subr.mxu0 0.0
    %2212 = vmatpush1.xpose.msra.mxu0 0.0
    %2213 = vmatprep.subr.mxu0 0.0
    %2214 = vmatpush1.xpose.msra.mxu0 0.0
    %2215 = vmatprep.subr.mxu0 0.0
    %2216 = vmatpush1.xpose.msra.mxu0 0.0
    %2217 = vmatprep.subr.mxu0 0.0
    %2218 = vmatpush1.xpose.msra.mxu0 0.0
    %2219 = vmatprep.subr.mxu0 0.0
    %2220 = vmatpush1.xpose.msra.mxu0 0.0
    %2221 = vmatprep.subr.mxu0 0.0
    %2222 = vmatpush1.xpose.msra.mxu0 0.0
    %2223 = vmatprep.subr.mxu0 0.0
    %2224 = vmatpush1.xpose.msra.mxu0 0.0
    %2225 = vmatprep.mubr.f32.mxu0 0.0
    %2226 = vmatmul.mubr.f32.gmra.mrb[0].mxu0 %v2153
    %v2227 = vpop.f32.mrb[0].mxu0
    %v2228 = vadd.f32 0.0, %v2227
    %v2229 = vpop.f32.mrb[0].mxu0
    %2230 = vmatprep.mubr.f32.mxu0 0.0
    %2231 = vmatmul.mubr.f32.gmra.mrb[0].mxu0 %v2155
    %v2232 = vpop.f32.mrb[0].mxu0
    %v2233 = vadd.f32 0.0, %v2232
    %v2234 = vpop.f32.mrb[0].mxu0
    %2235 = vdwg.mxu0
    %v2236 = vmul.f32 %v2228, 0.35355338
    %v2237 = vmul.f32 %v2233, 0.35355338
    %v2238 = vadd.f32 %v2236, %v219
    %v2239 = vadd.f32 %v2237, %v220
    %v2240 = vsel %vm397, %v2238, -inf
    %2241 = vmax.xlane.f32.xlu0 %v2240
    %v2242 = vpop.xlane.xlu0 %2241
    %v2243 = vsel %vm397, %v2239, -inf
    %2244 = vmax.xlane.f32.xlu0 %v2243
    %v2245 = vpop.xlane.xlu0 %2244
    %v2246 = vsub.f32 %v2238, %v2242
    %v2247 = vsub.f32 %v2239, %v2245
    %v2248 = vmul.f32 %v2246, 1.442695
    %v2249 = vpow.pop %v2248
    %v2250 = vmul.f32 %v2247, 1.442695
    %v2251 = vpow.pop %v2250
    %v2252 = vsel %vm397, %v2249, 0.0
    %2253 = vadd.xlane.f32.xlu0 %v2252
    %v2254 = vpop.xlane.xlu0 %2253
    %v2255 = vsel %vm397, %v2251, 0.0
    %2256 = vadd.xlane.f32.xlu0 %v2255
    %v2257 = vpop.xlane.xlu0 %2256
    %v2258 = vrcp.pop %v2254
    %v2259 = vrcp.pop %v2257
    %v2260 = vmul.f32 %v2249, %v2258
    %v2261 = vmul.f32 %v2251, %v2259
    %2262 = vrot.lane.b32.xlu0 %v1529, 40
    %v2263 = vpop.permute.xlu0 %2262
    %2264 = vrot.lane.b32.xlu0 %v1532, 40
    %v2265 = vpop.permute.xlu0 %2264
    %v2269 = vsel %vm397, %v2260, 0
    %v2272 = vsel %vm397, %v2261, 0
    %2274 = vmatprep.subr.mxu0 0.0
    %2275 = vmatpush1.msra.mxu0 %v2263
    %2276 = vmatprep.subr.mxu0 0.0
    %2277 = vmatpush1.msra.mxu0 %v2265
    %2278 = vmatprep.subr.mxu0 0.0
    %2279 = vmatpush1.msra.mxu0 0.0
    %2280 = vmatprep.subr.mxu0 0.0
    %2281 = vmatpush1.msra.mxu0 0.0
    %2282 = vmatprep.subr.mxu0 0.0
    %2283 = vmatpush1.msra.mxu0 0.0
    %2284 = vmatprep.subr.mxu0 0.0
    %2285 = vmatpush1.msra.mxu0 0.0
    %2286 = vmatprep.subr.mxu0 0.0
    %2287 = vmatpush1.msra.mxu0 0.0
    %2288 = vmatprep.subr.mxu0 0.0
    %2289 = vmatpush1.msra.mxu0 0.0
    %2290 = vmatprep.subr.mxu0 0.0
    %2291 = vmatpush1.msra.mxu0 0.0
    %2292 = vmatprep.subr.mxu0 0.0
    %2293 = vmatpush1.msra.mxu0 0.0
    %2294 = vmatprep.subr.mxu0 0.0
    %2295 = vmatpush1.msra.mxu0 0.0
    %2296 = vmatprep.subr.mxu0 0.0
    %2297 = vmatpush1.msra.mxu0 0.0
    %2298 = vmatprep.subr.mxu0 0.0
    %2299 = vmatpush1.msra.mxu0 0.0
    %2300 = vmatprep.subr.mxu0 0.0
    %2301 = vmatpush1.msra.mxu0 0.0
    %2302 = vmatprep.subr.mxu0 0.0
    %2303 = vmatpush1.msra.mxu0 0.0
    %2304 = vmatprep.subr.mxu0 0.0
    %2305 = vmatpush1.msra.mxu0 0.0
    %2306 = vmatprep.subr.mxu0 0.0
    %2307 = vmatpush1.msra.mxu0 0.0
    %2308 = vmatprep.subr.mxu0 0.0
    %2309 = vmatpush1.msra.mxu0 0.0
    %2310 = vmatprep.subr.mxu0 0.0
    %2311 = vmatpush1.msra.mxu0 0.0
    %2312 = vmatprep.subr.mxu0 0.0
    %2313 = vmatpush1.msra.mxu0 0.0
    %2314 = vmatprep.subr.mxu0 0.0
    %2315 = vmatpush1.msra.mxu0 0.0
    %2316 = vmatprep.subr.mxu0 0.0
    %2317 = vmatpush1.msra.mxu0 0.0
    %2318 = vmatprep.subr.mxu0 0.0
    %2319 = vmatpush1.msra.mxu0 0.0
    %2320 = vmatprep.subr.mxu0 0.0
    %2321 = vmatpush1.msra.mxu0 0.0
    %2322 = vmatprep.subr.mxu0 0.0
    %2323 = vmatpush1.msra.mxu0 0.0
    %2324 = vmatprep.subr.mxu0 0.0
    %2325 = vmatpush1.msra.mxu0 0.0
    %2326 = vmatprep.subr.mxu0 0.0
    %2327 = vmatpush1.msra.mxu0 0.0
    %2328 = vmatprep.subr.mxu0 0.0
    %2329 = vmatpush1.msra.mxu0 0.0
    %2330 = vmatprep.subr.mxu0 0.0
    %2331 = vmatpush1.msra.mxu0 0.0
    %2332 = vmatprep.subr.mxu0 0.0
    %2333 = vmatpush1.msra.mxu0 0.0
    %2334 = vmatprep.subr.mxu0 0.0
    %2335 = vmatpush1.msra.mxu0 0.0
    %2336 = vmatprep.subr.mxu0 0.0
    %2337 = vmatpush1.msra.mxu0 0.0
    %2338 = vmatprep.mubr.f32.mxu0 0.0
    %2339 = vmatmul.mubr.f32.gmra.mrb[0].mxu0 %v2269
    %v2340 = vpop.f32.mrb[0].mxu0
    %v2341 = vadd.f32 0.0, %v2340
    %v2342 = vpop.f32.mrb[0].mxu0
    %2343 = vmatprep.mubr.f32.mxu0 0.0
    %2344 = vmatmul.mubr.f32.gmra.mrb[0].mxu0 %v2272
    %v2345 = vpop.f32.mrb[0].mxu0
    %v2346 = vadd.f32 0.0, %v2345
    %v2347 = vpop.f32.mrb[0].mxu0
    %2348 = vdwg.mxu0
    %2351 = vrot.lane.b32.xlu0 %v1933, 8
    %v2352 = vpop.permute.xlu0 %2351
    %2353 = vrot.lane.b32.xlu0 %v1938, 8
    %v2354 = vpop.permute.xlu0 %2353
    %2359 = vrot.lane.b32.xlu0 %v2137, 16
    %v2360 = vpop.permute.xlu0 %2359
    %2361 = vrot.lane.b32.xlu0 %v2142, 16
    %v2362 = vpop.permute.xlu0 %2361
    %2367 = vrot.lane.b32.xlu0 %v2341, 24
    %v2368 = vpop.permute.xlu0 %2367
    %2369 = vrot.lane.b32.xlu0 %v2346, 24
    %v2370 = vpop.permute.xlu0 %2369
    %v2373 = vsel %vm309, %v1729, %v2352
    %v2374 = vsel %vm309, %v1734, %v2354
    %v2375 = vsel %vm397, %v2373, %v2360
    %v2376 = vsel %vm397, %v2374, %v2362
    %v2377 = vsel %vm1147, %v2375, %v2368
    %v2378 = vsel %vm1147, %v2376, %v2370
    %v2379 = vpack.c.bf16 %v2378, %v2377
    %v2380 = vld [vmem:[%s1473 + $0x1] sm:$0x1]
    %v2381 = vlaneseq
    %v2382 = vshrl.u32 %v2381, 7
    %v2383 = vsub.s32 0, %v2382
    %v2384 = vrot.slane %v2380, %v2383
    %v2389 = vunpack.c.l.b16 %v1456
    %v2390 = vunpack.c.l.b16 %v1457
    %v2391 = vunpack.c.l.b16 %v1458
    %v2392 = vunpack.c.l.b16 %v1459
    %v2393 = vpack.c.b16 %v2390, %v2389
    %v2394 = vpack.c.b16 %v2392, %v2391
    %v2398 = vsel %vm179, %v2379, 0
    %2400 = vmatprep.subr.bf16.mxu0 0
    %2401 = vmatpush1.bf16.msra.mxu0 %v2393
    %2402 = vmatprep.subr.bf16.mxu0 0
    %2403 = vmatpush1.bf16.msra.mxu0 %v2394
    %2404 = vmatprep.subr.bf16.mxu0 0
    %2405 = vmatpush1.bf16.msra.mxu0 0
    %2406 = vmatprep.subr.bf16.mxu0 0
    %2407 = vmatpush1.bf16.msra.mxu0 0
    %2408 = vmatprep.subr.bf16.mxu0 0
    %2409 = vmatpush1.bf16.msra.mxu0 0
    %2410 = vmatprep.subr.bf16.mxu0 0
    %2411 = vmatpush1.bf16.msra.mxu0 0
    %2412 = vmatprep.subr.bf16.mxu0 0
    %2413 = vmatpush1.bf16.msra.mxu0 0
    %2414 = vmatprep.subr.bf16.mxu0 0
    %2415 = vmatpush1.bf16.msra.mxu0 0
    %2416 = vmatprep.subr.bf16.mxu0 0
    %2417 = vmatpush1.bf16.msra.mxu0 0
    %2418 = vmatprep.subr.bf16.mxu0 0
    %2419 = vmatpush1.bf16.msra.mxu0 0
    %2420 = vmatprep.subr.bf16.mxu0 0
    %2421 = vmatpush1.bf16.msra.mxu0 0
    %2422 = vmatprep.subr.bf16.mxu0 0
    %2423 = vmatpush1.bf16.msra.mxu0 0
    %2424 = vmatprep.subr.bf16.mxu0 0
    %2425 = vmatpush1.bf16.msra.mxu0 0
    %2426 = vmatprep.subr.bf16.mxu0 0
    %2427 = vmatpush1.bf16.msra.mxu0 0
    %2428 = vmatprep.subr.bf16.mxu0 0
    %2429 = vmatpush1.bf16.msra.mxu0 0
    %2430 = vmatprep.subr.bf16.mxu0 0
    %2431 = vmatpush1.bf16.msra.mxu0 0
    %2432 = vmatprep.mubr.bf16.mxu0 0
    %2433 = vmatmul.mubr.bf16.gmra.mrb[0].mxu0 %v2398
    %v2434 = vpop.f32.mrb[0].mxu0
    %v2435 = vadd.f32 %v2384, %v2434
    %v2436 = vpop.f32.mrb[0].mxu0
    %v2437 = vpop.f32.mrb[0].mxu0
    %v2438 = vadd.f32 %v2384, %v2437
    %v2439 = vpop.f32.mrb[0].mxu0
    %2440 = vdwg.mxu0
    %v2441 = vadd.f32 %v1449, %v2435
    %v2442 = vadd.f32 %v1450, %v2438
    %v2443 = vld [vmem:[%s1473 + $0x2] sm:$0x1]
    %v2444 = vld [vmem:[%s1473 + $0x3] sm:$0x1]
    %v2445 = vsel %vm179, %v2441, 0.0
    %2446 = vadd.xlane.f32.xlu0 %v2445
    %v2447 = vpop.xlane.xlu0 %2446
    %v2448 = vsel %vm179, %v2442, 0.0
    %2449 = vadd.xlane.f32.xlu0 %v2448
    %v2450 = vpop.xlane.xlu0 %2449
    %v2451 = vmul.f32 %v2447, %v186
    %v2452 = vmul.f32 %v2450, %v186
    %v2453 = vsub.f32 %v2441, %v2451
    %v2454 = vsub.f32 %v2442, %v2452
    %v2455 = vmul.f32 %v2453, %v2453
    %v2456 = vmul.f32 %v2454, %v2454
    %v2457 = vsel %vm179, %v2455, 0.0
    %2458 = vadd.xlane.f32.xlu0 %v2457
    %v2459 = vpop.xlane.xlu0 %2458
    %v2460 = vsel %vm179, %v2456, 0.0
    %2461 = vadd.xlane.f32.xlu0 %v2460
    %v2462 = vpop.xlane.xlu0 %2461
    %v2463 = vmul.f32 %v2459, %v186
    %v2464 = vmul.f32 %v2462, %v186
    %v2465 = vadd.f32 %v2463, 1e-12
    %v2466 = vadd.f32 %v2464, 1e-12
    %v2467 = vrsqrt.pop %v2465
    %v2468 = vrsqrt.pop %v2466
    %v2469 = vmul.f32 %v2453, %v2467
    %v2470 = vmul.f32 %v2454, %v2468
    %v2471 = vlaneseq
    %v2472 = vshrl.u32 %v2471, 7
    %v2473 = vsub.s32 0, %v2472
    %v2474 = vrot.slane %v2443, %v2473
    %v2475 = vmul.f32 %v2469, %v2474
    %v2476 = vmul.f32 %v2470, %v2474
    %v2477 = vlaneseq
    %v2478 = vshrl.u32 %v2477, 7
    %v2479 = vsub.s32 0, %v2478
    %v2480 = vrot.slane %v2444, %v2479
    %v2481 = vadd.f32 %v2475, %v2480
    %v2482 = vadd.f32 %v2476, %v2480
    %v2483 = vpack.c.bf16 %v2482, %v2481
    %v2484 = vld [vmem:[%s1473 + $0x4] sm:$0x1]
    %v2485 = vlaneseq
    %v2486 = vshrl.u32 %v2485, 7
    %v2487 = vsub.s32 0, %v2486
    %v2488 = vrot.slane %v2484, %v2487
    %v2493 = vunpack.c.l.b16 %v1460
    %v2494 = vunpack.c.l.b16 %v1461
    %v2495 = vunpack.c.l.b16 %v1462
    %v2496 = vunpack.c.l.b16 %v1463
    %v2497 = vpack.c.b16 %v2494, %v2493
    %v2498 = vpack.c.b16 %v2496, %v2495
    %v2502 = vsel %vm179, %v2483, 0
    %2504 = vmatprep.subr.bf16.mxu0 0
    %2505 = vmatpush1.bf16.msra.mxu0 %v2497
    %2506 = vmatprep.subr.bf16.mxu0 0
    %2507 = vmatpush1.bf16.msra.mxu0 %v2498
    %2508 = vmatprep.subr.bf16.mxu0 0
    %2509 = vmatpush1.bf16.msra.mxu0 0
    %2510 = vmatprep.subr.bf16.mxu0 0
    %2511 = vmatpush1.bf16.msra.mxu0 0
    %2512 = vmatprep.subr.bf16.mxu0 0
    %2513 = vmatpush1.bf16.msra.mxu0 0
    %2514 = vmatprep.subr.bf16.mxu0 0
    %2515 = vmatpush1.bf16.msra.mxu0 0
    %2516 = vmatprep.subr.bf16.mxu0 0
    %2517 = vmatpush1.bf16.msra.mxu0 0
    %2518 = vmatprep.subr.bf16.mxu0 0
    %2519 = vmatpush1.bf16.msra.mxu0 0
    %2520 = vmatprep.subr.bf16.mxu0 0
    %2521 = vmatpush1.bf16.msra.mxu0 0
    %2522 = vmatprep.subr.bf16.mxu0 0
    %2523 = vmatpush1.bf16.msra.mxu0 0
    %2524 = vmatprep.subr.bf16.mxu0 0
    %2525 = vmatpush1.bf16.msra.mxu0 0
    %2526 = vmatprep.subr.bf16.mxu0 0
    %2527 = vmatpush1.bf16.msra.mxu0 0
    %2528 = vmatprep.subr.bf16.mxu0 0
    %2529 = vmatpush1.bf16.msra.mxu0 0
    %2530 = vmatprep.subr.bf16.mxu0 0
    %2531 = vmatpush1.bf16.msra.mxu0 0
    %2532 = vmatprep.subr.bf16.mxu0 0
    %2533 = vmatpush1.bf16.msra.mxu0 0
    %2534 = vmatprep.subr.bf16.mxu0 0
    %2535 = vmatpush1.bf16.msra.mxu0 0
    %2536 = vmatprep.mubr.bf16.mxu0 0
    %2537 = vmatmul.mubr.bf16.gmra.mrb[0].mxu0 %v2502
    %v2538 = vpop.f32.mrb[0].mxu0
    %v2539 = vadd.f32 %v2488, %v2538
    %v2540 = vpop.f32.mrb[0].mxu0
    %v2541 = vpop.f32.mrb[0].mxu0
    %v2542 = vadd.f32 %v2488, %v2541
    %v2543 = vpop.f32.mrb[0].mxu0
    %2544 = vdwg.mxu0
    %v2545 = vmul.f32 %v2539, %v2539
    %v2546 = vmul.f32 %v2542, %v2542
    %v2547 = vmul.f32 %v2539, %v2545
    %v2548 = vmul.f32 %v2542, %v2546
    %v2549 = vmul.f32 %v2547, 0.044715
    %v2550 = vmul.f32 %v2548, 0.044715
    %v2551 = vadd.f32 %v2539, %v2549
    %v2552 = vadd.f32 %v2542, %v2550
    %v2553 = vmul.f32 %v2551, 0.7978846
    %v2554 = vmul.f32 %v2552, 0.7978846
    %v2555 = vtanh.pop %v2553
    %v2556 = vtanh.pop %v2554
    %v2557 = vadd.f32 %v2555, 1.0
    %v2558 = vadd.f32 %v2556, 1.0
    %v2559 = vmul.f32 %v2557, 0.5
    %v2560 = vmul.f32 %v2558, 0.5
    %v2561 = vmul.f32 %v2539, %v2559
    %v2562 = vmul.f32 %v2542, %v2560
    %v2563 = vpack.c.bf16 %v2562, %v2561
    %v2564 = vld [vmem:[%s1473 + $0x5] sm:$0x1]
    %v2565 = vlaneseq
    %v2566 = vshrl.u32 %v2565, 7
    %v2567 = vsub.s32 0, %v2566
    %v2568 = vrot.slane %v2564, %v2567
    %v2577 = vunpack.c.l.b16 %v1464
    %v2578 = vunpack.c.l.b16 %v1465
    %v2579 = vunpack.c.l.b16 %v1466
    %v2580 = vunpack.c.l.b16 %v1467
    %v2581 = vunpack.c.l.b16 %v1468
    %v2582 = vunpack.c.l.b16 %v1469
    %v2583 = vunpack.c.l.b16 %v1470
    %v2584 = vunpack.c.l.b16 %v1471
    %v2585 = vpack.c.b16 %v2578, %v2577
    %v2586 = vpack.c.b16 %v2580, %v2579
    %v2587 = vpack.c.b16 %v2582, %v2581
    %v2588 = vpack.c.b16 %v2584, %v2583
    %v2594 = vsel %vm1364, %v2563, 0
    %2596 = vmatprep.subr.bf16.mxu0 0
    %2597 = vmatpush1.bf16.msra.mxu0 %v2585
    %2598 = vmatprep.subr.bf16.mxu0 0
    %2599 = vmatpush1.bf16.msra.mxu0 %v2586
    %2600 = vmatprep.subr.bf16.mxu0 0
    %2601 = vmatpush1.bf16.msra.mxu0 %v2587
    %2602 = vmatprep.subr.bf16.mxu0 0
    %2603 = vmatpush1.bf16.msra.mxu0 %v2588
    %2604 = vmatprep.subr.bf16.mxu0 0
    %2605 = vmatpush1.bf16.msra.mxu0 0
    %2606 = vmatprep.subr.bf16.mxu0 0
    %2607 = vmatpush1.bf16.msra.mxu0 0
    %2608 = vmatprep.subr.bf16.mxu0 0
    %2609 = vmatpush1.bf16.msra.mxu0 0
    %2610 = vmatprep.subr.bf16.mxu0 0
    %2611 = vmatpush1.bf16.msra.mxu0 0
    %2612 = vmatprep.subr.bf16.mxu0 0
    %2613 = vmatpush1.bf16.msra.mxu0 0
    %2614 = vmatprep.subr.bf16.mxu0 0
    %2615 = vmatpush1.bf16.msra.mxu0 0
    %2616 = vmatprep.subr.bf16.mxu0 0
    %2617 = vmatpush1.bf16.msra.mxu0 0
    %2618 = vmatprep.subr.bf16.mxu0 0
    %2619 = vmatpush1.bf16.msra.mxu0 0
    %2620 = vmatprep.subr.bf16.mxu0 0
    %2621 = vmatpush1.bf16.msra.mxu0 0
    %2622 = vmatprep.subr.bf16.mxu0 0
    %2623 = vmatpush1.bf16.msra.mxu0 0
    %2624 = vmatprep.subr.bf16.mxu0 0
    %2625 = vmatpush1.bf16.msra.mxu0 0
    %2626 = vmatprep.subr.bf16.mxu0 0
    %2627 = vmatpush1.bf16.msra.mxu0 0
    %2628 = vmatprep.mubr.bf16.mxu0 0
    %2629 = vmatmul.mubr.bf16.gmra.mrb[0].mxu0 %v2594
    %v2630 = vpop.f32.mrb[0].mxu0
    %v2631 = vadd.f32 %v2568, %v2630
    %v2632 = vpop.f32.mrb[0].mxu0
    %v2633 = vpop.f32.mrb[0].mxu0
    %v2634 = vadd.f32 %v2568, %v2633
    %v2635 = vpop.f32.mrb[0].mxu0
    %2636 = vdwg.mxu0
    %v2637 = vadd.f32 %v2481, %v2631
    %v2638 = vadd.f32 %v2482, %v2634
    %v2639 = vld [vmem:[%s1473 + $0x6] sm:$0x1]
    %v2640 = vld [vmem:[%s1473 + $0x7] sm:$0x1]
    %v2641 = vsel %vm179, %v2637, 0.0
    %2642 = vadd.xlane.f32.xlu0 %v2641
    %v2643 = vpop.xlane.xlu0 %2642
    %v2644 = vsel %vm179, %v2638, 0.0
    %2645 = vadd.xlane.f32.xlu0 %v2644
    %v2646 = vpop.xlane.xlu0 %2645
    %v2647 = vmul.f32 %v2643, %v186
    %v2648 = vmul.f32 %v2646, %v186
    %v2649 = vsub.f32 %v2637, %v2647
    %v2650 = vsub.f32 %v2638, %v2648
    %v2651 = vmul.f32 %v2649, %v2649
    %v2652 = vmul.f32 %v2650, %v2650
    %v2653 = vsel %vm179, %v2651, 0.0
    %2654 = vadd.xlane.f32.xlu0 %v2653
    %v2655 = vpop.xlane.xlu0 %2654
    %v2656 = vsel %vm179, %v2652, 0.0
    %2657 = vadd.xlane.f32.xlu0 %v2656
    %v2658 = vpop.xlane.xlu0 %2657
    %v2659 = vmul.f32 %v2655, %v186
    %v2660 = vmul.f32 %v2658, %v186
    %v2661 = vadd.f32 %v2659, 1e-12
    %v2662 = vadd.f32 %v2660, 1e-12
    %v2663 = vrsqrt.pop %v2661
    %v2664 = vrsqrt.pop %v2662
    %v2665 = vmul.f32 %v2649, %v2663
    %v2666 = vmul.f32 %v2650, %v2664
    %v2667 = vlaneseq
    %v2668 = vshrl.u32 %v2667, 7
    %v2669 = vsub.s32 0, %v2668
    %v2670 = vrot.slane %v2639, %v2669
    %v2671 = vmul.f32 %v2665, %v2670
    %v2672 = vmul.f32 %v2666, %v2670
    %v2673 = vlaneseq
    %v2674 = vshrl.u32 %v2673, 7
    %v2675 = vsub.s32 0, %v2674
    %v2676 = vrot.slane %v2640, %v2675
    %v2677 = vadd.f32 %v2671, %v2676
    %v2678 = vadd.f32 %v2672, %v2676
    %v2679 = vld [vmem:[#allocation5 + $0x40] sm:$0xf]
    %v2680 = vld [vmem:[#allocation5 + $0x44] sm:$0xf]
    %v2681 = vld [vmem:[#allocation5 + $0x48] sm:$0xf]
    %v2682 = vld [vmem:[#allocation5 + $0x4c] sm:$0xf]
    %v2683 = vpack.c.bf16 %v2678, %v2677
    %v2684 = vld [vmem:[%s5 + $0x12] sm:$0x1]
    %v2685 = vlaneseq
    %v2686 = vshrl.u32 %v2685, 7
    %v2687 = vsub.s32 0, %v2686
    %v2688 = vrot.slane %v2684, %v2687
    %v2693 = vunpack.c.l.b16 %v2679
    %v2694 = vunpack.c.l.b16 %v2680
    %v2695 = vunpack.c.l.b16 %v2681
    %v2696 = vunpack.c.l.b16 %v2682
    %v2697 = vpack.c.b16 %v2694, %v2693
    %v2698 = vpack.c.b16 %v2696, %v2695
    %v2702 = vsel %vm179, %v2683, 0
    %2704 = vmatprep.subr.bf16.mxu0 0
    %2705 = vmatpush1.bf16.msra.mxu0 %v2697
    %2706 = vmatprep.subr.bf16.mxu0 0
    %2707 = vmatpush1.bf16.msra.mxu0 %v2698
    %2708 = vmatprep.subr.bf16.mxu0 0
    %2709 = vmatpush1.bf16.msra.mxu0 0
    %2710 = vmatprep.subr.bf16.mxu0 0
    %2711 = vmatpush1.bf16.msra.mxu0 0
    %2712 = vmatprep.subr.bf16.mxu0 0
    %2713 = vmatpush1.bf16.msra.mxu0 0
    %2714 = vmatprep.subr.bf16.mxu0 0
    %2715 = vmatpush1.bf16.msra.mxu0 0
    %2716 = vmatprep.subr.bf16.mxu0 0
    %2717 = vmatpush1.bf16.msra.mxu0 0
    %2718 = vmatprep.subr.bf16.mxu0 0
    %2719 = vmatpush1.bf16.msra.mxu0 0
    %2720 = vmatprep.subr.bf16.mxu0 0
    %2721 = vmatpush1.bf16.msra.mxu0 0
    %2722 = vmatprep.subr.bf16.mxu0 0
    %2723 = vmatpush1.bf16.msra.mxu0 0
    %2724 = vmatprep.subr.bf16.mxu0 0
    %2725 = vmatpush1.bf16.msra.mxu0 0
    %2726 = vmatprep.subr.bf16.mxu0 0
    %2727 = vmatpush1.bf16.msra.mxu0 0
    %2728 = vmatprep.subr.bf16.mxu0 0
    %2729 = vmatpush1.bf16.msra.mxu0 0
    %2730 = vmatprep.subr.bf16.mxu0 0
    %2731 = vmatpush1.bf16.msra.mxu0 0
    %2732 = vmatprep.subr.bf16.mxu0 0
    %2733 = vmatpush1.bf16.msra.mxu0 0
    %2734 = vmatprep.subr.bf16.mxu0 0
    %2735 = vmatpush1.bf16.msra.mxu0 0
    %2736 = vmatprep.mubr.bf16.mxu0 0
    %2737 = vmatmul.mubr.bf16.gmra.mrb[0].mxu0 %v2702
    %v2738 = vpop.f32.mrb[0].mxu0
    %v2739 = vadd.f32 %v2688, %v2738
    %v2740 = vpop.f32.mrb[0].mxu0
    %v2741 = vpop.f32.mrb[0].mxu0
    %v2742 = vadd.f32 %v2688, %v2741
    %v2743 = vpop.f32.mrb[0].mxu0
    %2744 = vdwg.mxu0
    %v2745 = vmul.f32 %v2739, %v2739
    %v2746 = vmul.f32 %v2742, %v2742
    %v2747 = vmul.f32 %v2739, %v2745
    %v2748 = vmul.f32 %v2742, %v2746
    %v2749 = vmul.f32 %v2747, 0.044715
    %v2750 = vmul.f32 %v2748, 0.044715
    %v2751 = vadd.f32 %v2739, %v2749
    %v2752 = vadd.f32 %v2742, %v2750
    %v2753 = vmul.f32 %v2751, 0.7978846
    %v2754 = vmul.f32 %v2752, 0.7978846
    %v2755 = vtanh.pop %v2753
    %v2756 = vtanh.pop %v2754
    %v2757 = vadd.f32 %v2755, 1.0
    %v2758 = vadd.f32 %v2756, 1.0
    %v2759 = vmul.f32 %v2757, 0.5
    %v2760 = vmul.f32 %v2758, 0.5
    %v2761 = vmul.f32 %v2739, %v2759
    %v2762 = vmul.f32 %v2742, %v2760
    %v2763 = vld [vmem:[%s5 + $0x13] sm:$0x1]
    %v2764 = vld [vmem:[%s5 + $0x14] sm:$0x1]
    %v2765 = vsel %vm179, %v2761, 0.0
    %2766 = vadd.xlane.f32.xlu0 %v2765
    %v2767 = vpop.xlane.xlu0 %2766
    %v2768 = vsel %vm179, %v2762, 0.0
    %2769 = vadd.xlane.f32.xlu0 %v2768
    %v2770 = vpop.xlane.xlu0 %2769
    %v2771 = vmul.f32 %v2767, %v186
    %v2772 = vmul.f32 %v2770, %v186
    %v2773 = vsub.f32 %v2761, %v2771
    %v2774 = vsub.f32 %v2762, %v2772
    %v2775 = vmul.f32 %v2773, %v2773
    %v2776 = vmul.f32 %v2774, %v2774
    %v2777 = vsel %vm179, %v2775, 0.0
    %2778 = vadd.xlane.f32.xlu0 %v2777
    %v2779 = vpop.xlane.xlu0 %2778
    %v2780 = vsel %vm179, %v2776, 0.0
    %2781 = vadd.xlane.f32.xlu0 %v2780
    %v2782 = vpop.xlane.xlu0 %2781
    %v2783 = vmul.f32 %v2779, %v186
    %v2784 = vmul.f32 %v2782, %v186
    %v2785 = vadd.f32 %v2783, 1e-12
    %v2786 = vadd.f32 %v2784, 1e-12
    %v2787 = vrsqrt.pop %v2785
    %v2788 = vrsqrt.pop %v2786
    %v2789 = vmul.f32 %v2773, %v2787
    %v2790 = vmul.f32 %v2774, %v2788
    %v2791 = vlaneseq
    %v2792 = vshrl.u32 %v2791, 7
    %v2793 = vsub.s32 0, %v2792
    %v2794 = vrot.slane %v2763, %v2793
    %v2795 = vmul.f32 %v2789, %v2794
    %v2796 = vmul.f32 %v2790, %v2794
    %v2797 = vlaneseq
    %v2798 = vshrl.u32 %v2797, 7
    %v2799 = vsub.s32 0, %v2798
    %v2800 = vrot.slane %v2764, %v2799
    %v2801 = vadd.f32 %v2795, %v2800
    %v2802 = vadd.f32 %v2796, %v2800
    %v2803 = vld [vmem:[#allocation5 + $0x50] sm:$0xf]
    %v2804 = vld [vmem:[#allocation5 + $0x54] sm:$0xf]
    %v2805 = vld [vmem:[#allocation5 + $0x58] sm:$0xf]
    %v2806 = vld [vmem:[#allocation5 + $0x5c] sm:$0xf]
    %v2807 = vpack.c.bf16 %v2802, %v2801
    %v2808 = vld [vmem:[%s5 + $0x15] sm:$0x1]
    %v2809 = vlaneseq
    %v2810 = vshrl.u32 %v2809, 7
    %v2811 = vsub.s32 0, %v2810
    %v2812 = vrot.slane %v2808, %v2811
    %v2817 = vunpack.c.l.b16 %v2803
    %v2818 = vunpack.c.l.b16 %v2804
    %v2819 = vunpack.c.l.b16 %v2805
    %v2820 = vunpack.c.l.b16 %v2806
    %v2821 = vpack.c.b16 %v2818, %v2817
    %v2822 = vpack.c.b16 %v2820, %v2819
    %v2826 = vsel %vm179, %v2807, 0
    %2828 = vmatprep.subr.bf16.mxu0 0
    %2829 = vmatpush1.bf16.msra.mxu0 %v2821
    %2830 = vmatprep.subr.bf16.mxu0 0
    %2831 = vmatpush1.bf16.msra.mxu0 %v2822
    %2832 = vmatprep.subr.bf16.mxu0 0
    %2833 = vmatpush1.bf16.msra.mxu0 0
    %2834 = vmatprep.subr.bf16.mxu0 0
    %2835 = vmatpush1.bf16.msra.mxu0 0
    %2836 = vmatprep.subr.bf16.mxu0 0
    %2837 = vmatpush1.bf16.msra.mxu0 0
    %2838 = vmatprep.subr.bf16.mxu0 0
    %2839 = vmatpush1.bf16.msra.mxu0 0
    %2840 = vmatprep.subr.bf16.mxu0 0
    %2841 = vmatpush1.bf16.msra.mxu0 0
    %2842 = vmatprep.subr.bf16.mxu0 0
    %2843 = vmatpush1.bf16.msra.mxu0 0
    %2844 = vmatprep.subr.bf16.mxu0 0
    %2845 = vmatpush1.bf16.msra.mxu0 0
    %2846 = vmatprep.subr.bf16.mxu0 0
    %2847 = vmatpush1.bf16.msra.mxu0 0
    %2848 = vmatprep.subr.bf16.mxu0 0
    %2849 = vmatpush1.bf16.msra.mxu0 0
    %2850 = vmatprep.subr.bf16.mxu0 0
    %2851 = vmatpush1.bf16.msra.mxu0 0
    %2852 = vmatprep.subr.bf16.mxu0 0
    %2853 = vmatpush1.bf16.msra.mxu0 0
    %2854 = vmatprep.subr.bf16.mxu0 0
    %2855 = vmatpush1.bf16.msra.mxu0 0
    %2856 = vmatprep.subr.bf16.mxu0 0
    %2857 = vmatpush1.bf16.msra.mxu0 0
    %2858 = vmatprep.subr.bf16.mxu0 0
    %2859 = vmatpush1.bf16.msra.mxu0 0
    %2860 = vmatprep.mubr.bf16.mxu0 0
    %2861 = vmatmul.mubr.bf16.gmra.mrb[0].mxu0 %v2826
    %v2862 = vpop.f32.mrb[0].mxu0
    %v2863 = vadd.f32 %v2812, %v2862
    %v2864 = vpop.f32.mrb[0].mxu0
    %v2865 = vpop.f32.mrb[0].mxu0
    %v2866 = vadd.f32 %v2812, %v2865
    %v2867 = vpop.f32.mrb[0].mxu0
    %2868 = vdwg.mxu0
    %2869 = vst [vmem:[#allocation7] sm:$0xff] %v2863
    %2870 = vst [vmem:[#allocation7 + $0x8] sm:$0xff] %v2866
    // Predicated region
    $region34: #{masked_lm_forward.1} parent=1 // pred_check
      _
    $region35: #{masked_lm_forward.1} parent=1 // pred_check_branch
      %2872 = sbr.rel (0) target = $region37
    $region36: #{masked_lm_forward.1} parent=1 // pred_region
      %s2874 = ssub.s32 256, 256
      %2875 = vsyncadd [#allocation4], %s2874
      %s2876 = sshll.u32 [#allocation7], 4
      %s2877 = int_to_ptr.vmem [resolvable:$true] %s2876
      %2882 = dma.vmem_to_hbm [thread:$0]  %s2877, 256, %s6, [#allocation4], 128, 128, 8
    $region37: #{masked_lm_forward.1} parent=1 // pred_fallthru
      _
    // Predicated region
    $region38: #{masked_lm_forward.1} parent=1 // pred_check
      _
    $region39: #{masked_lm_forward.1} parent=1 // pred_check_branch
      %2884 = sbr.rel (0) target = $region41
    $region40: #{masked_lm_forward.1} parent=1 // pred_region
      %2885 = dma.done [#allocation4], 256
    $region41: #{masked_lm_forward.1} parent=1 // pred_fallthru
      _
    %2886 = vsyncpa [#allocation3], 1
    %2887 = vsyncpa [#allocation6], 1
    %2888 = vsyncpa [#allocation4], 1

</llo_original>
